<compile_context>
chip_gen: v7x
topology: tpu7x:2x2x1
jax: 0.10.0
libtpu: 0.0.40
codegen_flags: <defaults>
</compile_context>

<pallas_src>
import functools

import jax
import jax.numpy as jnp
from jax.experimental import pallas as pl
from jax.experimental.pallas import tpu as pltpu

LATENT_DIM = 100
NEG_SLOPE = 0.01          # F.leaky_relu default negative_slope

L1_N = 7 * 7 * 64         # fused layer-1 output: NHWC (7,7,64) flattened
L1_N_PAD = 3200           # padded up to a multiple of 128


def _round_up(x, m):
    return (x + m - 1) // m * m


# ----------------------------------------------------------------------------
# Pallas kernel:  out = [tanh]( leakyrelu_per_column(x @ w + b) )
# ----------------------------------------------------------------------------
def _mm_bias_act_kernel(x_ref, w_ref, b_ref, s_ref, o_ref, *, apply_tanh):
    acc = jnp.dot(x_ref[...], w_ref[...], preferred_element_type=jnp.float32)
    acc = acc + b_ref[...]                       # (1, N) broadcast over rows
    # per-column negative slope: 1.0 => identity, NEG_SLOPE => leaky_relu
    acc = jnp.where(acc >= 0, acc, s_ref[...] * acc)
    if apply_tanh:
        acc = jnp.tanh(acc)
    o_ref[...] = acc.astype(o_ref.dtype)


def _choose_m_tile(m, max_tm=512, min_tm=256):
    """Largest tile <= max_tm (multiple of 8) minimizing row padding."""
    mp8 = _round_up(m, 8)
    if mp8 <= max_tm:
        return mp8, mp8
    best_tm, best_mp = max_tm, _round_up(m, max_tm)
    for tm in range(max_tm, min_tm - 1, -8):
        mp = _round_up(m, tm)
        if mp < best_mp:
            best_tm, best_mp = tm, mp
        if mp == mp8:
            break
    return best_tm, best_mp


def matmul_bias_act(x, w, b, s, apply_tanh=False, max_tm=512):
    """x: (M, K), w: (K, N) [N % 128 == 0], b/s: (N,) -> (M, N) f32.

    Matmul operands are cast to bf16 (f32 accumulate); M is tiled with a
    parallel grid for pipelining / megacore; K and N are whole blocks.
    """
    M, K = x.shape
    K2, N = w.shape
    assert K == K2 and N % 128 == 0
    x = x.astype(jnp.bfloat16)
    w = w.astype(jnp.bfloat16)
    b2 = b.reshape(1, N).astype(jnp.float32)
    s2 = s.reshape(1, N).astype(jnp.float32)

    tm, mp = _choose_m_tile(M, max_tm=max_tm)
    if mp != M:
        x = jnp.pad(x, ((0, mp - M), (0, 0)))

    out = pl.pallas_call(
        functools.partial(_mm_bias_act_kernel, apply_tanh=apply_tanh),
        out_shape=jax.ShapeDtypeStruct((mp, N), jnp.float32),
        grid=(mp // tm,),
        in_specs=[
            pl.BlockSpec((tm, K), lambda i: (i, 0)),
            pl.BlockSpec((K, N), lambda i: (0, 0)),   # weight stays resident
            pl.BlockSpec((1, N), lambda i: (0, 0)),
            pl.BlockSpec((1, N), lambda i: (0, 0)),
        ],
        out_specs=pl.BlockSpec((tm, N), lambda i: (i, 0)),
        compiler_params=pltpu.CompilerParams(
            dimension_semantics=("parallel",)),
    )(x, w, b2, s2)
    return out[:M] if mp != M else out


# ----------------------------------------------------------------------------
# Conv helpers (glue: slicing / reshapes only; all matmuls run in the kernel)
# ----------------------------------------------------------------------------
def _im2col(x, k):
    """x: (B, H, W, C), stride-1 valid patches -> (B*Ho*Wo, k*k*C).

    Feature layout: (kh*k + kw)*C + ci  (matches the repacked weights)."""
    B, H, W, C = x.shape
    Ho, Wo = H - k + 1, W - k + 1
    cols = []
    for kh in range(k):
        for kw in range(k):
            cols.append(x[:, kh:kh + Ho, kw:kw + Wo, :])
    patches = jnp.stack(cols, axis=3)                # (B, Ho, Wo, k*k, C)
    return patches.reshape(B * Ho * Wo, k * k * C), (B, Ho, Wo)


def conv_transpose2d_subpixel(x_nhwc, w_mat, b_vec, s_vec, cout):
    """PyTorch ConvTranspose2d(k=4, stride=2, pad=0) via sub-pixel phases.

    Pad input by 1, take 2x2 stride-1 patches; the matmul produces the 4
    output parity phases side by side (N = 4*cout, zero-padded to 128)."""
    B, H, W, _ = x_nhwc.shape
    xp = jnp.pad(x_nhwc, ((0, 0), (1, 1), (1, 1), (0, 0)))
    patches, (_, Ho, Wo) = _im2col(xp, 2)            # Ho = H+1, Wo = W+1
    out = matmul_bias_act(patches, w_mat, b_vec, s_vec)
    out = out[:, :4 * cout].reshape(B, Ho, Wo, 2, 2, cout)
    # interleave phases: out[b, 2q+rh, 2p+rw, :] = phase(rh,rw)[b, q, p, :]
    out = out.transpose(0, 1, 3, 2, 4, 5).reshape(B, 2 * Ho, 2 * Wo, cout)
    return out


def conv2d(x_nhwc, w_mat, b_vec, s_vec, cout, k, apply_tanh=False):
    """PyTorch Conv2d, stride 1, no padding (Cout pre-padded to 128)."""
    patches, (B, Ho, Wo) = _im2col(x_nhwc, k)
    out = matmul_bias_act(patches, w_mat, b_vec, s_vec, apply_tanh=apply_tanh)
    return out[:, :cout].reshape(B, Ho, Wo, cout)


# ----------------------------------------------------------------------------
# One-time weight repacking (PyTorch layout -> kernel-ready matmul operands)
# ----------------------------------------------------------------------------
def _subpixel_ct_matmul_params(w_t, b, n_pad):
    """ConvTranspose2d(k=4, s=2) -> (4*Cin, 4*Cout) phase-concatenated matmul.

    Rows: (dh*2+dw)*Cin + ci  (matches _im2col(k=2) on the 1-padded input).
    Cols: (rh*2+rw)*Cout + co (output parity phase), zero-padded to n_pad.
    W[row, col] = w_t[ci, co, rh + 2 - 2*dh, rw + 2 - 2*dw]."""
    cin, cout = int(w_t.shape[0]), int(w_t.shape[1])
    w_t = w_t.astype(jnp.float32)
    wm = jnp.zeros((2, 2, cin, 2, 2, cout), jnp.float32)
    for dh in range(2):
        for dw in range(2):
            for rh in range(2):
                for rw in range(2):
                    wm = wm.at[dh, dw, :, rh, rw, :].set(
                        w_t[:, :, rh + 2 - 2 * dh, rw + 2 - 2 * dw])
    wm = wm.reshape(4 * cin, 4 * cout)
    bv = jnp.tile(b.astype(jnp.float32), 4)
    n = 4 * cout
    if n_pad > n:
        wm = jnp.pad(wm, ((0, 0), (0, n_pad - n)))
        bv = jnp.pad(bv, (0, n_pad - n))
    sv = jnp.full((n_pad,), NEG_SLOPE, jnp.float32)
    return wm, bv, sv


def prepare_params(p):
    f32 = jnp.float32

    # --- fused layer 1: [lin1 | label_lin] block-diagonal matmul -------------
    # input  = concat([x (100), emb(c) (50)])  -> K = 150
    # output columns laid out as NHWC (7,7,64); channel 0 = label channel
    # (matches torch.cat((c, x), dim=1)), channels 1..63 = lin1's channels.
    lin1_wT = p["lin1_w"].astype(f32).T.reshape(LATENT_DIM, 63, 7, 7)
    lin1_wT = lin1_wT.transpose(0, 2, 3, 1)                      # (100,7,7,63)
    lbl_wT = p["lbl_w"].astype(f32).T.reshape(50, 7, 7, 1)       # (50,7,7,1)
    w1 = jnp.zeros((150, 7, 7, 64), f32)
    w1 = w1.at[:LATENT_DIM, :, :, 1:].set(lin1_wT)
    w1 = w1.at[LATENT_DIM:, :, :, :1].set(lbl_wT)
    b1 = jnp.zeros((7, 7, 64), f32)
    b1 = b1.at[:, :, 1:].set(p["lin1_b"].astype(f32).reshape(63, 7, 7)
                             .transpose(1, 2, 0))
    b1 = b1.at[:, :, 0].set(p["lbl_b"].astype(f32).reshape(7, 7))
    # per-column slope: leaky_relu on lin1 channels only, identity on label
    s1 = jnp.full((7, 7, 64), NEG_SLOPE, f32).at[:, :, 0].set(1.0)
    pad = L1_N_PAD - L1_N
    w1 = jnp.pad(w1.reshape(150, L1_N), ((0, 0), (0, pad)))
    b1 = jnp.pad(b1.reshape(L1_N), (0, pad))
    s1 = jnp.pad(s1.reshape(L1_N), (0, pad), constant_values=1.0)

    # --- transposed convs: sub-pixel phase decomposition, N padded to 128 ----
    ct1_w, ct1_b, ct1_s = _subpixel_ct_matmul_params(p["ct1_w"], p["ct1_b"], 128)
    ct2_w, ct2_b, ct2_s = _subpixel_ct_matmul_params(p["ct2_w"], p["ct2_b"], 128)

    # --- final 7x7 conv, Cout padded 1 -> 128 for lane-dense stores ----------
    wc = jnp.transpose(p["conv_w"].astype(f32), (2, 3, 1, 0)).reshape(49 * 16, 1)
    conv_w = jnp.pad(wc, ((0, 0), (0, 127)))
    conv_b = jnp.pad(p["conv_b"].astype(f32), (0, 127))
    conv_s = jnp.ones((128,), f32)          # tanh layer: no leaky_relu

    return {
        "emb_w": p["emb_w"].astype(f32),
        "w1": w1.astype(jnp.bfloat16), "b1": b1, "s1": s1,
        "ct1_w": ct1_w.astype(jnp.bfloat16), "ct1_b": ct1_b, "ct1_s": ct1_s,
        "ct2_w": ct2_w.astype(jnp.bfloat16), "ct2_b": ct2_b, "ct2_s": ct2_s,
        "conv_w": conv_w.astype(jnp.bfloat16), "conv_b": conv_b, "conv_s": conv_s,
    }


# ----------------------------------------------------------------------------
# Generator parameters (deterministic synthetic init) and forward pass
# ----------------------------------------------------------------------------
def init_params(key):
    ks = jax.random.split(key, 11)

    def w_init(k, shape, fan_in):
        return jax.random.normal(k, shape, jnp.float32) * jnp.sqrt(2.0 / fan_in)

    def b_init(k, shape, fan_in):
        s = 1.0 / jnp.sqrt(jnp.float32(fan_in))
        return jax.random.uniform(k, shape, jnp.float32, -s, s)

    return {
        # nn.Linear(100, 7*7*63)
        "lin1_w": w_init(ks[0], (3087, LATENT_DIM), LATENT_DIM),
        "lin1_b": b_init(ks[1], (3087,), LATENT_DIM),
        # nn.Embedding(10, 50)
        "emb_w": jax.random.normal(ks[2], (10, 50), jnp.float32),
        # nn.Linear(50, 49)
        "lbl_w": w_init(ks[3], (49, 50), 50),
        "lbl_b": b_init(ks[4], (49,), 50),
        # nn.ConvTranspose2d(64, 32, 4, stride=2): weight (64, 32, 4, 4)
        "ct1_w": w_init(ks[5], (64, 32, 4, 4), 64 * 4),
        "ct1_b": b_init(ks[6], (32,), 64 * 4),
        # nn.ConvTranspose2d(32, 16, 4, stride=2): weight (32, 16, 4, 4)
        "ct2_w": w_init(ks[7], (32, 16, 4, 4), 32 * 4),
        "ct2_b": b_init(ks[8], (16,), 32 * 4),
        # nn.Conv2d(16, 1, kernel_size=7): weight (1, 16, 7, 7)
        "conv_w": w_init(ks[9], (1, 16, 7, 7), 16 * 49),
        "conv_b": b_init(ks[10], (1,), 16 * 49),
        # NOTE: self.conv_x_c (ConvTranspose2d(65, 64, 4, 2)) is unused in forward.
    }


@jax.jit
def generator_forward(prep, x, c):
    """x: (B, 100) f32 latent, c: (B,) int32 labels in [0,10) -> (B, 1, 28, 28)."""
    B = x.shape[0]
    emb_c = jnp.take(prep["emb_w"], c, axis=0)                    # (B, 50)
    h0 = jnp.concatenate([x.astype(jnp.float32), emb_c], axis=1)  # (B, 150)

    # fused lin1 + label_lin; output is already NHWC (B, 7, 7, 64)
    h1 = matmul_bias_act(h0, prep["w1"], prep["b1"], prep["s1"], max_tm=256)
    x_nhwc = h1[:, :L1_N].reshape(B, 7, 7, 64)

    x_nhwc = conv_transpose2d_subpixel(x_nhwc, prep["ct1_w"], prep["ct1_b"],
                                       prep["ct1_s"], 32)         # (B,16,16,32)
    x_nhwc = conv_transpose2d_subpixel(x_nhwc, prep["ct2_w"], prep["ct2_b"],
                                       prep["ct2_s"], 16)         # (B,34,34,16)
    x_nhwc = conv2d(x_nhwc, prep["conv_w"], prep["conv_b"], prep["conv_s"],
                    1, 7, apply_tanh=True)                        # (B,28,28,1)
    return jnp.transpose(x_nhwc, (0, 3, 1, 2))                    # (B,1,28,28)


# ----------------------------------------------------------------------------
# Pure-JAX f32 reference (dilate+pad lowering of ConvTranspose2d) for checking
# ----------------------------------------------------------------------------
@jax.jit
def reference_forward(params, x, c):
    B = x.shape[0]
    h = x @ params["lin1_w"].T + params["lin1_b"]
    h = jnp.where(h >= 0, h, NEG_SLOPE * h)
    xh = jnp.transpose(h.reshape(B, 63, 7, 7), (0, 2, 3, 1))
    ce = jnp.take(params["emb_w"], c, axis=0)
    cl = ce @ params["lbl_w"].T + params["lbl_b"]
    ch = jnp.transpose(cl.reshape(B, 1, 7, 7), (0, 2, 3, 1))
    xh = jnp.concatenate([ch, xh], axis=-1)

    def conv_t(xin, w_t, b):
        cin, cout, k, _ = w_t.shape
        w_flip = w_t[:, :, ::-1, ::-1]
        w_mat = jnp.transpose(w_flip, (2, 3, 0, 1)).reshape(k * k * cin, cout)
        Bc, H, W, C = xin.shape
        up = jnp.zeros((Bc, 2 * H - 1, 2 * W - 1, C), xin.dtype)
        up = up.at[:, ::2, ::2, :].set(xin)
        up = jnp.pad(up, ((0, 0), (k - 1, k - 1), (k - 1, k - 1), (0, 0)))
        pt, (Bc, Ho, Wo) = _im2col(up, k)
        return (pt @ w_mat + b).reshape(Bc, Ho, Wo, cout)

    xh = conv_t(xh, params["ct1_w"], params["ct1_b"])
    xh = jnp.where(xh >= 0, xh, NEG_SLOPE * xh)
    xh = conv_t(xh, params["ct2_w"], params["ct2_b"])
    xh = jnp.where(xh >= 0, xh, NEG_SLOPE * xh)
    w_mat = jnp.transpose(params["conv_w"], (2, 3, 1, 0)).reshape(49 * 16, 1)
    pt, (Bc, Ho, Wo) = _im2col(xh, 7)
    xh = jnp.tanh((pt @ w_mat + params["conv_b"]).reshape(Bc, Ho, Wo, 1))
    return jnp.transpose(xh, (0, 3, 1, 2))


if __name__ == "__main__":
    key = jax.random.PRNGKey(0)
    k_param, k_x, k_c = jax.random.split(key, 3)

    B = 2
    params = init_params(k_param)
    prep = prepare_params(params)       # one-time weight repacking / bf16 cast
    x = jax.random.normal(k_x, (B, LATENT_DIM), jnp.float32)
    c = jax.random.randint(k_c, (B,), 0, 10, jnp.int32)

    out = generator_forward(prep, x, c)
    out = jax.block_until_ready(out)

    assert out.shape == (B, 1, 28, 28), out.shape
    assert out.dtype == jnp.float32
    assert bool(jnp.all(jnp.isfinite(out)))
    assert bool(jnp.all(jnp.abs(out) <= 1.0))      # tanh range

    # numerical sanity check vs. pure-JAX f32 reference of the PyTorch forward
    ref = jax.block_until_ready(reference_forward(params, x, c))
    max_err = float(jnp.max(jnp.abs(out - ref)))
    assert max_err < 5e-2, f"max abs err vs reference: {max_err}"

    print("KERNEL_OK")
</pallas_src>

<mosaic_0001>
module attributes {stable_mosaic.version = 11 : i64} {
  func.func @_mm_bias_act_kernel(%arg0: i32, %arg1: memref<8x150xbf16, #tpu.memory_space<vmem>>, %arg2: memref<150x3200xbf16, #tpu.memory_space<vmem>>, %arg3: memref<1x3200xf32, #tpu.memory_space<vmem>>, %arg4: memref<1x3200xf32, #tpu.memory_space<vmem>>, %arg5: memref<8x3200xf32, #tpu.memory_space<vmem>>) attributes {dimension_semantics = [#tpu.dimension_semantics<parallel>], iteration_bounds = array<i64: 1>, scalar_prefetch = 0 : i64, scratch_operands = 0 : i64, tpu.core_type = #tpu.core_type<tc>, window_params = [{transform_indices = @transform_0, window_bounds = array<i64: 8, 150>}, {pipeline_mode = #tpu.pipeline_mode<synchronous>, transform_indices = @transform_1, window_bounds = array<i64: 150, 3200>}, {pipeline_mode = #tpu.pipeline_mode<synchronous>, transform_indices = @transform_2, window_bounds = array<i64: 1, 3200>}, {pipeline_mode = #tpu.pipeline_mode<synchronous>, transform_indices = @transform_3, window_bounds = array<i64: 1, 3200>}, {transform_indices = @transform_4, window_bounds = array<i64: 8, 3200>}]} {
    %c0 = arith.constant 0 : index
    %c0_0 = arith.constant 0 : index
    %0 = vector.load %arg1[%c0, %c0_0] : memref<8x150xbf16, #tpu.memory_space<vmem>>, vector<8x150xbf16>
    %c0_1 = arith.constant 0 : index
    %c0_2 = arith.constant 0 : index
    %1 = vector.load %arg2[%c0_1, %c0_2] : memref<150x3200xbf16, #tpu.memory_space<vmem>>, vector<150x3200xbf16>
    %cst = arith.constant dense<0.000000e+00> : vector<8x3200xf32>
    %2 = tpu.matmul %0, %1, %cst {dimension_numbers = #tpu.dot_dimension_numbers<[1], [0], [0], [1], [0, 0, 1, 1], [], []>} : vector<8x150xbf16>, vector<150x3200xbf16>, vector<8x3200xf32> -> vector<8x3200xf32>
    %c0_3 = arith.constant 0 : index
    %c0_4 = arith.constant 0 : index
    %3 = vector.load %arg3[%c0_3, %c0_4] : memref<1x3200xf32, #tpu.memory_space<vmem>>, vector<1x3200xf32>
    %4 = vector.broadcast %3 : vector<1x3200xf32> to vector<8x3200xf32>
    %5 = arith.addf %2, %4 : vector<8x3200xf32>
    %cst_5 = arith.constant 0.000000e+00 : f32
    %6 = vector.broadcast %cst_5 : f32 to vector<8x3200xf32>
    %7 = arith.cmpf oge, %5, %6 : vector<8x3200xf32>
    %c0_6 = arith.constant 0 : index
    %c0_7 = arith.constant 0 : index
    %8 = vector.load %arg4[%c0_6, %c0_7] : memref<1x3200xf32, #tpu.memory_space<vmem>>, vector<1x3200xf32>
    %9 = vector.broadcast %8 : vector<1x3200xf32> to vector<8x3200xf32>
    %10 = arith.mulf %9, %5 : vector<8x3200xf32>
    %11 = arith.select %7, %5, %10 : vector<8x3200xi1>, vector<8x3200xf32>
    %c0_8 = arith.constant 0 : index
    %c0_9 = arith.constant 0 : index
    %12 = vector.load %arg5[%c0_8, %c0_9] : memref<8x3200xf32, #tpu.memory_space<vmem>>, vector<8x3200xf32>
    tpu.vector_store %arg5[%c0_8, %c0_9], %11 {strides = array<i32>} : memref<8x3200xf32, #tpu.memory_space<vmem>>, vector<8x3200xf32>,
    return
  }
  func.func @transform_0(%arg0: i32) -> (i32, i32) {
    %c0_i32 = arith.constant 0 : i32
    %c0_i32_0 = arith.constant 0 : i32
    return %arg0, %c0_i32 : i32, i32
  }
  func.func @transform_1(%arg0: i32) -> (i32, i32) {
    %c0_i32 = arith.constant 0 : i32
    %c0_i32_0 = arith.constant 0 : i32
    %c0_i32_1 = arith.constant 0 : i32
    return %c0_i32, %c0_i32_0 : i32, i32
  }
  func.func @transform_2(%arg0: i32) -> (i32, i32) {
    %c0_i32 = arith.constant 0 : i32
    %c0_i32_0 = arith.constant 0 : i32
    %c0_i32_1 = arith.constant 0 : i32
    return %c0_i32, %c0_i32_0 : i32, i32
  }
  func.func @transform_3(%arg0: i32) -> (i32, i32) {
    %c0_i32 = arith.constant 0 : i32
    %c0_i32_0 = arith.constant 0 : i32
    %c0_i32_1 = arith.constant 0 : i32
    return %c0_i32, %c0_i32_0 : i32, i32
  }
  func.func @transform_4(%arg0: i32) -> (i32, i32) {
    %c0_i32 = arith.constant 0 : i32
    %c0_i32_0 = arith.constant 0 : i32
    return %arg0, %c0_i32 : i32, i32
  }
}

module attributes {stable_mosaic.version = 11 : i64} {
  func.func @_mm_bias_act_kernel(%arg0: i32, %arg1: memref<128x256xbf16, #tpu.memory_space<vmem>>, %arg2: memref<256x128xbf16, #tpu.memory_space<vmem>>, %arg3: memref<1x128xf32, #tpu.memory_space<vmem>>, %arg4: memref<1x128xf32, #tpu.memory_space<vmem>>, %arg5: memref<128x128xf32, #tpu.memory_space<vmem>>) attributes {dimension_semantics = [#tpu.dimension_semantics<parallel>], iteration_bounds = array<i64: 1>, scalar_prefetch = 0 : i64, scratch_operands = 0 : i64, tpu.core_type = #tpu.core_type<tc>, window_params = [{transform_indices = @transform_0, window_bounds = array<i64: 128, 256>}, {pipeline_mode = #tpu.pipeline_mode<synchronous>, transform_indices = @transform_1, window_bounds = array<i64: 256, 128>}, {pipeline_mode = #tpu.pipeline_mode<synchronous>, transform_indices = @transform_2, window_bounds = array<i64: 1, 128>}, {pipeline_mode = #tpu.pipeline_mode<synchronous>, transform_indices = @transform_3, window_bounds = array<i64: 1, 128>}, {transform_indices = @transform_4, window_bounds = array<i64: 128, 128>}]} {
    %c0 = arith.constant 0 : index
    %c0_0 = arith.constant 0 : index
    %0 = vector.load %arg1[%c0, %c0_0] : memref<128x256xbf16, #tpu.memory_space<vmem>>, vector<128x256xbf16>
    %c0_1 = arith.constant 0 : index
    %c0_2 = arith.constant 0 : index
    %1 = vector.load %arg2[%c0_1, %c0_2] : memref<256x128xbf16, #tpu.memory_space<vmem>>, vector<256x128xbf16>
    %cst = arith.constant dense<0.000000e+00> : vector<128x128xf32>
    %2 = tpu.matmul %0, %1, %cst {dimension_numbers = #tpu.dot_dimension_numbers<[1], [0], [0], [1], [0, 0, 1, 1], [], []>} : vector<128x256xbf16>, vector<256x128xbf16>, vector<128x128xf32> -> vector<128x128xf32>
    %c0_3 = arith.constant 0 : index
    %c0_4 = arith.constant 0 : index
    %3 = vector.load %arg3[%c0_3, %c0_4] : memref<1x128xf32, #tpu.memory_space<vmem>>, vector<1x128xf32>
    %4 = vector.broadcast %3 : vector<1x128xf32> to vector<128x128xf32>
    %5 = arith.addf %2, %4 : vector<128x128xf32>
    %cst_5 = arith.constant 0.000000e+00 : f32
    %6 = vector.broadcast %cst_5 : f32 to vector<128x128xf32>
    %7 = arith.cmpf oge, %5, %6 : vector<128x128xf32>
    %c0_6 = arith.constant 0 : index
    %c0_7 = arith.constant 0 : index
    %8 = vector.load %arg4[%c0_6, %c0_7] : memref<1x128xf32, #tpu.memory_space<vmem>>, vector<1x128xf32>
    %9 = vector.broadcast %8 : vector<1x128xf32> to vector<128x128xf32>
    %10 = arith.mulf %9, %5 : vector<128x128xf32>
    %11 = arith.select %7, %5, %10 : vector<128x128xi1>, vector<128x128xf32>
    %c0_8 = arith.constant 0 : index
    %c0_9 = arith.constant 0 : index
    %12 = vector.load %arg5[%c0_8, %c0_9] : memref<128x128xf32, #tpu.memory_space<vmem>>, vector<128x128xf32>
    tpu.vector_store %arg5[%c0_8, %c0_9], %11 {strides = array<i32>} : memref<128x128xf32, #tpu.memory_space<vmem>>, vector<128x128xf32>,
    return
  }
  func.func @transform_0(%arg0: i32) -> (i32, i32) {
    %c0_i32 = arith.constant 0 : i32
    %c0_i32_0 = arith.constant 0 : i32
    return %arg0, %c0_i32 : i32, i32
  }
  func.func @transform_1(%arg0: i32) -> (i32, i32) {
    %c0_i32 = arith.constant 0 : i32
    %c0_i32_0 = arith.constant 0 : i32
    %c0_i32_1 = arith.constant 0 : i32
    return %c0_i32, %c0_i32_0 : i32, i32
  }
  func.func @transform_2(%arg0: i32) -> (i32, i32) {
    %c0_i32 = arith.constant 0 : i32
    %c0_i32_0 = arith.constant 0 : i32
    %c0_i32_1 = arith.constant 0 : i32
    return %c0_i32, %c0_i32_0 : i32, i32
  }
  func.func @transform_3(%arg0: i32) -> (i32, i32) {
    %c0_i32 = arith.constant 0 : i32
    %c0_i32_0 = arith.constant 0 : i32
    %c0_i32_1 = arith.constant 0 : i32
    return %c0_i32, %c0_i32_0 : i32, i32
  }
  func.func @transform_4(%arg0: i32) -> (i32, i32) {
    %c0_i32 = arith.constant 0 : i32
    %c0_i32_0 = arith.constant 0 : i32
    return %arg0, %c0_i32 : i32, i32
  }
}

module attributes {stable_mosaic.version = 11 : i64} {
  func.func @_mm_bias_act_kernel(%arg0: i32, %arg1: memref<296x128xbf16, #tpu.memory_space<vmem>>, %arg2: memref<128x128xbf16, #tpu.memory_space<vmem>>, %arg3: memref<1x128xf32, #tpu.memory_space<vmem>>, %arg4: memref<1x128xf32, #tpu.memory_space<vmem>>, %arg5: memref<296x128xf32, #tpu.memory_space<vmem>>) attributes {dimension_semantics = [#tpu.dimension_semantics<parallel>], iteration_bounds = array<i64: 2>, scalar_prefetch = 0 : i64, scratch_operands = 0 : i64, tpu.core_type = #tpu.core_type<tc>, window_params = [{transform_indices = @transform_0, window_bounds = array<i64: 296, 128>}, {pipeline_mode = #tpu.pipeline_mode<synchronous>, transform_indices = @transform_1, window_bounds = array<i64: 128, 128>}, {pipeline_mode = #tpu.pipeline_mode<synchronous>, transform_indices = @transform_2, window_bounds = array<i64: 1, 128>}, {pipeline_mode = #tpu.pipeline_mode<synchronous>, transform_indices = @transform_3, window_bounds = array<i64: 1, 128>}, {transform_indices = @transform_4, window_bounds = array<i64: 296, 128>}]} {
    %c0 = arith.constant 0 : index
    %c0_0 = arith.constant 0 : index
    %0 = vector.load %arg1[%c0, %c0_0] : memref<296x128xbf16, #tpu.memory_space<vmem>>, vector<296x128xbf16>
    %c0_1 = arith.constant 0 : index
    %c0_2 = arith.constant 0 : index
    %1 = vector.load %arg2[%c0_1, %c0_2] : memref<128x128xbf16, #tpu.memory_space<vmem>>, vector<128x128xbf16>
    %cst = arith.constant dense<0.000000e+00> : vector<296x128xf32>
    %2 = tpu.matmul %0, %1, %cst {dimension_numbers = #tpu.dot_dimension_numbers<[1], [0], [0], [1], [0, 0, 1, 1], [], []>} : vector<296x128xbf16>, vector<128x128xbf16>, vector<296x128xf32> -> vector<296x128xf32>
    %c0_3 = arith.constant 0 : index
    %c0_4 = arith.constant 0 : index
    %3 = vector.load %arg3[%c0_3, %c0_4] : memref<1x128xf32, #tpu.memory_space<vmem>>, vector<1x128xf32>
    %4 = vector.broadcast %3 : vector<1x128xf32> to vector<296x128xf32>
    %5 = arith.addf %2, %4 : vector<296x128xf32>
    %cst_5 = arith.constant 0.000000e+00 : f32
    %6 = vector.broadcast %cst_5 : f32 to vector<296x128xf32>
    %7 = arith.cmpf oge, %5, %6 : vector<296x128xf32>
    %c0_6 = arith.constant 0 : index
    %c0_7 = arith.constant 0 : index
    %8 = vector.load %arg4[%c0_6, %c0_7] : memref<1x128xf32, #tpu.memory_space<vmem>>, vector<1x128xf32>
    %9 = vector.broadcast %8 : vector<1x128xf32> to vector<296x128xf32>
    %10 = arith.mulf %9, %5 : vector<296x128xf32>
    %11 = arith.select %7, %5, %10 : vector<296x128xi1>, vector<296x128xf32>
    %c0_8 = arith.constant 0 : index
    %c0_9 = arith.constant 0 : index
    %12 = vector.load %arg5[%c0_8, %c0_9] : memref<296x128xf32, #tpu.memory_space<vmem>>, vector<296x128xf32>
    tpu.vector_store %arg5[%c0_8, %c0_9], %11 {strides = array<i32>} : memref<296x128xf32, #tpu.memory_space<vmem>>, vector<296x128xf32>,
    return
  }
  func.func @transform_0(%arg0: i32) -> (i32, i32) {
    %c0_i32 = arith.constant 0 : i32
    %c0_i32_0 = arith.constant 0 : i32
    return %arg0, %c0_i32 : i32, i32
  }
  func.func @transform_1(%arg0: i32) -> (i32, i32) {
    %c0_i32 = arith.constant 0 : i32
    %c0_i32_0 = arith.constant 0 : i32
    %c0_i32_1 = arith.constant 0 : i32
    return %c0_i32, %c0_i32_0 : i32, i32
  }
  func.func @transform_2(%arg0: i32) -> (i32, i32) {
    %c0_i32 = arith.constant 0 : i32
    %c0_i32_0 = arith.constant 0 : i32
    %c0_i32_1 = arith.constant 0 : i32
    return %c0_i32, %c0_i32_0 : i32, i32
  }
  func.func @transform_3(%arg0: i32) -> (i32, i32) {
    %c0_i32 = arith.constant 0 : i32
    %c0_i32_0 = arith.constant 0 : i32
    %c0_i32_1 = arith.constant 0 : i32
    return %c0_i32, %c0_i32_0 : i32, i32
  }
  func.func @transform_4(%arg0: i32) -> (i32, i32) {
    %c0_i32 = arith.constant 0 : i32
    %c0_i32_0 = arith.constant 0 : i32
    return %arg0, %c0_i32 : i32, i32
  }
}

module attributes {stable_mosaic.version = 11 : i64} {
  func.func @_mm_bias_act_kernel(%arg0: i32, %arg1: memref<392x784xbf16, #tpu.memory_space<vmem>>, %arg2: memref<784x128xbf16, #tpu.memory_space<vmem>>, %arg3: memref<1x128xf32, #tpu.memory_space<vmem>>, %arg4: memref<1x128xf32, #tpu.memory_space<vmem>>, %arg5: memref<392x128xf32, #tpu.memory_space<vmem>>) attributes {dimension_semantics = [#tpu.dimension_semantics<parallel>], iteration_bounds = array<i64: 4>, scalar_prefetch = 0 : i64, scratch_operands = 0 : i64, tpu.core_type = #tpu.core_type<tc>, window_params = [{transform_indices = @transform_0, window_bounds = array<i64: 392, 784>}, {pipeline_mode = #tpu.pipeline_mode<synchronous>, transform_indices = @transform_1, window_bounds = array<i64: 784, 128>}, {pipeline_mode = #tpu.pipeline_mode<synchronous>, transform_indices = @transform_2, window_bounds = array<i64: 1, 128>}, {pipeline_mode = #tpu.pipeline_mode<synchronous>, transform_indices = @transform_3, window_bounds = array<i64: 1, 128>}, {transform_indices = @transform_4, window_bounds = array<i64: 392, 128>}]} {
    %c0 = arith.constant 0 : index
    %c0_0 = arith.constant 0 : index
    %0 = vector.load %arg1[%c0, %c0_0] : memref<392x784xbf16, #tpu.memory_space<vmem>>, vector<392x784xbf16>
    %c0_1 = arith.constant 0 : index
    %c0_2 = arith.constant 0 : index
    %1 = vector.load %arg2[%c0_1, %c0_2] : memref<784x128xbf16, #tpu.memory_space<vmem>>, vector<784x128xbf16>
    %cst = arith.constant dense<0.000000e+00> : vector<392x128xf32>
    %2 = tpu.matmul %0, %1, %cst {dimension_numbers = #tpu.dot_dimension_numbers<[1], [0], [0], [1], [0, 0, 1, 1], [], []>} : vector<392x784xbf16>, vector<784x128xbf16>, vector<392x128xf32> -> vector<392x128xf32>
    %c0_3 = arith.constant 0 : index
    %c0_4 = arith.constant 0 : index
    %3 = vector.load %arg3[%c0_3, %c0_4] : memref<1x128xf32, #tpu.memory_space<vmem>>, vector<1x128xf32>
    %4 = vector.broadcast %3 : vector<1x128xf32> to vector<392x128xf32>
    %5 = arith.addf %2, %4 : vector<392x128xf32>
    %cst_5 = arith.constant 0.000000e+00 : f32
    %6 = vector.broadcast %cst_5 : f32 to vector<392x128xf32>
    %7 = arith.cmpf oge, %5, %6 : vector<392x128xf32>
    %c0_6 = arith.constant 0 : index
    %c0_7 = arith.constant 0 : index
    %8 = vector.load %arg4[%c0_6, %c0_7] : memref<1x128xf32, #tpu.memory_space<vmem>>, vector<1x128xf32>
    %9 = vector.broadcast %8 : vector<1x128xf32> to vector<392x128xf32>
    %10 = arith.mulf %9, %5 : vector<392x128xf32>
    %11 = arith.select %7, %5, %10 : vector<392x128xi1>, vector<392x128xf32>
    %12 = math.tanh %11 : vector<392x128xf32>
    %c0_8 = arith.constant 0 : index
    %c0_9 = arith.constant 0 : index
    %13 = vector.load %arg5[%c0_8, %c0_9] : memref<392x128xf32, #tpu.memory_space<vmem>>, vector<392x128xf32>
    tpu.vector_store %arg5[%c0_8, %c0_9], %12 {strides = array<i32>} : memref<392x128xf32, #tpu.memory_space<vmem>>, vector<392x128xf32>,
    return
  }
  func.func @transform_0(%arg0: i32) -> (i32, i32) {
    %c0_i32 = arith.constant 0 : i32
    %c0_i32_0 = arith.constant 0 : i32
    return %arg0, %c0_i32 : i32, i32
  }
  func.func @transform_1(%arg0: i32) -> (i32, i32) {
    %c0_i32 = arith.constant 0 : i32
    %c0_i32_0 = arith.constant 0 : i32
    %c0_i32_1 = arith.constant 0 : i32
    return %c0_i32, %c0_i32_0 : i32, i32
  }
  func.func @transform_2(%arg0: i32) -> (i32, i32) {
    %c0_i32 = arith.constant 0 : i32
    %c0_i32_0 = arith.constant 0 : i32
    %c0_i32_1 = arith.constant 0 : i32
    return %c0_i32, %c0_i32_0 : i32, i32
  }
  func.func @transform_3(%arg0: i32) -> (i32, i32) {
    %c0_i32 = arith.constant 0 : i32
    %c0_i32_0 = arith.constant 0 : i32
    %c0_i32_1 = arith.constant 0 : i32
    return %c0_i32, %c0_i32_0 : i32, i32
  }
  func.func @transform_4(%arg0: i32) -> (i32, i32) {
    %c0_i32 = arith.constant 0 : i32
    %c0_i32_0 = arith.constant 0 : i32
    return %arg0, %c0_i32 : i32, i32
  }
}

</mosaic_0001>

<llo_original>
// kernel: generator_forward.5
$region0: #{generator_forward.5}
  #allocation0 [shape = 'u32[]', space=smem, size = 0x4, offset = 0x4, fixed_abs, tag = 'smem constant byte address 0x4 - core index']
  #allocation1 [shape = 'u32[144,128]{1,0:T(1,128)}', space=vmem, size = 0x12000, scoped, tag = 'internal scratch']
  %s0 = inlined_call_operand.vmem [shape: bf16[128,256], index: 0, kind: input, shape index: {}]
  %s1 = inlined_call_operand.hbm [shape: bf16[256,128], index: 1, kind: input, shape index: {}]
  %s2 = inlined_call_operand.hbm [shape: f32[1,128], index: 2, kind: input, shape index: {}]
  %s3 = inlined_call_operand.hbm [shape: f32[1,128], index: 3, kind: input, shape index: {}]
  %s4 = inlined_call_operand.vmem [shape: f32[128,128], index: 4, kind: output, shape index: {}]
  %s5 = sld [smem:[#allocation0]]
  $region38: #{generator_forward.5} parent=0
    _
  %s7 = ssub.s32 1, %s5
  %s8 = scalar_select 0, %s7, %s5
  $region1: #{generator_forward.5} parent=0
    #allocation2 [shape = 'u8[65536]{0}', space=vmem, size = 0x10000, scoped, tag = 'input window, operand 1, single buffered']
    #allocation3 [shape = 's32[1]{0}', space=sflag, size = 0x4, scoped, tag = 'scoped memory for generator_forward.5']
    #allocation4 [shape = 'u8[512]{0}', space=vmem, size = 0x400, scoped, tag = 'input window, operand 2, single buffered']
    #allocation5 [shape = 's32[1]{0}', space=sflag, size = 0x4, scoped, tag = 'scoped memory for generator_forward.5']
    #allocation6 [shape = 'u8[512]{0}', space=vmem, size = 0x400, scoped, tag = 'input window, operand 3, single buffered']
    %9 = vsyncpa [#allocation3], 0
    %10 = vsyncpa [#allocation5], 0
    // Predicated region
    $region2: #{generator_forward.5} parent=1 // pred_check
      _
    $region3: #{generator_forward.5} parent=1 // pred_check_branch
      %12 = sbr.rel (0) target = $region5
    $region4: #{generator_forward.5} parent=1 // pred_region
      _
    $region5: #{generator_forward.5} parent=1 // pred_fallthru
      _
    // Predicated region
    $region6: #{generator_forward.5} parent=1 // pred_check
      _
    $region7: #{generator_forward.5} parent=1 // pred_check_branch
      %14 = sbr.rel (0) target = $region9
    $region8: #{generator_forward.5} parent=1 // pred_region
      %s16 = ssub.s32 2048, 2048
      %17 = vsyncadd [#allocation3], %s16
      %s18 = sshll.u32 [#allocation2], 4
      %s19 = int_to_ptr.vmem [resolvable:$true] %s18
      %24 = dma.hbm_to_vmem [thread:$0]  %s1, 2048, %s19, [#allocation3], 64, 64, 4
    $region9: #{generator_forward.5} parent=1 // pred_fallthru
      _
    // Predicated region
    $region10: #{generator_forward.5} parent=1 // pred_check
      _
    $region11: #{generator_forward.5} parent=1 // pred_check_branch
      %26 = sbr.rel (0) target = $region13
    $region12: #{generator_forward.5} parent=1 // pred_region
      %s28 = ssub.s32 16, 16
      %29 = vsyncadd [#allocation5], %s28
      %s31 = sshll.u32 [#allocation4], 4
      %s32 = int_to_ptr.vmem [resolvable:$true] %s31
      %34 = dma.hbm_to_vmem [thread:$0]  %s2, 16, %s32, [#allocation5]
    $region13: #{generator_forward.5} parent=1 // pred_fallthru
      _
    // Predicated region
    $region14: #{generator_forward.5} parent=1 // pred_check
      _
    $region15: #{generator_forward.5} parent=1 // pred_check_branch
      %36 = sbr.rel (0) target = $region17
    $region16: #{generator_forward.5} parent=1 // pred_region
      %s38 = ssub.s32 16, 16
      %39 = vsyncadd [#allocation5], %s38
      %s41 = sshll.u32 [#allocation6], 4
      %s42 = int_to_ptr.vmem [resolvable:$true] %s41
      %44 = dma.hbm_to_vmem [thread:$0]  %s3, 16, %s42, [#allocation5]
    $region17: #{generator_forward.5} parent=1 // pred_fallthru
      _
    // Predicated region
    $region18: #{generator_forward.5} parent=1 // pred_check
      _
    $region19: #{generator_forward.5} parent=1 // pred_check_branch
      %46 = sbr.rel (0) target = $region21
    $region20: #{generator_forward.5} parent=1 // pred_region
      %47 = dma.done [#allocation3], 2048
    $region21: #{generator_forward.5} parent=1 // pred_fallthru
      _
    // Predicated region
    $region22: #{generator_forward.5} parent=1 // pred_check
      _
    $region23: #{generator_forward.5} parent=1 // pred_check_branch
      %49 = sbr.rel (0) target = $region25
    $region24: #{generator_forward.5} parent=1 // pred_region
      %50 = dma.done [#allocation5], 16
    $region25: #{generator_forward.5} parent=1 // pred_fallthru
      _
    // Predicated region
    $region26: #{generator_forward.5} parent=1 // pred_check
      _
    $region27: #{generator_forward.5} parent=1 // pred_check_branch
      %52 = sbr.rel (0) target = $region29
    $region28: #{generator_forward.5} parent=1 // pred_region
      %53 = dma.done [#allocation5], 16
    $region29: #{generator_forward.5} parent=1 // pred_fallthru
      _
    %v55 = vld [vmem:[%s0] sm:$0xff]
    %v56 = vld [vmem:[%s0 + $0x8] sm:$0xff]
    %v57 = vld [vmem:[%s0 + $0x10] sm:$0xff]
    %v58 = vld [vmem:[%s0 + $0x18] sm:$0xff]
    %v59 = vld [vmem:[%s0 + $0x20] sm:$0xff]
    %v60 = vld [vmem:[%s0 + $0x28] sm:$0xff]
    %v61 = vld [vmem:[%s0 + $0x30] sm:$0xff]
    %v62 = vld [vmem:[%s0 + $0x38] sm:$0xff]
    %v63 = vld [vmem:[%s0 + $0x40] sm:$0xff]
    %v64 = vld [vmem:[%s0 + $0x48] sm:$0xff]
    %v65 = vld [vmem:[%s0 + $0x50] sm:$0xff]
    %v66 = vld [vmem:[%s0 + $0x58] sm:$0xff]
    %v67 = vld [vmem:[%s0 + $0x60] sm:$0xff]
    %v68 = vld [vmem:[%s0 + $0x68] sm:$0xff]
    %v69 = vld [vmem:[%s0 + $0x70] sm:$0xff]
    %v70 = vld [vmem:[%s0 + $0x78] sm:$0xff]
    %v71 = vld [vmem:[#allocation2] sm:$0xf]
    %v72 = vld [vmem:[#allocation2 + $0x4] sm:$0xf]
    %v73 = vld [vmem:[#allocation2 + $0x8] sm:$0xf]
    %v74 = vld [vmem:[#allocation2 + $0xc] sm:$0xf]
    %v75 = vld [vmem:[#allocation2 + $0x10] sm:$0xf]
    %v76 = vld [vmem:[#allocation2 + $0x14] sm:$0xf]
    %v77 = vld [vmem:[#allocation2 + $0x18] sm:$0xf]
    %v78 = vld [vmem:[#allocation2 + $0x1c] sm:$0xf]
    %v79 = vld [vmem:[#allocation2 + $0x20] sm:$0xf]
    %v80 = vld [vmem:[#allocation2 + $0x24] sm:$0xf]
    %v81 = vld [vmem:[#allocation2 + $0x28] sm:$0xf]
    %v82 = vld [vmem:[#allocation2 + $0x2c] sm:$0xf]
    %v83 = vld [vmem:[#allocation2 + $0x30] sm:$0xf]
    %v84 = vld [vmem:[#allocation2 + $0x34] sm:$0xf]
    %v85 = vld [vmem:[#allocation2 + $0x38] sm:$0xf]
    %v86 = vld [vmem:[#allocation2 + $0x3c] sm:$0xf]
    %v87 = vld [vmem:[#allocation2 + $0x40] sm:$0xf]
    %v88 = vld [vmem:[#allocation2 + $0x44] sm:$0xf]
    %v89 = vld [vmem:[#allocation2 + $0x48] sm:$0xf]
    %v90 = vld [vmem:[#allocation2 + $0x4c] sm:$0xf]
    %v91 = vld [vmem:[#allocation2 + $0x50] sm:$0xf]
    %v92 = vld [vmem:[#allocation2 + $0x54] sm:$0xf]
    %v93 = vld [vmem:[#allocation2 + $0x58] sm:$0xf]
    %v94 = vld [vmem:[#allocation2 + $0x5c] sm:$0xf]
    %v95 = vld [vmem:[#allocation2 + $0x60] sm:$0xf]
    %v96 = vld [vmem:[#allocation2 + $0x64] sm:$0xf]
    %v97 = vld [vmem:[#allocation2 + $0x68] sm:$0xf]
    %v98 = vld [vmem:[#allocation2 + $0x6c] sm:$0xf]
    %v99 = vld [vmem:[#allocation2 + $0x70] sm:$0xf]
    %v100 = vld [vmem:[#allocation2 + $0x74] sm:$0xf]
    %v101 = vld [vmem:[#allocation2 + $0x78] sm:$0xf]
    %v102 = vld [vmem:[#allocation2 + $0x7c] sm:$0xf]
    %v103 = vld [vmem:[#allocation4] sm:$0x1]
    %v105 = vlaneseq
    %v106 = vshrl.u32 %v105, 7
    %v107 = vsub.s32 0, %v106
    %v108 = vrot.slane %v103, %v107
    %v126 = vunpack.c.l.b16 %v55
    %v127 = vunpack.c.h.b16 %v55
    %v128 = vunpack.c.l.b16 %v56
    %v129 = vunpack.c.h.b16 %v56
    %v130 = vunpack.c.l.b16 %v57
    %v131 = vunpack.c.h.b16 %v57
    %v132 = vunpack.c.l.b16 %v58
    %v133 = vunpack.c.h.b16 %v58
    %v134 = vunpack.c.l.b16 %v59
    %v135 = vunpack.c.h.b16 %v59
    %v136 = vunpack.c.l.b16 %v60
    %v137 = vunpack.c.h.b16 %v60
    %v138 = vunpack.c.l.b16 %v61
    %v139 = vunpack.c.h.b16 %v61
    %v140 = vunpack.c.l.b16 %v62
    %v141 = vunpack.c.h.b16 %v62
    %v142 = vunpack.c.l.b16 %v63
    %v143 = vunpack.c.h.b16 %v63
    %v144 = vunpack.c.l.b16 %v64
    %v145 = vunpack.c.h.b16 %v64
    %v146 = vunpack.c.l.b16 %v65
    %v147 = vunpack.c.h.b16 %v65
    %v148 = vunpack.c.l.b16 %v66
    %v149 = vunpack.c.h.b16 %v66
    %v150 = vunpack.c.l.b16 %v67
    %v151 = vunpack.c.h.b16 %v67
    %v152 = vunpack.c.l.b16 %v68
    %v153 = vunpack.c.h.b16 %v68
    %v154 = vunpack.c.l.b16 %v69
    %v155 = vunpack.c.h.b16 %v69
    %v156 = vunpack.c.l.b16 %v70
    %v157 = vunpack.c.h.b16 %v70
    %v158 = vpack.c.b16 %v128, %v126
    %v159 = vpack.c.b16 %v129, %v127
    %v160 = vpack.c.b16 %v132, %v130
    %v161 = vpack.c.b16 %v133, %v131
    %v162 = vpack.c.b16 %v136, %v134
    %v163 = vpack.c.b16 %v137, %v135
    %v164 = vpack.c.b16 %v140, %v138
    %v165 = vpack.c.b16 %v141, %v139
    %v166 = vpack.c.b16 %v144, %v142
    %v167 = vpack.c.b16 %v145, %v143
    %v168 = vpack.c.b16 %v148, %v146
    %v169 = vpack.c.b16 %v149, %v147
    %v170 = vpack.c.b16 %v152, %v150
    %v171 = vpack.c.b16 %v153, %v151
    %v172 = vpack.c.b16 %v156, %v154
    %v173 = vpack.c.b16 %v157, %v155
    %v222 = vunpack.c.l.b16 %v71
    %v223 = vunpack.c.l.b16 %v72
    %v224 = vunpack.c.l.b16 %v73
    %v225 = vunpack.c.l.b16 %v74
    %v226 = vunpack.c.l.b16 %v75
    %v227 = vunpack.c.l.b16 %v76
    %v228 = vunpack.c.l.b16 %v77
    %v229 = vunpack.c.l.b16 %v78
    %v230 = vunpack.c.l.b16 %v79
    %v231 = vunpack.c.l.b16 %v80
    %v232 = vunpack.c.l.b16 %v81
    %v233 = vunpack.c.l.b16 %v82
    %v234 = vunpack.c.l.b16 %v83
    %v235 = vunpack.c.l.b16 %v84
    %v236 = vunpack.c.l.b16 %v85
    %v237 = vunpack.c.l.b16 %v86
    %v238 = vunpack.c.l.b16 %v87
    %v239 = vunpack.c.l.b16 %v88
    %v240 = vunpack.c.l.b16 %v89
    %v241 = vunpack.c.l.b16 %v90
    %v242 = vunpack.c.l.b16 %v91
    %v243 = vunpack.c.l.b16 %v92
    %v244 = vunpack.c.l.b16 %v93
    %v245 = vunpack.c.l.b16 %v94
    %v246 = vunpack.c.l.b16 %v95
    %v247 = vunpack.c.l.b16 %v96
    %v248 = vunpack.c.l.b16 %v97
    %v249 = vunpack.c.l.b16 %v98
    %v250 = vunpack.c.l.b16 %v99
    %v251 = vunpack.c.l.b16 %v100
    %v252 = vunpack.c.l.b16 %v101
    %v253 = vunpack.c.l.b16 %v102
    %v254 = vpack.c.b16 %v223, %v222
    %v255 = vpack.c.b16 %v225, %v224
    %v256 = vpack.c.b16 %v227, %v226
    %v257 = vpack.c.b16 %v229, %v228
    %v258 = vpack.c.b16 %v231, %v230
    %v259 = vpack.c.b16 %v233, %v232
    %v260 = vpack.c.b16 %v235, %v234
    %v261 = vpack.c.b16 %v237, %v236
    %v262 = vpack.c.b16 %v239, %v238
    %v263 = vpack.c.b16 %v241, %v240
    %v264 = vpack.c.b16 %v243, %v242
    %v265 = vpack.c.b16 %v245, %v244
    %v266 = vpack.c.b16 %v247, %v246
    %v267 = vpack.c.b16 %v249, %v248
    %v268 = vpack.c.b16 %v251, %v250
    %v269 = vpack.c.b16 %v253, %v252
    %286 = vmatprep.subr.bf16.mxu0 0
    %287 = vmatpush1.bf16.msra.mxu0 %v254
    %288 = vmatprep.subr.bf16.mxu0 0
    %289 = vmatpush1.bf16.msra.mxu0 %v255
    %290 = vmatprep.subr.bf16.mxu0 0
    %291 = vmatpush1.bf16.msra.mxu0 %v256
    %292 = vmatprep.subr.bf16.mxu0 0
    %293 = vmatpush1.bf16.msra.mxu0 %v257
    %294 = vmatprep.subr.bf16.mxu0 0
    %295 = vmatpush1.bf16.msra.mxu0 %v258
    %296 = vmatprep.subr.bf16.mxu0 0
    %297 = vmatpush1.bf16.msra.mxu0 %v259
    %298 = vmatprep.subr.bf16.mxu0 0
    %299 = vmatpush1.bf16.msra.mxu0 %v260
    %300 = vmatprep.subr.bf16.mxu0 0
    %301 = vmatpush1.bf16.msra.mxu0 %v261
    %302 = vmatprep.subr.bf16.mxu0 0
    %303 = vmatpush1.bf16.msra.mxu0 %v262
    %304 = vmatprep.subr.bf16.mxu0 0
    %305 = vmatpush1.bf16.msra.mxu0 %v263
    %306 = vmatprep.subr.bf16.mxu0 0
    %307 = vmatpush1.bf16.msra.mxu0 %v264
    %308 = vmatprep.subr.bf16.mxu0 0
    %309 = vmatpush1.bf16.msra.mxu0 %v265
    %310 = vmatprep.subr.bf16.mxu0 0
    %311 = vmatpush1.bf16.msra.mxu0 %v266
    %312 = vmatprep.subr.bf16.mxu0 0
    %313 = vmatpush1.bf16.msra.mxu0 %v267
    %314 = vmatprep.subr.bf16.mxu0 0
    %315 = vmatpush1.bf16.msra.mxu0 %v268
    %316 = vmatprep.subr.bf16.mxu0 0
    %317 = vmatpush1.bf16.msra.mxu0 %v269
    %318 = vmatprep.mubr.bf16.mxu0 %v159
    %319 = vmatmul.mubr.bf16.gmra.mrb[0].mxu0 %v158
    %v320 = vpop.f32.mrb[0].mxu0
    %v321 = vadd.f32 %v108, %v320
    %v322 = vpop.f32.mrb[0].mxu0
    %v323 = vpop.f32.mrb[0].mxu0
    %v324 = vadd.f32 %v108, %v323
    %v325 = vpop.f32.mrb[0].mxu0
    %326 = vmatprep.mubr.bf16.mxu0 %v161
    %327 = vmatmul.mubr.bf16.gmra.mrb[0].mxu0 %v160
    %v328 = vpop.f32.mrb[0].mxu0
    %v329 = vadd.f32 %v108, %v328
    %v330 = vpop.f32.mrb[0].mxu0
    %v331 = vpop.f32.mrb[0].mxu0
    %v332 = vadd.f32 %v108, %v331
    %v333 = vpop.f32.mrb[0].mxu0
    %334 = vmatprep.mubr.bf16.mxu0 %v163
    %335 = vmatmul.mubr.bf16.gmra.mrb[0].mxu0 %v162
    %v336 = vpop.f32.mrb[0].mxu0
    %v337 = vadd.f32 %v108, %v336
    %v338 = vpop.f32.mrb[0].mxu0
    %v339 = vpop.f32.mrb[0].mxu0
    %v340 = vadd.f32 %v108, %v339
    %v341 = vpop.f32.mrb[0].mxu0
    %342 = vmatprep.mubr.bf16.mxu0 %v165
    %343 = vmatmul.mubr.bf16.gmra.mrb[0].mxu0 %v164
    %v344 = vpop.f32.mrb[0].mxu0
    %v345 = vadd.f32 %v108, %v344
    %v346 = vpop.f32.mrb[0].mxu0
    %v347 = vpop.f32.mrb[0].mxu0
    %v348 = vadd.f32 %v108, %v347
    %v349 = vpop.f32.mrb[0].mxu0
    %350 = vmatprep.mubr.bf16.mxu0 %v167
    %351 = vmatmul.mubr.bf16.gmra.mrb[0].mxu0 %v166
    %v352 = vpop.f32.mrb[0].mxu0
    %v353 = vadd.f32 %v108, %v352
    %v354 = vpop.f32.mrb[0].mxu0
    %v355 = vpop.f32.mrb[0].mxu0
    %v356 = vadd.f32 %v108, %v355
    %v357 = vpop.f32.mrb[0].mxu0
    %358 = vmatprep.mubr.bf16.mxu0 %v169
    %359 = vmatmul.mubr.bf16.gmra.mrb[0].mxu0 %v168
    %v360 = vpop.f32.mrb[0].mxu0
    %v361 = vadd.f32 %v108, %v360
    %v362 = vpop.f32.mrb[0].mxu0
    %v363 = vpop.f32.mrb[0].mxu0
    %v364 = vadd.f32 %v108, %v363
    %v365 = vpop.f32.mrb[0].mxu0
    %366 = vmatprep.mubr.bf16.mxu0 %v171
    %367 = vmatmul.mubr.bf16.gmra.mrb[0].mxu0 %v170
    %v368 = vpop.f32.mrb[0].mxu0
    %v369 = vadd.f32 %v108, %v368
    %v370 = vpop.f32.mrb[0].mxu0
    %v371 = vpop.f32.mrb[0].mxu0
    %v372 = vadd.f32 %v108, %v371
    %v373 = vpop.f32.mrb[0].mxu0
    %374 = vmatprep.mubr.bf16.mxu0 %v173
    %375 = vmatmul.mubr.bf16.gmra.mrb[0].mxu0 %v172
    %v376 = vpop.f32.mrb[0].mxu0
    %v377 = vadd.f32 %v108, %v376
    %v378 = vpop.f32.mrb[0].mxu0
    %v379 = vpop.f32.mrb[0].mxu0
    %v380 = vadd.f32 %v108, %v379
    %v381 = vpop.f32.mrb[0].mxu0
    %382 = vdwg.mxu0
    %vm383 = vcmp.ge.f32.partialorder %v321, 0.0
    %vm384 = vcmp.ge.f32.partialorder %v324, 0.0
    %vm385 = vcmp.ge.f32.partialorder %v329, 0.0
    %vm386 = vcmp.ge.f32.partialorder %v332, 0.0
    %vm387 = vcmp.ge.f32.partialorder %v337, 0.0
    %vm388 = vcmp.ge.f32.partialorder %v340, 0.0
    %vm389 = vcmp.ge.f32.partialorder %v345, 0.0
    %vm390 = vcmp.ge.f32.partialorder %v348, 0.0
    %vm391 = vcmp.ge.f32.partialorder %v353, 0.0
    %vm392 = vcmp.ge.f32.partialorder %v356, 0.0
    %vm393 = vcmp.ge.f32.partialorder %v361, 0.0
    %vm394 = vcmp.ge.f32.partialorder %v364, 0.0
    %vm395 = vcmp.ge.f32.partialorder %v369, 0.0
    %vm396 = vcmp.ge.f32.partialorder %v372, 0.0
    %vm397 = vcmp.ge.f32.partialorder %v377, 0.0
    %vm398 = vcmp.ge.f32.partialorder %v380, 0.0
    %v399 = vld [vmem:[#allocation6] sm:$0x1]
    %v401 = vlaneseq
    %v402 = vshrl.u32 %v401, 7
    %v403 = vsub.s32 0, %v402
    %v404 = vrot.slane %v399, %v403
    %v406 = vmul.f32 %v404, %v321
    %v407 = vmul.f32 %v404, %v324
    %v408 = vmul.f32 %v404, %v329
    %v409 = vmul.f32 %v404, %v332
    %v410 = vmul.f32 %v404, %v337
    %v411 = vmul.f32 %v404, %v340
    %v412 = vmul.f32 %v404, %v345
    %v413 = vmul.f32 %v404, %v348
    %v414 = vmul.f32 %v404, %v353
    %v415 = vmul.f32 %v404, %v356
    %v416 = vmul.f32 %v404, %v361
    %v417 = vmul.f32 %v404, %v364
    %v418 = vmul.f32 %v404, %v369
    %v419 = vmul.f32 %v404, %v372
    %v420 = vmul.f32 %v404, %v377
    %v421 = vmul.f32 %v404, %v380
    %v422 = vsel %vm383, %v321, %v406
    %v423 = vsel %vm384, %v324, %v407
    %v424 = vsel %vm385, %v329, %v408
    %v425 = vsel %vm386, %v332, %v409
    %v426 = vsel %vm387, %v337, %v410
    %v427 = vsel %vm388, %v340, %v411
    %v428 = vsel %vm389, %v345, %v412
    %v429 = vsel %vm390, %v348, %v413
    %v430 = vsel %vm391, %v353, %v414
    %v431 = vsel %vm392, %v356, %v415
    %v432 = vsel %vm393, %v361, %v416
    %v433 = vsel %vm394, %v364, %v417
    %v434 = vsel %vm395, %v369, %v418
    %v435 = vsel %vm396, %v372, %v419
    %v436 = vsel %vm397, %v377, %v420
    %v437 = vsel %vm398, %v380, %v421
    %438 = vst [vmem:[%s4] sm:$0xff] %v422
    %439 = vst [vmem:[%s4 + $0x8] sm:$0xff] %v423
    %440 = vst [vmem:[%s4 + $0x10] sm:$0xff] %v424
    %441 = vst [vmem:[%s4 + $0x18] sm:$0xff] %v425
    %442 = vst [vmem:[%s4 + $0x20] sm:$0xff] %v426
    %443 = vst [vmem:[%s4 + $0x28] sm:$0xff] %v427
    %444 = vst [vmem:[%s4 + $0x30] sm:$0xff] %v428
    %445 = vst [vmem:[%s4 + $0x38] sm:$0xff] %v429
    %446 = vst [vmem:[%s4 + $0x40] sm:$0xff] %v430
    %447 = vst [vmem:[%s4 + $0x48] sm:$0xff] %v431
    %448 = vst [vmem:[%s4 + $0x50] sm:$0xff] %v432
    %449 = vst [vmem:[%s4 + $0x58] sm:$0xff] %v433
    %450 = vst [vmem:[%s4 + $0x60] sm:$0xff] %v434
    %451 = vst [vmem:[%s4 + $0x68] sm:$0xff] %v435
    %452 = vst [vmem:[%s4 + $0x70] sm:$0xff] %v436
    %453 = vst [vmem:[%s4 + $0x78] sm:$0xff] %v437
    // Predicated region
    $region30: #{generator_forward.5} parent=1 // pred_check
      _
    $region31: #{generator_forward.5} parent=1 // pred_check_branch
      %455 = sbr.rel (0) target = $region33
    $region32: #{generator_forward.5} parent=1 // pred_region
      _
    $region33: #{generator_forward.5} parent=1 // pred_fallthru
      _
    // Predicated region
    $region34: #{generator_forward.5} parent=1 // pred_check
      _
    $region35: #{generator_forward.5} parent=1 // pred_check_branch
      %457 = sbr.rel (0) target = $region37
    $region36: #{generator_forward.5} parent=1 // pred_region
      _
    $region37: #{generator_forward.5} parent=1 // pred_fallthru
      _
    %458 = vsyncpa [#allocation3], 1
    %459 = vsyncpa [#allocation5], 1

// kernel: generator_forward.4
$region0: #{generator_forward.4}
  #allocation0 [shape = 'u32[]', space=smem, size = 0x4, offset = 0x4, fixed_abs, tag = 'smem constant byte address 0x4 - core index']
  #allocation1 [shape = 'u32[144,128]{1,0:T(1,128)}', space=vmem, size = 0x12000, scoped, tag = 'internal scratch']
  %s0 = inlined_call_operand.vmem [shape: bf16[8,150], index: 0, kind: input, shape index: {}]
  %s1 = inlined_call_operand.hbm [shape: bf16[150,3200], index: 1, kind: input, shape index: {}]
  %s2 = inlined_call_operand.vmem [shape: f32[1,3200], index: 2, kind: input, shape index: {}]
  %s3 = inlined_call_operand.vmem [shape: f32[1,3200], index: 3, kind: input, shape index: {}]
  %s4 = inlined_call_operand.vmem [shape: f32[8,3200], index: 4, kind: output, shape index: {}]
  %s5 = sld [smem:[#allocation0]]
  $region30: #{generator_forward.4} parent=0
    _
  %s7 = ssub.s32 1, %s5
  %s8 = scalar_select 0, %s7, %s5
  $region1: #{generator_forward.4} parent=0
    #allocation2 [shape = 'u8[972800]{0}', space=vmem, size = 0xed800, scoped, tag = 'input window, operand 1, single buffered']
    #allocation3 [shape = 's32[1]{0}', space=sflag, size = 0x4, scoped, tag = 'scoped memory for generator_forward.4']
    %9 = vsyncpa [#allocation3], 0
    // Predicated region
    $region2: #{generator_forward.4} parent=1 // pred_check
      _
    $region3: #{generator_forward.4} parent=1 // pred_check_branch
      %11 = sbr.rel (0) target = $region5
    $region4: #{generator_forward.4} parent=1 // pred_region
      _
    $region5: #{generator_forward.4} parent=1 // pred_fallthru
      _
    // Predicated region
    $region6: #{generator_forward.4} parent=1 // pred_check
      _
    $region7: #{generator_forward.4} parent=1 // pred_check_branch
      %13 = sbr.rel (0) target = $region9
    $region8: #{generator_forward.4} parent=1 // pred_region
      %s15 = ssub.s32 30400, 30400
      %16 = vsyncadd [#allocation3], %s15
      %s17 = sshll.u32 [#allocation2], 4
      %s18 = int_to_ptr.vmem [resolvable:$true] %s17
      %23 = dma.hbm_to_vmem [thread:$0]  %s1, 30400, %s18, [#allocation3], 1600, 1600, 100
    $region9: #{generator_forward.4} parent=1 // pred_fallthru
      _
    // Predicated region
    $region10: #{generator_forward.4} parent=1 // pred_check
      _
    $region11: #{generator_forward.4} parent=1 // pred_check_branch
      %25 = sbr.rel (0) target = $region13
    $region12: #{generator_forward.4} parent=1 // pred_region
      _
    $region13: #{generator_forward.4} parent=1 // pred_fallthru
      _
    // Predicated region
    $region14: #{generator_forward.4} parent=1 // pred_check
      _
    $region15: #{generator_forward.4} parent=1 // pred_check_branch
      %27 = sbr.rel (0) target = $region17
    $region16: #{generator_forward.4} parent=1 // pred_region
      _
    $region17: #{generator_forward.4} parent=1 // pred_fallthru
      _
    // Predicated region
    $region18: #{generator_forward.4} parent=1 // pred_check
      _
    $region19: #{generator_forward.4} parent=1 // pred_check_branch
      %29 = sbr.rel (0) target = $region21
    $region20: #{generator_forward.4} parent=1 // pred_region
      %30 = dma.done [#allocation3], 30400
    $region21: #{generator_forward.4} parent=1 // pred_fallthru
      _
    %v32 = vld [vmem:[%s0] sm:$0xff]
    %v33 = vld [vmem:[#allocation2] sm:$0xff]
    %v34 = vld [vmem:[#allocation2 + $0x8] sm:$0xff]
    %v35 = vld [vmem:[#allocation2 + $0x10] sm:$0xff]
    %v36 = vld [vmem:[#allocation2 + $0x18] sm:$0xff]
    %v37 = vld [vmem:[#allocation2 + $0x20] sm:$0xff]
    %v38 = vld [vmem:[#allocation2 + $0x28] sm:$0xff]
    %v39 = vld [vmem:[#allocation2 + $0x30] sm:$0xff]
    %v40 = vld [vmem:[#allocation2 + $0x38] sm:$0xff]
    %v41 = vld [vmem:[#allocation2 + $0x40] sm:$0xff]
    %v42 = vld [vmem:[#allocation2 + $0x48] sm:$0xff]
    %v43 = vld [vmem:[#allocation2 + $0x50] sm:$0xff]
    %v44 = vld [vmem:[#allocation2 + $0x58] sm:$0xff]
    %v45 = vld [vmem:[#allocation2 + $0x60] sm:$0xf]
    %v46 = vld [vmem:[#allocation2 + $0x64] sm:$0xff]
    %v47 = vld [vmem:[#allocation2 + $0x6c] sm:$0xff]
    %v48 = vld [vmem:[#allocation2 + $0x74] sm:$0xff]
    %v49 = vld [vmem:[#allocation2 + $0x7c] sm:$0xff]
    %v50 = vld [vmem:[#allocation2 + $0x84] sm:$0xff]
    %v51 = vld [vmem:[#allocation2 + $0x8c] sm:$0xff]
    %v52 = vld [vmem:[#allocation2 + $0x94] sm:$0xff]
    %v53 = vld [vmem:[#allocation2 + $0x9c] sm:$0xff]
    %v54 = vld [vmem:[#allocation2 + $0xa4] sm:$0xff]
    %v55 = vld [vmem:[#allocation2 + $0xac] sm:$0xff]
    %v56 = vld [vmem:[#allocation2 + $0xb4] sm:$0xff]
    %v57 = vld [vmem:[#allocation2 + $0xbc] sm:$0xff]
    %v58 = vld [vmem:[#allocation2 + $0xc4] sm:$0xf]
    %v59 = vld [vmem:[#allocation2 + $0xc8] sm:$0xff]
    %v60 = vld [vmem:[#allocation2 + $0xd0] sm:$0xff]
    %v61 = vld [vmem:[#allocation2 + $0xd8] sm:$0xff]
    %v62 = vld [vmem:[#allocation2 + $0xe0] sm:$0xff]
    %v63 = vld [vmem:[#allocation2 + $0xe8] sm:$0xff]
    %v64 = vld [vmem:[#allocation2 + $0xf0] sm:$0xff]
    %v65 = vld [vmem:[#allocation2 + $0xf8] sm:$0xff]
    %v66 = vld [vmem:[#allocation2 + $0x100] sm:$0xff]
    %v67 = vld [vmem:[#allocation2 + $0x108] sm:$0xff]
    %v68 = vld [vmem:[#allocation2 + $0x110] sm:$0xff]
    %v69 = vld [vmem:[#allocation2 + $0x118] sm:$0xff]
    %v70 = vld [vmem:[#allocation2 + $0x120] sm:$0xff]
    %v71 = vld [vmem:[#allocation2 + $0x128] sm:$0xf]
    %v72 = vld [vmem:[#allocation2 + $0x12c] sm:$0xff]
    %v73 = vld [vmem:[#allocation2 + $0x134] sm:$0xff]
    %v74 = vld [vmem:[#allocation2 + $0x13c] sm:$0xff]
    %v75 = vld [vmem:[#allocation2 + $0x144] sm:$0xff]
    %v76 = vld [vmem:[#allocation2 + $0x14c] sm:$0xff]
    %v77 = vld [vmem:[#allocation2 + $0x154] sm:$0xff]
    %v78 = vld [vmem:[#allocation2 + $0x15c] sm:$0xff]
    %v79 = vld [vmem:[#allocation2 + $0x164] sm:$0xff]
    %v80 = vld [vmem:[#allocation2 + $0x16c] sm:$0xff]
    %v81 = vld [vmem:[#allocation2 + $0x174] sm:$0xff]
    %v82 = vld [vmem:[#allocation2 + $0x17c] sm:$0xff]
    %v83 = vld [vmem:[#allocation2 + $0x184] sm:$0xff]
    %v84 = vld [vmem:[#allocation2 + $0x18c] sm:$0xf]
    %v85 = vld [vmem:[#allocation2 + $0x190] sm:$0xff]
    %v86 = vld [vmem:[#allocation2 + $0x198] sm:$0xff]
    %v87 = vld [vmem:[#allocation2 + $0x1a0] sm:$0xff]
    %v88 = vld [vmem:[#allocation2 + $0x1a8] sm:$0xff]
    %v89 = vld [vmem:[#allocation2 + $0x1b0] sm:$0xff]
    %v90 = vld [vmem:[#allocation2 + $0x1b8] sm:$0xff]
    %v91 = vld [vmem:[#allocation2 + $0x1c0] sm:$0xff]
    %v92 = vld [vmem:[#allocation2 + $0x1c8] sm:$0xff]
    %v93 = vld [vmem:[#allocation2 + $0x1d0] sm:$0xff]
    %v94 = vld [vmem:[#allocation2 + $0x1d8] sm:$0xff]
    %v95 = vld [vmem:[#allocation2 + $0x1e0] sm:$0xff]
    %v96 = vld [vmem:[#allocation2 + $0x1e8] sm:$0xff]
    %v97 = vld [vmem:[#allocation2 + $0x1f0] sm:$0xf]
    %v98 = vld [vmem:[#allocation2 + $0x1f4] sm:$0xff]
    %v99 = vld [vmem:[#allocation2 + $0x1fc] sm:$0xff]
    %v100 = vld [vmem:[#allocation2 + $0x204] sm:$0xff]
    %v101 = vld [vmem:[#allocation2 + $0x20c] sm:$0xff]
    %v102 = vld [vmem:[#allocation2 + $0x214] sm:$0xff]
    %v103 = vld [vmem:[#allocation2 + $0x21c] sm:$0xff]
    %v104 = vld [vmem:[#allocation2 + $0x224] sm:$0xff]
    %v105 = vld [vmem:[#allocation2 + $0x22c] sm:$0xff]
    %v106 = vld [vmem:[#allocation2 + $0x234] sm:$0xff]
    %v107 = vld [vmem:[#allocation2 + $0x23c] sm:$0xff]
    %v108 = vld [vmem:[#allocation2 + $0x244] sm:$0xff]
    %v109 = vld [vmem:[#allocation2 + $0x24c] sm:$0xff]
    %v110 = vld [vmem:[#allocation2 + $0x254] sm:$0xf]
    %v111 = vld [vmem:[#allocation2 + $0x258] sm:$0xff]
    %v112 = vld [vmem:[#allocation2 + $0x260] sm:$0xff]
    %v113 = vld [vmem:[#allocation2 + $0x268] sm:$0xff]
    %v114 = vld [vmem:[#allocation2 + $0x270] sm:$0xff]
    %v115 = vld [vmem:[#allocation2 + $0x278] sm:$0xff]
    %v116 = vld [vmem:[#allocation2 + $0x280] sm:$0xff]
    %v117 = vld [vmem:[#allocation2 + $0x288] sm:$0xff]
    %v118 = vld [vmem:[#allocation2 + $0x290] sm:$0xff]
    %v119 = vld [vmem:[#allocation2 + $0x298] sm:$0xff]
    %v120 = vld [vmem:[#allocation2 + $0x2a0] sm:$0xff]
    %v121 = vld [vmem:[#allocation2 + $0x2a8] sm:$0xff]
    %v122 = vld [vmem:[#allocation2 + $0x2b0] sm:$0xff]
    %v123 = vld [vmem:[#allocation2 + $0x2b8] sm:$0xf]
    %v124 = vld [vmem:[#allocation2 + $0x2bc] sm:$0xff]
    %v125 = vld [vmem:[#allocation2 + $0x2c4] sm:$0xff]
    %v126 = vld [vmem:[#allocation2 + $0x2cc] sm:$0xff]
    %v127 = vld [vmem:[#allocation2 + $0x2d4] sm:$0xff]
    %v128 = vld [vmem:[#allocation2 + $0x2dc] sm:$0xff]
    %v129 = vld [vmem:[#allocation2 + $0x2e4] sm:$0xff]
    %v130 = vld [vmem:[#allocation2 + $0x2ec] sm:$0xff]
    %v131 = vld [vmem:[#allocation2 + $0x2f4] sm:$0xff]
    %v132 = vld [vmem:[#allocation2 + $0x2fc] sm:$0xff]
    %v133 = vld [vmem:[#allocation2 + $0x304] sm:$0xff]
    %v134 = vld [vmem:[#allocation2 + $0x30c] sm:$0xff]
    %v135 = vld [vmem:[#allocation2 + $0x314] sm:$0xff]
    %v136 = vld [vmem:[#allocation2 + $0x31c] sm:$0xf]
    %v137 = vld [vmem:[#allocation2 + $0x320] sm:$0xff]
    %v138 = vld [vmem:[#allocation2 + $0x328] sm:$0xff]
    %v139 = vld [vmem:[#allocation2 + $0x330] sm:$0xff]
    %v140 = vld [vmem:[#allocation2 + $0x338] sm:$0xff]
    %v141 = vld [vmem:[#allocation2 + $0x340] sm:$0xff]
    %v142 = vld [vmem:[#allocation2 + $0x348] sm:$0xff]
    %v143 = vld [vmem:[#allocation2 + $0x350] sm:$0xff]
    %v144 = vld [vmem:[#allocation2 + $0x358] sm:$0xff]
    %v145 = vld [vmem:[#allocation2 + $0x360] sm:$0xff]
    %v146 = vld [vmem:[#allocation2 + $0x368] sm:$0xff]
    %v147 = vld [vmem:[#allocation2 + $0x370] sm:$0xff]
    %v148 = vld [vmem:[#allocation2 + $0x378] sm:$0xff]
    %v149 = vld [vmem:[#allocation2 + $0x380] sm:$0xf]
    %v150 = vld [vmem:[#allocation2 + $0x384] sm:$0xff]
    %v151 = vld [vmem:[#allocation2 + $0x38c] sm:$0xff]
    %v152 = vld [vmem:[#allocation2 + $0x394] sm:$0xff]
    %v153 = vld [vmem:[#allocation2 + $0x39c] sm:$0xff]
    %v154 = vld [vmem:[#allocation2 + $0x3a4] sm:$0xff]
    %v155 = vld [vmem:[#allocation2 + $0x3ac] sm:$0xff]
    %v156 = vld [vmem:[#allocation2 + $0x3b4] sm:$0xff]
    %v157 = vld [vmem:[#allocation2 + $0x3bc] sm:$0xff]
    %v158 = vld [vmem:[#allocation2 + $0x3c4] sm:$0xff]
    %v159 = vld [vmem:[#allocation2 + $0x3cc] sm:$0xff]
    %v160 = vld [vmem:[#allocation2 + $0x3d4] sm:$0xff]
    %v161 = vld [vmem:[#allocation2 + $0x3dc] sm:$0xff]
    %v162 = vld [vmem:[#allocation2 + $0x3e4] sm:$0xf]
    %v163 = vld [vmem:[#allocation2 + $0x3e8] sm:$0xff]
    %v164 = vld [vmem:[#allocation2 + $0x3f0] sm:$0xff]
    %v165 = vld [vmem:[#allocation2 + $0x3f8] sm:$0xff]
    %v166 = vld [vmem:[#allocation2 + $0x400] sm:$0xff]
    %v167 = vld [vmem:[#allocation2 + $0x408] sm:$0xff]
    %v168 = vld [vmem:[#allocation2 + $0x410] sm:$0xff]
    %v169 = vld [vmem:[#allocation2 + $0x418] sm:$0xff]
    %v170 = vld [vmem:[#allocation2 + $0x420] sm:$0xff]
    %v171 = vld [vmem:[#allocation2 + $0x428] sm:$0xff]
    %v172 = vld [vmem:[#allocation2 + $0x430] sm:$0xff]
    %v173 = vld [vmem:[#allocation2 + $0x438] sm:$0xff]
    %v174 = vld [vmem:[#allocation2 + $0x440] sm:$0xff]
    %v175 = vld [vmem:[#allocation2 + $0x448] sm:$0xf]
    %v176 = vld [vmem:[#allocation2 + $0x44c] sm:$0xff]
    %v177 = vld [vmem:[#allocation2 + $0x454] sm:$0xff]
    %v178 = vld [vmem:[#allocation2 + $0x45c] sm:$0xff]
    %v179 = vld [vmem:[#allocation2 + $0x464] sm:$0xff]
    %v180 = vld [vmem:[#allocation2 + $0x46c] sm:$0xff]
    %v181 = vld [vmem:[#allocation2 + $0x474] sm:$0xff]
    %v182 = vld [vmem:[#allocation2 + $0x47c] sm:$0xff]
    %v183 = vld [vmem:[#allocation2 + $0x484] sm:$0xff]
    %v184 = vld [vmem:[#allocation2 + $0x48c] sm:$0xff]
    %v185 = vld [vmem:[#allocation2 + $0x494] sm:$0xff]
    %v186 = vld [vmem:[#allocation2 + $0x49c] sm:$0xff]
    %v187 = vld [vmem:[#allocation2 + $0x4a4] sm:$0xff]
    %v188 = vld [vmem:[#allocation2 + $0x4ac] sm:$0xf]
    %v189 = vld [vmem:[#allocation2 + $0x4b0] sm:$0xff]
    %v190 = vld [vmem:[#allocation2 + $0x4b8] sm:$0xff]
    %v191 = vld [vmem:[#allocation2 + $0x4c0] sm:$0xff]
    %v192 = vld [vmem:[#allocation2 + $0x4c8] sm:$0xff]
    %v193 = vld [vmem:[#allocation2 + $0x4d0] sm:$0xff]
    %v194 = vld [vmem:[#allocation2 + $0x4d8] sm:$0xff]
    %v195 = vld [vmem:[#allocation2 + $0x4e0] sm:$0xff]
    %v196 = vld [vmem:[#allocation2 + $0x4e8] sm:$0xff]
    %v197 = vld [vmem:[#allocation2 + $0x4f0] sm:$0xff]
    %v198 = vld [vmem:[#allocation2 + $0x4f8] sm:$0xff]
    %v199 = vld [vmem:[#allocation2 + $0x500] sm:$0xff]
    %v200 = vld [vmem:[#allocation2 + $0x508] sm:$0xff]
    %v201 = vld [vmem:[#allocation2 + $0x510] sm:$0xf]
    %v202 = vld [vmem:[#allocation2 + $0x514] sm:$0xff]
    %v203 = vld [vmem:[#allocation2 + $0x51c] sm:$0xff]
    %v204 = vld [vmem:[#allocation2 + $0x524] sm:$0xff]
    %v205 = vld [vmem:[#allocation2 + $0x52c] sm:$0xff]
    %v206 = vld [vmem:[#allocation2 + $0x534] sm:$0xff]
    %v207 = vld [vmem:[#allocation2 + $0x53c] sm:$0xff]
    %v208 = vld [vmem:[#allocation2 + $0x544] sm:$0xff]
    %v209 = vld [vmem:[#allocation2 + $0x54c] sm:$0xff]
    %v210 = vld [vmem:[#allocation2 + $0x554] sm:$0xff]
    %v211 = vld [vmem:[#allocation2 + $0x55c] sm:$0xff]
    %v212 = vld [vmem:[#allocation2 + $0x564] sm:$0xff]
    %v213 = vld [vmem:[#allocation2 + $0x56c] sm:$0xff]
    %v214 = vld [vmem:[#allocation2 + $0x574] sm:$0xf]
    %v215 = vld [vmem:[#allocation2 + $0x578] sm:$0xff]
    %v216 = vld [vmem:[#allocation2 + $0x580] sm:$0xff]
    %v217 = vld [vmem:[#allocation2 + $0x588] sm:$0xff]
    %v218 = vld [vmem:[#allocation2 + $0x590] sm:$0xff]
    %v219 = vld [vmem:[#allocation2 + $0x598] sm:$0xff]
    %v220 = vld [vmem:[#allocation2 + $0x5a0] sm:$0xff]
    %v221 = vld [vmem:[#allocation2 + $0x5a8] sm:$0xff]
    %v222 = vld [vmem:[#allocation2 + $0x5b0] sm:$0xff]
    %v223 = vld [vmem:[#allocation2 + $0x5b8] sm:$0xff]
    %v224 = vld [vmem:[#allocation2 + $0x5c0] sm:$0xff]
    %v225 = vld [vmem:[#allocation2 + $0x5c8] sm:$0xff]
    %v226 = vld [vmem:[#allocation2 + $0x5d0] sm:$0xff]
    %v227 = vld [vmem:[#allocation2 + $0x5d8] sm:$0xf]
    %v228 = vld [vmem:[#allocation2 + $0x5dc] sm:$0xff]
    %v229 = vld [vmem:[#allocation2 + $0x5e4] sm:$0xff]
    %v230 = vld [vmem:[#allocation2 + $0x5ec] sm:$0xff]
    %v231 = vld [vmem:[#allocation2 + $0x5f4] sm:$0xff]
    %v232 = vld [vmem:[#allocation2 + $0x5fc] sm:$0xff]
    %v233 = vld [vmem:[#allocation2 + $0x604] sm:$0xff]
    %v234 = vld [vmem:[#allocation2 + $0x60c] sm:$0xff]
    %v235 = vld [vmem:[#allocation2 + $0x614] sm:$0xff]
    %v236 = vld [vmem:[#allocation2 + $0x61c] sm:$0xff]
    %v237 = vld [vmem:[#allocation2 + $0x624] sm:$0xff]
    %v238 = vld [vmem:[#allocation2 + $0x62c] sm:$0xff]
    %v239 = vld [vmem:[#allocation2 + $0x634] sm:$0xff]
    %v240 = vld [vmem:[#allocation2 + $0x63c] sm:$0xf]
    %v241 = vld [vmem:[#allocation2 + $0x640] sm:$0xff]
    %v242 = vld [vmem:[#allocation2 + $0x648] sm:$0xff]
    %v243 = vld [vmem:[#allocation2 + $0x650] sm:$0xff]
    %v244 = vld [vmem:[#allocation2 + $0x658] sm:$0xff]
    %v245 = vld [vmem:[#allocation2 + $0x660] sm:$0xff]
    %v246 = vld [vmem:[#allocation2 + $0x668] sm:$0xff]
    %v247 = vld [vmem:[#allocation2 + $0x670] sm:$0xff]
    %v248 = vld [vmem:[#allocation2 + $0x678] sm:$0xff]
    %v249 = vld [vmem:[#allocation2 + $0x680] sm:$0xff]
    %v250 = vld [vmem:[#allocation2 + $0x688] sm:$0xff]
    %v251 = vld [vmem:[#allocation2 + $0x690] sm:$0xff]
    %v252 = vld [vmem:[#allocation2 + $0x698] sm:$0xff]
    %v253 = vld [vmem:[#allocation2 + $0x6a0] sm:$0xf]
    %v254 = vld [vmem:[#allocation2 + $0x6a4] sm:$0xff]
    %v255 = vld [vmem:[#allocation2 + $0x6ac] sm:$0xff]
    %v256 = vld [vmem:[#allocation2 + $0x6b4] sm:$0xff]
    %v257 = vld [vmem:[#allocation2 + $0x6bc] sm:$0xff]
    %v258 = vld [vmem:[#allocation2 + $0x6c4] sm:$0xff]
    %v259 = vld [vmem:[#allocation2 + $0x6cc] sm:$0xff]
    %v260 = vld [vmem:[#allocation2 + $0x6d4] sm:$0xff]
    %v261 = vld [vmem:[#allocation2 + $0x6dc] sm:$0xff]
    %v262 = vld [vmem:[#allocation2 + $0x6e4] sm:$0xff]
    %v263 = vld [vmem:[#allocation2 + $0x6ec] sm:$0xff]
    %v264 = vld [vmem:[#allocation2 + $0x6f4] sm:$0xff]
    %v265 = vld [vmem:[#allocation2 + $0x6fc] sm:$0xff]
    %v266 = vld [vmem:[#allocation2 + $0x704] sm:$0xf]
    %v267 = vld [vmem:[#allocation2 + $0x708] sm:$0x77]
    %v268 = vld [vmem:[#allocation2 + $0x710] sm:$0x77]
    %v269 = vld [vmem:[#allocation2 + $0x718] sm:$0x77]
    %v270 = vld [vmem:[#allocation2 + $0x720] sm:$0x77]
    %v271 = vld [vmem:[#allocation2 + $0x728] sm:$0x77]
    %v272 = vld [vmem:[#allocation2 + $0x730] sm:$0x77]
    %v273 = vld [vmem:[#allocation2 + $0x738] sm:$0x77]
    %v274 = vld [vmem:[#allocation2 + $0x740] sm:$0x77]
    %v275 = vld [vmem:[#allocation2 + $0x748] sm:$0x77]
    %v276 = vld [vmem:[#allocation2 + $0x750] sm:$0x77]
    %v277 = vld [vmem:[#allocation2 + $0x758] sm:$0x77]
    %v278 = vld [vmem:[#allocation2 + $0x760] sm:$0x77]
    %v279 = vld [vmem:[#allocation2 + $0x768] sm:$0x7]
    %v280 = vld [vmem:[%s2] sm:$0xff]
    %v281 = vld [vmem:[%s2 + $0x8] sm:$0xff]
    %v282 = vld [vmem:[%s2 + $0x10] sm:$0xff]
    %v283 = vld [vmem:[%s2 + $0x18] sm:$0x1]
    %v288 = vlaneseq
    %v289 = vshrl.u32 %v288, 7
    %v290 = vsub.s32 0, %v289
    %v291 = vrot.slane %v280, %v290
    %v292 = vlaneseq
    %v293 = vshrl.u32 %v292, 7
    %v294 = vsub.s32 1, %v293
    %v295 = vrot.slane %v280, %v294
    %v296 = vlaneseq
    %v297 = vshrl.u32 %v296, 7
    %v298 = vsub.s32 2, %v297
    %v299 = vrot.slane %v280, %v298
    %v300 = vlaneseq
    %v301 = vshrl.u32 %v300, 7
    %v302 = vsub.s32 3, %v301
    %v303 = vrot.slane %v280, %v302
    %v304 = vlaneseq
    %v305 = vshrl.u32 %v304, 7
    %v306 = vsub.s32 4, %v305
    %v307 = vrot.slane %v280, %v306
    %v308 = vlaneseq
    %v309 = vshrl.u32 %v308, 7
    %v310 = vsub.s32 5, %v309
    %v311 = vrot.slane %v280, %v310
    %v312 = vlaneseq
    %v313 = vshrl.u32 %v312, 7
    %v314 = vsub.s32 6, %v313
    %v315 = vrot.slane %v280, %v314
    %v316 = vlaneseq
    %v317 = vshrl.u32 %v316, 7
    %v318 = vsub.s32 7, %v317
    %v319 = vrot.slane %v280, %v318
    %v320 = vlaneseq
    %v321 = vshrl.u32 %v320, 7
    %v322 = vsub.s32 0, %v321
    %v323 = vrot.slane %v281, %v322
    %v324 = vlaneseq
    %v325 = vshrl.u32 %v324, 7
    %v326 = vsub.s32 1, %v325
    %v327 = vrot.slane %v281, %v326
    %v328 = vlaneseq
    %v329 = vshrl.u32 %v328, 7
    %v330 = vsub.s32 2, %v329
    %v331 = vrot.slane %v281, %v330
    %v332 = vlaneseq
    %v333 = vshrl.u32 %v332, 7
    %v334 = vsub.s32 3, %v333
    %v335 = vrot.slane %v281, %v334
    %v336 = vlaneseq
    %v337 = vshrl.u32 %v336, 7
    %v338 = vsub.s32 4, %v337
    %v339 = vrot.slane %v281, %v338
    %v340 = vlaneseq
    %v341 = vshrl.u32 %v340, 7
    %v342 = vsub.s32 5, %v341
    %v343 = vrot.slane %v281, %v342
    %v344 = vlaneseq
    %v345 = vshrl.u32 %v344, 7
    %v346 = vsub.s32 6, %v345
    %v347 = vrot.slane %v281, %v346
    %v348 = vlaneseq
    %v349 = vshrl.u32 %v348, 7
    %v350 = vsub.s32 7, %v349
    %v351 = vrot.slane %v281, %v350
    %v352 = vlaneseq
    %v353 = vshrl.u32 %v352, 7
    %v354 = vsub.s32 0, %v353
    %v355 = vrot.slane %v282, %v354
    %v356 = vlaneseq
    %v357 = vshrl.u32 %v356, 7
    %v358 = vsub.s32 1, %v357
    %v359 = vrot.slane %v282, %v358
    %v360 = vlaneseq
    %v361 = vshrl.u32 %v360, 7
    %v362 = vsub.s32 2, %v361
    %v363 = vrot.slane %v282, %v362
    %v364 = vlaneseq
    %v365 = vshrl.u32 %v364, 7
    %v366 = vsub.s32 3, %v365
    %v367 = vrot.slane %v282, %v366
    %v368 = vlaneseq
    %v369 = vshrl.u32 %v368, 7
    %v370 = vsub.s32 4, %v369
    %v371 = vrot.slane %v282, %v370
    %v372 = vlaneseq
    %v373 = vshrl.u32 %v372, 7
    %v374 = vsub.s32 5, %v373
    %v375 = vrot.slane %v282, %v374
    %v376 = vlaneseq
    %v377 = vshrl.u32 %v376, 7
    %v378 = vsub.s32 6, %v377
    %v379 = vrot.slane %v282, %v378
    %v380 = vlaneseq
    %v381 = vshrl.u32 %v380, 7
    %v382 = vsub.s32 7, %v381
    %v383 = vrot.slane %v282, %v382
    %v384 = vlaneseq
    %v385 = vshrl.u32 %v384, 7
    %v386 = vsub.s32 0, %v385
    %v387 = vrot.slane %v283, %v386
    %v414 = vunpack.c.l.b16 %v32
    %v415 = vunpack.c.h.b16 %v32
    %v416 = vpack.c.b16 %v414, %v414
    %v417 = vpack.c.b16 %v415, %v415
    %v666 = vunpack.c.l.b16 %v33
    %v667 = vunpack.c.h.b16 %v33
    %v668 = vunpack.c.l.b16 %v34
    %v669 = vunpack.c.h.b16 %v34
    %v670 = vunpack.c.l.b16 %v35
    %v671 = vunpack.c.h.b16 %v35
    %v672 = vunpack.c.l.b16 %v36
    %v673 = vunpack.c.h.b16 %v36
    %v674 = vunpack.c.l.b16 %v37
    %v675 = vunpack.c.h.b16 %v37
    %v676 = vunpack.c.l.b16 %v38
    %v677 = vunpack.c.h.b16 %v38
    %v678 = vunpack.c.l.b16 %v39
    %v679 = vunpack.c.h.b16 %v39
    %v680 = vunpack.c.l.b16 %v40
    %v681 = vunpack.c.h.b16 %v40
    %v682 = vunpack.c.l.b16 %v41
    %v683 = vunpack.c.h.b16 %v41
    %v684 = vunpack.c.l.b16 %v42
    %v685 = vunpack.c.h.b16 %v42
    %v686 = vunpack.c.l.b16 %v43
    %v687 = vunpack.c.h.b16 %v43
    %v688 = vunpack.c.l.b16 %v44
    %v689 = vunpack.c.h.b16 %v44
    %v690 = vunpack.c.l.b16 %v45
    %v691 = vunpack.c.l.b16 %v46
    %v692 = vunpack.c.h.b16 %v46
    %v693 = vunpack.c.l.b16 %v47
    %v694 = vunpack.c.h.b16 %v47
    %v695 = vunpack.c.l.b16 %v48
    %v696 = vunpack.c.h.b16 %v48
    %v697 = vunpack.c.l.b16 %v49
    %v698 = vunpack.c.h.b16 %v49
    %v699 = vunpack.c.l.b16 %v50
    %v700 = vunpack.c.h.b16 %v50
    %v701 = vunpack.c.l.b16 %v51
    %v702 = vunpack.c.h.b16 %v51
    %v703 = vunpack.c.l.b16 %v52
    %v704 = vunpack.c.h.b16 %v52
    %v705 = vunpack.c.l.b16 %v53
    %v706 = vunpack.c.h.b16 %v53
    %v707 = vunpack.c.l.b16 %v54
    %v708 = vunpack.c.h.b16 %v54
    %v709 = vunpack.c.l.b16 %v55
    %v710 = vunpack.c.h.b16 %v55
    %v711 = vunpack.c.l.b16 %v56
    %v712 = vunpack.c.h.b16 %v56
    %v713 = vunpack.c.l.b16 %v57
    %v714 = vunpack.c.h.b16 %v57
    %v715 = vunpack.c.l.b16 %v58
    %v716 = vunpack.c.l.b16 %v59
    %v717 = vunpack.c.h.b16 %v59
    %v718 = vunpack.c.l.b16 %v60
    %v719 = vunpack.c.h.b16 %v60
    %v720 = vunpack.c.l.b16 %v61
    %v721 = vunpack.c.h.b16 %v61
    %v722 = vunpack.c.l.b16 %v62
    %v723 = vunpack.c.h.b16 %v62
    %v724 = vunpack.c.l.b16 %v63
    %v725 = vunpack.c.h.b16 %v63
    %v726 = vunpack.c.l.b16 %v64
    %v727 = vunpack.c.h.b16 %v64
    %v728 = vunpack.c.l.b16 %v65
    %v729 = vunpack.c.h.b16 %v65
    %v730 = vunpack.c.l.b16 %v66
    %v731 = vunpack.c.h.b16 %v66
    %v732 = vunpack.c.l.b16 %v67
    %v733 = vunpack.c.h.b16 %v67
    %v734 = vunpack.c.l.b16 %v68
    %v735 = vunpack.c.h.b16 %v68
    %v736 = vunpack.c.l.b16 %v69
    %v737 = vunpack.c.h.b16 %v69
    %v738 = vunpack.c.l.b16 %v70
    %v739 = vunpack.c.h.b16 %v70
    %v740 = vunpack.c.l.b16 %v71
    %v741 = vunpack.c.l.b16 %v72
    %v742 = vunpack.c.h.b16 %v72
    %v743 = vunpack.c.l.b16 %v73
    %v744 = vunpack.c.h.b16 %v73
    %v745 = vunpack.c.l.b16 %v74
    %v746 = vunpack.c.h.b16 %v74
    %v747 = vunpack.c.l.b16 %v75
    %v748 = vunpack.c.h.b16 %v75
    %v749 = vunpack.c.l.b16 %v76
    %v750 = vunpack.c.h.b16 %v76
    %v751 = vunpack.c.l.b16 %v77
    %v752 = vunpack.c.h.b16 %v77
    %v753 = vunpack.c.l.b16 %v78
    %v754 = vunpack.c.h.b16 %v78
    %v755 = vunpack.c.l.b16 %v79
    %v756 = vunpack.c.h.b16 %v79
    %v757 = vunpack.c.l.b16 %v80
    %v758 = vunpack.c.h.b16 %v80
    %v759 = vunpack.c.l.b16 %v81
    %v760 = vunpack.c.h.b16 %v81
    %v761 = vunpack.c.l.b16 %v82
    %v762 = vunpack.c.h.b16 %v82
    %v763 = vunpack.c.l.b16 %v83
    %v764 = vunpack.c.h.b16 %v83
    %v765 = vunpack.c.l.b16 %v84
    %v766 = vunpack.c.l.b16 %v85
    %v767 = vunpack.c.h.b16 %v85
    %v768 = vunpack.c.l.b16 %v86
    %v769 = vunpack.c.h.b16 %v86
    %v770 = vunpack.c.l.b16 %v87
    %v771 = vunpack.c.h.b16 %v87
    %v772 = vunpack.c.l.b16 %v88
    %v773 = vunpack.c.h.b16 %v88
    %v774 = vunpack.c.l.b16 %v89
    %v775 = vunpack.c.h.b16 %v89
    %v776 = vunpack.c.l.b16 %v90
    %v777 = vunpack.c.h.b16 %v90
    %v778 = vunpack.c.l.b16 %v91
    %v779 = vunpack.c.h.b16 %v91
    %v780 = vunpack.c.l.b16 %v92
    %v781 = vunpack.c.h.b16 %v92
    %v782 = vunpack.c.l.b16 %v93
    %v783 = vunpack.c.h.b16 %v93
    %v784 = vunpack.c.l.b16 %v94
    %v785 = vunpack.c.h.b16 %v94
    %v786 = vunpack.c.l.b16 %v95
    %v787 = vunpack.c.h.b16 %v95
    %v788 = vunpack.c.l.b16 %v96
    %v789 = vunpack.c.h.b16 %v96
    %v790 = vunpack.c.l.b16 %v97
    %v791 = vunpack.c.l.b16 %v98
    %v792 = vunpack.c.h.b16 %v98
    %v793 = vunpack.c.l.b16 %v99
    %v794 = vunpack.c.h.b16 %v99
    %v795 = vunpack.c.l.b16 %v100
    %v796 = vunpack.c.h.b16 %v100
    %v797 = vunpack.c.l.b16 %v101
    %v798 = vunpack.c.h.b16 %v101
    %v799 = vunpack.c.l.b16 %v102
    %v800 = vunpack.c.h.b16 %v102
    %v801 = vunpack.c.l.b16 %v103
    %v802 = vunpack.c.h.b16 %v103
    %v803 = vunpack.c.l.b16 %v104
    %v804 = vunpack.c.h.b16 %v104
    %v805 = vunpack.c.l.b16 %v105
    %v806 = vunpack.c.h.b16 %v105
    %v807 = vunpack.c.l.b16 %v106
    %v808 = vunpack.c.h.b16 %v106
    %v809 = vunpack.c.l.b16 %v107
    %v810 = vunpack.c.h.b16 %v107
    %v811 = vunpack.c.l.b16 %v108
    %v812 = vunpack.c.h.b16 %v108
    %v813 = vunpack.c.l.b16 %v109
    %v814 = vunpack.c.h.b16 %v109
    %v815 = vunpack.c.l.b16 %v110
    %v816 = vunpack.c.l.b16 %v111
    %v817 = vunpack.c.h.b16 %v111
    %v818 = vunpack.c.l.b16 %v112
    %v819 = vunpack.c.h.b16 %v112
    %v820 = vunpack.c.l.b16 %v113
    %v821 = vunpack.c.h.b16 %v113
    %v822 = vunpack.c.l.b16 %v114
    %v823 = vunpack.c.h.b16 %v114
    %v824 = vunpack.c.l.b16 %v115
    %v825 = vunpack.c.h.b16 %v115
    %v826 = vunpack.c.l.b16 %v116
    %v827 = vunpack.c.h.b16 %v116
    %v828 = vunpack.c.l.b16 %v117
    %v829 = vunpack.c.h.b16 %v117
    %v830 = vunpack.c.l.b16 %v118
    %v831 = vunpack.c.h.b16 %v118
    %v832 = vunpack.c.l.b16 %v119
    %v833 = vunpack.c.h.b16 %v119
    %v834 = vunpack.c.l.b16 %v120
    %v835 = vunpack.c.h.b16 %v120
    %v836 = vunpack.c.l.b16 %v121
    %v837 = vunpack.c.h.b16 %v121
    %v838 = vunpack.c.l.b16 %v122
    %v839 = vunpack.c.h.b16 %v122
    %v840 = vunpack.c.l.b16 %v123
    %v841 = vunpack.c.l.b16 %v124
    %v842 = vunpack.c.h.b16 %v124
    %v843 = vunpack.c.l.b16 %v125
    %v844 = vunpack.c.h.b16 %v125
    %v845 = vunpack.c.l.b16 %v126
    %v846 = vunpack.c.h.b16 %v126
    %v847 = vunpack.c.l.b16 %v127
    %v848 = vunpack.c.h.b16 %v127
    %v849 = vunpack.c.l.b16 %v128
    %v850 = vunpack.c.h.b16 %v128
    %v851 = vunpack.c.l.b16 %v129
    %v852 = vunpack.c.h.b16 %v129
    %v853 = vunpack.c.l.b16 %v130
    %v854 = vunpack.c.h.b16 %v130
    %v855 = vunpack.c.l.b16 %v131
    %v856 = vunpack.c.h.b16 %v131
    %v857 = vunpack.c.l.b16 %v132
    %v858 = vunpack.c.h.b16 %v132
    %v859 = vunpack.c.l.b16 %v133
    %v860 = vunpack.c.h.b16 %v133
    %v861 = vunpack.c.l.b16 %v134
    %v862 = vunpack.c.h.b16 %v134
    %v863 = vunpack.c.l.b16 %v135
    %v864 = vunpack.c.h.b16 %v135
    %v865 = vunpack.c.l.b16 %v136
    %v866 = vunpack.c.l.b16 %v137
    %v867 = vunpack.c.h.b16 %v137
    %v868 = vunpack.c.l.b16 %v138
    %v869 = vunpack.c.h.b16 %v138
    %v870 = vunpack.c.l.b16 %v139
    %v871 = vunpack.c.h.b16 %v139
    %v872 = vunpack.c.l.b16 %v140
    %v873 = vunpack.c.h.b16 %v140
    %v874 = vunpack.c.l.b16 %v141
    %v875 = vunpack.c.h.b16 %v141
    %v876 = vunpack.c.l.b16 %v142
    %v877 = vunpack.c.h.b16 %v142
    %v878 = vunpack.c.l.b16 %v143
    %v879 = vunpack.c.h.b16 %v143
    %v880 = vunpack.c.l.b16 %v144
    %v881 = vunpack.c.h.b16 %v144
    %v882 = vunpack.c.l.b16 %v145
    %v883 = vunpack.c.h.b16 %v145
    %v884 = vunpack.c.l.b16 %v146
    %v885 = vunpack.c.h.b16 %v146
    %v886 = vunpack.c.l.b16 %v147
    %v887 = vunpack.c.h.b16 %v147
    %v888 = vunpack.c.l.b16 %v148
    %v889 = vunpack.c.h.b16 %v148
    %v890 = vunpack.c.l.b16 %v149
    %v891 = vunpack.c.l.b16 %v150
    %v892 = vunpack.c.h.b16 %v150
    %v893 = vunpack.c.l.b16 %v151
    %v894 = vunpack.c.h.b16 %v151
    %v895 = vunpack.c.l.b16 %v152
    %v896 = vunpack.c.h.b16 %v152
    %v897 = vunpack.c.l.b16 %v153
    %v898 = vunpack.c.h.b16 %v153
    %v899 = vunpack.c.l.b16 %v154
    %v900 = vunpack.c.h.b16 %v154
    %v901 = vunpack.c.l.b16 %v155
    %v902 = vunpack.c.h.b16 %v155
    %v903 = vunpack.c.l.b16 %v156
    %v904 = vunpack.c.h.b16 %v156
    %v905 = vunpack.c.l.b16 %v157
    %v906 = vunpack.c.h.b16 %v157
    %v907 = vunpack.c.l.b16 %v158
    %v908 = vunpack.c.h.b16 %v158
    %v909 = vunpack.c.l.b16 %v159
    %v910 = vunpack.c.h.b16 %v159
    %v911 = vunpack.c.l.b16 %v160
    %v912 = vunpack.c.h.b16 %v160
    %v913 = vunpack.c.l.b16 %v161
    %v914 = vunpack.c.h.b16 %v161
    %v915 = vunpack.c.l.b16 %v162
    %v916 = vunpack.c.l.b16 %v163
    %v917 = vunpack.c.h.b16 %v163
    %v918 = vunpack.c.l.b16 %v164
    %v919 = vunpack.c.h.b16 %v164
    %v920 = vunpack.c.l.b16 %v165
    %v921 = vunpack.c.h.b16 %v165
    %v922 = vunpack.c.l.b16 %v166
    %v923 = vunpack.c.h.b16 %v166
    %v924 = vunpack.c.l.b16 %v167
    %v925 = vunpack.c.h.b16 %v167
    %v926 = vunpack.c.l.b16 %v168
    %v927 = vunpack.c.h.b16 %v168
    %v928 = vunpack.c.l.b16 %v169
    %v929 = vunpack.c.h.b16 %v169
    %v930 = vunpack.c.l.b16 %v170
    %v931 = vunpack.c.h.b16 %v170
    %v932 = vunpack.c.l.b16 %v171
    %v933 = vunpack.c.h.b16 %v171
    %v934 = vunpack.c.l.b16 %v172
    %v935 = vunpack.c.h.b16 %v172
    %v936 = vunpack.c.l.b16 %v173
    %v937 = vunpack.c.h.b16 %v173
    %v938 = vunpack.c.l.b16 %v174
    %v939 = vunpack.c.h.b16 %v174
    %v940 = vunpack.c.l.b16 %v175
    %v941 = vunpack.c.l.b16 %v176
    %v942 = vunpack.c.h.b16 %v176
    %v943 = vunpack.c.l.b16 %v177
    %v944 = vunpack.c.h.b16 %v177
    %v945 = vunpack.c.l.b16 %v178
    %v946 = vunpack.c.h.b16 %v178
    %v947 = vunpack.c.l.b16 %v179
    %v948 = vunpack.c.h.b16 %v179
    %v949 = vunpack.c.l.b16 %v180
    %v950 = vunpack.c.h.b16 %v180
    %v951 = vunpack.c.l.b16 %v181
    %v952 = vunpack.c.h.b16 %v181
    %v953 = vunpack.c.l.b16 %v182
    %v954 = vunpack.c.h.b16 %v182
    %v955 = vunpack.c.l.b16 %v183
    %v956 = vunpack.c.h.b16 %v183
    %v957 = vunpack.c.l.b16 %v184
    %v958 = vunpack.c.h.b16 %v184
    %v959 = vunpack.c.l.b16 %v185
    %v960 = vunpack.c.h.b16 %v185
    %v961 = vunpack.c.l.b16 %v186
    %v962 = vunpack.c.h.b16 %v186
    %v963 = vunpack.c.l.b16 %v187
    %v964 = vunpack.c.h.b16 %v187
    %v965 = vunpack.c.l.b16 %v188
    %v966 = vunpack.c.l.b16 %v189
    %v967 = vunpack.c.h.b16 %v189
    %v968 = vunpack.c.l.b16 %v190
    %v969 = vunpack.c.h.b16 %v190
    %v970 = vunpack.c.l.b16 %v191
    %v971 = vunpack.c.h.b16 %v191
    %v972 = vunpack.c.l.b16 %v192
    %v973 = vunpack.c.h.b16 %v192
    %v974 = vunpack.c.l.b16 %v193
    %v975 = vunpack.c.h.b16 %v193
    %v976 = vunpack.c.l.b16 %v194
    %v977 = vunpack.c.h.b16 %v194
    %v978 = vunpack.c.l.b16 %v195
    %v979 = vunpack.c.h.b16 %v195
    %v980 = vunpack.c.l.b16 %v196
    %v981 = vunpack.c.h.b16 %v196
    %v982 = vunpack.c.l.b16 %v197
    %v983 = vunpack.c.h.b16 %v197
    %v984 = vunpack.c.l.b16 %v198
    %v985 = vunpack.c.h.b16 %v198
    %v986 = vunpack.c.l.b16 %v199
    %v987 = vunpack.c.h.b16 %v199
    %v988 = vunpack.c.l.b16 %v200
    %v989 = vunpack.c.h.b16 %v200
    %v990 = vunpack.c.l.b16 %v201
    %v991 = vunpack.c.l.b16 %v202
    %v992 = vunpack.c.h.b16 %v202
    %v993 = vunpack.c.l.b16 %v203
    %v994 = vunpack.c.h.b16 %v203
    %v995 = vunpack.c.l.b16 %v204
    %v996 = vunpack.c.h.b16 %v204
    %v997 = vunpack.c.l.b16 %v205
    %v998 = vunpack.c.h.b16 %v205
    %v999 = vunpack.c.l.b16 %v206
    %v1000 = vunpack.c.h.b16 %v206
    %v1001 = vunpack.c.l.b16 %v207
    %v1002 = vunpack.c.h.b16 %v207
    %v1003 = vunpack.c.l.b16 %v208
    %v1004 = vunpack.c.h.b16 %v208
    %v1005 = vunpack.c.l.b16 %v209
    %v1006 = vunpack.c.h.b16 %v209
    %v1007 = vunpack.c.l.b16 %v210
    %v1008 = vunpack.c.h.b16 %v210
    %v1009 = vunpack.c.l.b16 %v211
    %v1010 = vunpack.c.h.b16 %v211
    %v1011 = vunpack.c.l.b16 %v212
    %v1012 = vunpack.c.h.b16 %v212
    %v1013 = vunpack.c.l.b16 %v213
    %v1014 = vunpack.c.h.b16 %v213
    %v1015 = vunpack.c.l.b16 %v214
    %v1016 = vunpack.c.l.b16 %v215
    %v1017 = vunpack.c.h.b16 %v215
    %v1018 = vunpack.c.l.b16 %v216
    %v1019 = vunpack.c.h.b16 %v216
    %v1020 = vunpack.c.l.b16 %v217
    %v1021 = vunpack.c.h.b16 %v217
    %v1022 = vunpack.c.l.b16 %v218
    %v1023 = vunpack.c.h.b16 %v218
    %v1024 = vunpack.c.l.b16 %v219
    %v1025 = vunpack.c.h.b16 %v219
    %v1026 = vunpack.c.l.b16 %v220
    %v1027 = vunpack.c.h.b16 %v220
    %v1028 = vunpack.c.l.b16 %v221
    %v1029 = vunpack.c.h.b16 %v221
    %v1030 = vunpack.c.l.b16 %v222
    %v1031 = vunpack.c.h.b16 %v222
    %v1032 = vunpack.c.l.b16 %v223
    %v1033 = vunpack.c.h.b16 %v223
    %v1034 = vunpack.c.l.b16 %v224
    %v1035 = vunpack.c.h.b16 %v224
    %v1036 = vunpack.c.l.b16 %v225
    %v1037 = vunpack.c.h.b16 %v225
    %v1038 = vunpack.c.l.b16 %v226
    %v1039 = vunpack.c.h.b16 %v226
    %v1040 = vunpack.c.l.b16 %v227
    %v1041 = vunpack.c.l.b16 %v228
    %v1042 = vunpack.c.h.b16 %v228
    %v1043 = vunpack.c.l.b16 %v229
    %v1044 = vunpack.c.h.b16 %v229
    %v1045 = vunpack.c.l.b16 %v230
    %v1046 = vunpack.c.h.b16 %v230
    %v1047 = vunpack.c.l.b16 %v231
    %v1048 = vunpack.c.h.b16 %v231
    %v1049 = vunpack.c.l.b16 %v232
    %v1050 = vunpack.c.h.b16 %v232
    %v1051 = vunpack.c.l.b16 %v233
    %v1052 = vunpack.c.h.b16 %v233
    %v1053 = vunpack.c.l.b16 %v234
    %v1054 = vunpack.c.h.b16 %v234
    %v1055 = vunpack.c.l.b16 %v235
    %v1056 = vunpack.c.h.b16 %v235
    %v1057 = vunpack.c.l.b16 %v236
    %v1058 = vunpack.c.h.b16 %v236
    %v1059 = vunpack.c.l.b16 %v237
    %v1060 = vunpack.c.h.b16 %v237
    %v1061 = vunpack.c.l.b16 %v238
    %v1062 = vunpack.c.h.b16 %v238
    %v1063 = vunpack.c.l.b16 %v239
    %v1064 = vunpack.c.h.b16 %v239
    %v1065 = vunpack.c.l.b16 %v240
    %v1066 = vunpack.c.l.b16 %v241
    %v1067 = vunpack.c.h.b16 %v241
    %v1068 = vunpack.c.l.b16 %v242
    %v1069 = vunpack.c.h.b16 %v242
    %v1070 = vunpack.c.l.b16 %v243
    %v1071 = vunpack.c.h.b16 %v243
    %v1072 = vunpack.c.l.b16 %v244
    %v1073 = vunpack.c.h.b16 %v244
    %v1074 = vunpack.c.l.b16 %v245
    %v1075 = vunpack.c.h.b16 %v245
    %v1076 = vunpack.c.l.b16 %v246
    %v1077 = vunpack.c.h.b16 %v246
    %v1078 = vunpack.c.l.b16 %v247
    %v1079 = vunpack.c.h.b16 %v247
    %v1080 = vunpack.c.l.b16 %v248
    %v1081 = vunpack.c.h.b16 %v248
    %v1082 = vunpack.c.l.b16 %v249
    %v1083 = vunpack.c.h.b16 %v249
    %v1084 = vunpack.c.l.b16 %v250
    %v1085 = vunpack.c.h.b16 %v250
    %v1086 = vunpack.c.l.b16 %v251
    %v1087 = vunpack.c.h.b16 %v251
    %v1088 = vunpack.c.l.b16 %v252
    %v1089 = vunpack.c.h.b16 %v252
    %v1090 = vunpack.c.l.b16 %v253
    %v1091 = vunpack.c.l.b16 %v254
    %v1092 = vunpack.c.h.b16 %v254
    %v1093 = vunpack.c.l.b16 %v255
    %v1094 = vunpack.c.h.b16 %v255
    %v1095 = vunpack.c.l.b16 %v256
    %v1096 = vunpack.c.h.b16 %v256
    %v1097 = vunpack.c.l.b16 %v257
    %v1098 = vunpack.c.h.b16 %v257
    %v1099 = vunpack.c.l.b16 %v258
    %v1100 = vunpack.c.h.b16 %v258
    %v1101 = vunpack.c.l.b16 %v259
    %v1102 = vunpack.c.h.b16 %v259
    %v1103 = vunpack.c.l.b16 %v260
    %v1104 = vunpack.c.h.b16 %v260
    %v1105 = vunpack.c.l.b16 %v261
    %v1106 = vunpack.c.h.b16 %v261
    %v1107 = vunpack.c.l.b16 %v262
    %v1108 = vunpack.c.h.b16 %v262
    %v1109 = vunpack.c.l.b16 %v263
    %v1110 = vunpack.c.h.b16 %v263
    %v1111 = vunpack.c.l.b16 %v264
    %v1112 = vunpack.c.h.b16 %v264
    %v1113 = vunpack.c.l.b16 %v265
    %v1114 = vunpack.c.h.b16 %v265
    %v1115 = vunpack.c.l.b16 %v266
    %v1116 = vunpack.c.l.b16 %v267
    %v1117 = vunpack.c.h.b16 %v267
    %v1118 = vunpack.c.l.b16 %v268
    %v1119 = vunpack.c.h.b16 %v268
    %v1120 = vunpack.c.l.b16 %v269
    %v1121 = vunpack.c.h.b16 %v269
    %v1122 = vunpack.c.l.b16 %v270
    %v1123 = vunpack.c.h.b16 %v270
    %v1124 = vunpack.c.l.b16 %v271
    %v1125 = vunpack.c.h.b16 %v271
    %v1126 = vunpack.c.l.b16 %v272
    %v1127 = vunpack.c.h.b16 %v272
    %v1128 = vunpack.c.l.b16 %v273
    %v1129 = vunpack.c.h.b16 %v273
    %v1130 = vunpack.c.l.b16 %v274
    %v1131 = vunpack.c.h.b16 %v274
    %v1132 = vunpack.c.l.b16 %v275
    %v1133 = vunpack.c.h.b16 %v275
    %v1134 = vunpack.c.l.b16 %v276
    %v1135 = vunpack.c.h.b16 %v276
    %v1136 = vunpack.c.l.b16 %v277
    %v1137 = vunpack.c.h.b16 %v277
    %v1138 = vunpack.c.l.b16 %v278
    %v1139 = vunpack.c.h.b16 %v278
    %v1140 = vunpack.c.l.b16 %v279
    %v1141 = vpack.c.b16 %v691, %v666
    %v1142 = vpack.c.b16 %v692, %v667
    %v1143 = vpack.c.b16 %v693, %v668
    %v1144 = vpack.c.b16 %v694, %v669
    %v1145 = vpack.c.b16 %v695, %v670
    %v1146 = vpack.c.b16 %v696, %v671
    %v1147 = vpack.c.b16 %v697, %v672
    %v1148 = vpack.c.b16 %v698, %v673
    %v1149 = vpack.c.b16 %v699, %v674
    %v1150 = vpack.c.b16 %v700, %v675
    %v1151 = vpack.c.b16 %v701, %v676
    %v1152 = vpack.c.b16 %v702, %v677
    %v1153 = vpack.c.b16 %v703, %v678
    %v1154 = vpack.c.b16 %v704, %v679
    %v1155 = vpack.c.b16 %v705, %v680
    %v1156 = vpack.c.b16 %v706, %v681
    %v1157 = vpack.c.b16 %v707, %v682
    %v1158 = vpack.c.b16 %v708, %v683
    %v1159 = vpack.c.b16 %v709, %v684
    %v1160 = vpack.c.b16 %v710, %v685
    %v1161 = vpack.c.b16 %v711, %v686
    %v1162 = vpack.c.b16 %v712, %v687
    %v1163 = vpack.c.b16 %v713, %v688
    %v1164 = vpack.c.b16 %v714, %v689
    %v1165 = vpack.c.b16 %v715, %v690
    %v1166 = vpack.c.b16 %v741, %v716
    %v1167 = vpack.c.b16 %v742, %v717
    %v1168 = vpack.c.b16 %v743, %v718
    %v1169 = vpack.c.b16 %v744, %v719
    %v1170 = vpack.c.b16 %v745, %v720
    %v1171 = vpack.c.b16 %v746, %v721
    %v1172 = vpack.c.b16 %v747, %v722
    %v1173 = vpack.c.b16 %v748, %v723
    %v1174 = vpack.c.b16 %v749, %v724
    %v1175 = vpack.c.b16 %v750, %v725
    %v1176 = vpack.c.b16 %v751, %v726
    %v1177 = vpack.c.b16 %v752, %v727
    %v1178 = vpack.c.b16 %v753, %v728
    %v1179 = vpack.c.b16 %v754, %v729
    %v1180 = vpack.c.b16 %v755, %v730
    %v1181 = vpack.c.b16 %v756, %v731
    %v1182 = vpack.c.b16 %v757, %v732
    %v1183 = vpack.c.b16 %v758, %v733
    %v1184 = vpack.c.b16 %v759, %v734
    %v1185 = vpack.c.b16 %v760, %v735
    %v1186 = vpack.c.b16 %v761, %v736
    %v1187 = vpack.c.b16 %v762, %v737
    %v1188 = vpack.c.b16 %v763, %v738
    %v1189 = vpack.c.b16 %v764, %v739
    %v1190 = vpack.c.b16 %v765, %v740
    %v1191 = vpack.c.b16 %v791, %v766
    %v1192 = vpack.c.b16 %v792, %v767
    %v1193 = vpack.c.b16 %v793, %v768
    %v1194 = vpack.c.b16 %v794, %v769
    %v1195 = vpack.c.b16 %v795, %v770
    %v1196 = vpack.c.b16 %v796, %v771
    %v1197 = vpack.c.b16 %v797, %v772
    %v1198 = vpack.c.b16 %v798, %v773
    %v1199 = vpack.c.b16 %v799, %v774
    %v1200 = vpack.c.b16 %v800, %v775
    %v1201 = vpack.c.b16 %v801, %v776
    %v1202 = vpack.c.b16 %v802, %v777
    %v1203 = vpack.c.b16 %v803, %v778
    %v1204 = vpack.c.b16 %v804, %v779
    %v1205 = vpack.c.b16 %v805, %v780
    %v1206 = vpack.c.b16 %v806, %v781
    %v1207 = vpack.c.b16 %v807, %v782
    %v1208 = vpack.c.b16 %v808, %v783
    %v1209 = vpack.c.b16 %v809, %v784
    %v1210 = vpack.c.b16 %v810, %v785
    %v1211 = vpack.c.b16 %v811, %v786
    %v1212 = vpack.c.b16 %v812, %v787
    %v1213 = vpack.c.b16 %v813, %v788
    %v1214 = vpack.c.b16 %v814, %v789
    %v1215 = vpack.c.b16 %v815, %v790
    %v1216 = vpack.c.b16 %v841, %v816
    %v1217 = vpack.c.b16 %v842, %v817
    %v1218 = vpack.c.b16 %v843, %v818
    %v1219 = vpack.c.b16 %v844, %v819
    %v1220 = vpack.c.b16 %v845, %v820
    %v1221 = vpack.c.b16 %v846, %v821
    %v1222 = vpack.c.b16 %v847, %v822
    %v1223 = vpack.c.b16 %v848, %v823
    %v1224 = vpack.c.b16 %v849, %v824
    %v1225 = vpack.c.b16 %v850, %v825
    %v1226 = vpack.c.b16 %v851, %v826
    %v1227 = vpack.c.b16 %v852, %v827
    %v1228 = vpack.c.b16 %v853, %v828
    %v1229 = vpack.c.b16 %v854, %v829
    %v1230 = vpack.c.b16 %v855, %v830
    %v1231 = vpack.c.b16 %v856, %v831
    %v1232 = vpack.c.b16 %v857, %v832
    %v1233 = vpack.c.b16 %v858, %v833
    %v1234 = vpack.c.b16 %v859, %v834
    %v1235 = vpack.c.b16 %v860, %v835
    %v1236 = vpack.c.b16 %v861, %v836
    %v1237 = vpack.c.b16 %v862, %v837
    %v1238 = vpack.c.b16 %v863, %v838
    %v1239 = vpack.c.b16 %v864, %v839
    %v1240 = vpack.c.b16 %v865, %v840
    %v1241 = vpack.c.b16 %v891, %v866
    %v1242 = vpack.c.b16 %v892, %v867
    %v1243 = vpack.c.b16 %v893, %v868
    %v1244 = vpack.c.b16 %v894, %v869
    %v1245 = vpack.c.b16 %v895, %v870
    %v1246 = vpack.c.b16 %v896, %v871
    %v1247 = vpack.c.b16 %v897, %v872
    %v1248 = vpack.c.b16 %v898, %v873
    %v1249 = vpack.c.b16 %v899, %v874
    %v1250 = vpack.c.b16 %v900, %v875
    %v1251 = vpack.c.b16 %v901, %v876
    %v1252 = vpack.c.b16 %v902, %v877
    %v1253 = vpack.c.b16 %v903, %v878
    %v1254 = vpack.c.b16 %v904, %v879
    %v1255 = vpack.c.b16 %v905, %v880
    %v1256 = vpack.c.b16 %v906, %v881
    %v1257 = vpack.c.b16 %v907, %v882
    %v1258 = vpack.c.b16 %v908, %v883
    %v1259 = vpack.c.b16 %v909, %v884
    %v1260 = vpack.c.b16 %v910, %v885
    %v1261 = vpack.c.b16 %v911, %v886
    %v1262 = vpack.c.b16 %v912, %v887
    %v1263 = vpack.c.b16 %v913, %v888
    %v1264 = vpack.c.b16 %v914, %v889
    %v1265 = vpack.c.b16 %v915, %v890
    %v1266 = vpack.c.b16 %v941, %v916
    %v1267 = vpack.c.b16 %v942, %v917
    %v1268 = vpack.c.b16 %v943, %v918
    %v1269 = vpack.c.b16 %v944, %v919
    %v1270 = vpack.c.b16 %v945, %v920
    %v1271 = vpack.c.b16 %v946, %v921
    %v1272 = vpack.c.b16 %v947, %v922
    %v1273 = vpack.c.b16 %v948, %v923
    %v1274 = vpack.c.b16 %v949, %v924
    %v1275 = vpack.c.b16 %v950, %v925
    %v1276 = vpack.c.b16 %v951, %v926
    %v1277 = vpack.c.b16 %v952, %v927
    %v1278 = vpack.c.b16 %v953, %v928
    %v1279 = vpack.c.b16 %v954, %v929
    %v1280 = vpack.c.b16 %v955, %v930
    %v1281 = vpack.c.b16 %v956, %v931
    %v1282 = vpack.c.b16 %v957, %v932
    %v1283 = vpack.c.b16 %v958, %v933
    %v1284 = vpack.c.b16 %v959, %v934
    %v1285 = vpack.c.b16 %v960, %v935
    %v1286 = vpack.c.b16 %v961, %v936
    %v1287 = vpack.c.b16 %v962, %v937
    %v1288 = vpack.c.b16 %v963, %v938
    %v1289 = vpack.c.b16 %v964, %v939
    %v1290 = vpack.c.b16 %v965, %v940
    %v1291 = vpack.c.b16 %v991, %v966
    %v1292 = vpack.c.b16 %v992, %v967
    %v1293 = vpack.c.b16 %v993, %v968
    %v1294 = vpack.c.b16 %v994, %v969
    %v1295 = vpack.c.b16 %v995, %v970
    %v1296 = vpack.c.b16 %v996, %v971
    %v1297 = vpack.c.b16 %v997, %v972
    %v1298 = vpack.c.b16 %v998, %v973
    %v1299 = vpack.c.b16 %v999, %v974
    %v1300 = vpack.c.b16 %v1000, %v975
    %v1301 = vpack.c.b16 %v1001, %v976
    %v1302 = vpack.c.b16 %v1002, %v977
    %v1303 = vpack.c.b16 %v1003, %v978
    %v1304 = vpack.c.b16 %v1004, %v979
    %v1305 = vpack.c.b16 %v1005, %v980
    %v1306 = vpack.c.b16 %v1006, %v981
    %v1307 = vpack.c.b16 %v1007, %v982
    %v1308 = vpack.c.b16 %v1008, %v983
    %v1309 = vpack.c.b16 %v1009, %v984
    %v1310 = vpack.c.b16 %v1010, %v985
    %v1311 = vpack.c.b16 %v1011, %v986
    %v1312 = vpack.c.b16 %v1012, %v987
    %v1313 = vpack.c.b16 %v1013, %v988
    %v1314 = vpack.c.b16 %v1014, %v989
    %v1315 = vpack.c.b16 %v1015, %v990
    %v1316 = vpack.c.b16 %v1041, %v1016
    %v1317 = vpack.c.b16 %v1042, %v1017
    %v1318 = vpack.c.b16 %v1043, %v1018
    %v1319 = vpack.c.b16 %v1044, %v1019
    %v1320 = vpack.c.b16 %v1045, %v1020
    %v1321 = vpack.c.b16 %v1046, %v1021
    %v1322 = vpack.c.b16 %v1047, %v1022
    %v1323 = vpack.c.b16 %v1048, %v1023
    %v1324 = vpack.c.b16 %v1049, %v1024
    %v1325 = vpack.c.b16 %v1050, %v1025
    %v1326 = vpack.c.b16 %v1051, %v1026
    %v1327 = vpack.c.b16 %v1052, %v1027
    %v1328 = vpack.c.b16 %v1053, %v1028
    %v1329 = vpack.c.b16 %v1054, %v1029
    %v1330 = vpack.c.b16 %v1055, %v1030
    %v1331 = vpack.c.b16 %v1056, %v1031
    %v1332 = vpack.c.b16 %v1057, %v1032
    %v1333 = vpack.c.b16 %v1058, %v1033
    %v1334 = vpack.c.b16 %v1059, %v1034
    %v1335 = vpack.c.b16 %v1060, %v1035
    %v1336 = vpack.c.b16 %v1061, %v1036
    %v1337 = vpack.c.b16 %v1062, %v1037
    %v1338 = vpack.c.b16 %v1063, %v1038
    %v1339 = vpack.c.b16 %v1064, %v1039
    %v1340 = vpack.c.b16 %v1065, %v1040
    %v1341 = vpack.c.b16 %v1091, %v1066
    %v1342 = vpack.c.b16 %v1092, %v1067
    %v1343 = vpack.c.b16 %v1093, %v1068
    %v1344 = vpack.c.b16 %v1094, %v1069
    %v1345 = vpack.c.b16 %v1095, %v1070
    %v1346 = vpack.c.b16 %v1096, %v1071
    %v1347 = vpack.c.b16 %v1097, %v1072
    %v1348 = vpack.c.b16 %v1098, %v1073
    %v1349 = vpack.c.b16 %v1099, %v1074
    %v1350 = vpack.c.b16 %v1100, %v1075
    %v1351 = vpack.c.b16 %v1101, %v1076
    %v1352 = vpack.c.b16 %v1102, %v1077
    %v1353 = vpack.c.b16 %v1103, %v1078
    %v1354 = vpack.c.b16 %v1104, %v1079
    %v1355 = vpack.c.b16 %v1105, %v1080
    %v1356 = vpack.c.b16 %v1106, %v1081
    %v1357 = vpack.c.b16 %v1107, %v1082
    %v1358 = vpack.c.b16 %v1108, %v1083
    %v1359 = vpack.c.b16 %v1109, %v1084
    %v1360 = vpack.c.b16 %v1110, %v1085
    %v1361 = vpack.c.b16 %v1111, %v1086
    %v1362 = vpack.c.b16 %v1112, %v1087
    %v1363 = vpack.c.b16 %v1113, %v1088
    %v1364 = vpack.c.b16 %v1114, %v1089
    %v1365 = vpack.c.b16 %v1115, %v1090
    %v1366 = vpack.c.b16 %v1116, %v1116
    %v1367 = vpack.c.b16 %v1117, %v1117
    %v1368 = vpack.c.b16 %v1118, %v1118
    %v1369 = vpack.c.b16 %v1119, %v1119
    %v1370 = vpack.c.b16 %v1120, %v1120
    %v1371 = vpack.c.b16 %v1121, %v1121
    %v1372 = vpack.c.b16 %v1122, %v1122
    %v1373 = vpack.c.b16 %v1123, %v1123
    %v1374 = vpack.c.b16 %v1124, %v1124
    %v1375 = vpack.c.b16 %v1125, %v1125
    %v1376 = vpack.c.b16 %v1126, %v1126
    %v1377 = vpack.c.b16 %v1127, %v1127
    %v1378 = vpack.c.b16 %v1128, %v1128
    %v1379 = vpack.c.b16 %v1129, %v1129
    %v1380 = vpack.c.b16 %v1130, %v1130
    %v1381 = vpack.c.b16 %v1131, %v1131
    %v1382 = vpack.c.b16 %v1132, %v1132
    %v1383 = vpack.c.b16 %v1133, %v1133
    %v1384 = vpack.c.b16 %v1134, %v1134
    %v1385 = vpack.c.b16 %v1135, %v1135
    %v1386 = vpack.c.b16 %v1136, %v1136
    %v1387 = vpack.c.b16 %v1137, %v1137
    %v1388 = vpack.c.b16 %v1138, %v1138
    %v1389 = vpack.c.b16 %v1139, %v1139
    %v1390 = vpack.c.b16 %v1140, %v1140
    %vm1616 = vcmask 179200
    %v1618 = vsel %vm1616, %v417, 0
    %vm1620 = vcmask 1042432
    %v1622 = vsel %vm1620, %v1366, 0
    %v1625 = vsel %vm1620, %v1367, 0
    %v1628 = vsel %vm1620, %v1368, 0
    %v1631 = vsel %vm1620, %v1369, 0
    %v1634 = vsel %vm1620, %v1370, 0
    %v1637 = vsel %vm1620, %v1371, 0
    %v1640 = vsel %vm1620, %v1372, 0
    %v1643 = vsel %vm1620, %v1373, 0
    %v1646 = vsel %vm1620, %v1374, 0
    %v1649 = vsel %vm1620, %v1375, 0
    %v1652 = vsel %vm1620, %v1376, 0
    %v1655 = vsel %vm1620, %v1377, 0
    %v1658 = vsel %vm1620, %v1378, 0
    %v1661 = vsel %vm1620, %v1379, 0
    %v1664 = vsel %vm1620, %v1380, 0
    %v1667 = vsel %vm1620, %v1381, 0
    %v1670 = vsel %vm1620, %v1382, 0
    %v1673 = vsel %vm1620, %v1383, 0
    %v1676 = vsel %vm1620, %v1384, 0
    %v1679 = vsel %vm1620, %v1385, 0
    %v1682 = vsel %vm1620, %v1386, 0
    %v1685 = vsel %vm1620, %v1387, 0
    %v1688 = vsel %vm1620, %v1388, 0
    %v1691 = vsel %vm1620, %v1389, 0
    %v1694 = vsel %vm1620, %v1390, 0
    %1696 = vmatprep.subr.bf16.mxu0 %v1142
    %1697 = vmatpush1.bf16.msra.mxu0 %v1141
    %1698 = vmatprep.subr.bf16.mxu0 %v1167
    %1699 = vmatpush1.bf16.msra.mxu0 %v1166
    %1700 = vmatprep.subr.bf16.mxu0 %v1192
    %1701 = vmatpush1.bf16.msra.mxu0 %v1191
    %1702 = vmatprep.subr.bf16.mxu0 %v1217
    %1703 = vmatpush1.bf16.msra.mxu0 %v1216
    %1704 = vmatprep.subr.bf16.mxu0 %v1242
    %1705 = vmatpush1.bf16.msra.mxu0 %v1241
    %1706 = vmatprep.subr.bf16.mxu0 %v1267
    %1707 = vmatpush1.bf16.msra.mxu0 %v1266
    %1708 = vmatprep.subr.bf16.mxu0 %v1292
    %1709 = vmatpush1.bf16.msra.mxu0 %v1291
    %1710 = vmatprep.subr.bf16.mxu0 %v1317
    %1711 = vmatpush1.bf16.msra.mxu0 %v1316
    %1712 = vmatprep.subr.bf16.mxu0 %v1342
    %1713 = vmatpush1.bf16.msra.mxu0 %v1341
    %1714 = vmatprep.subr.bf16.mxu0 %v1625
    %1715 = vmatpush1.bf16.msra.mxu0 %v1622
    %1716 = vmatprep.subr.bf16.mxu0 0
    %1717 = vmatpush1.bf16.msra.mxu0 0
    %1718 = vmatprep.subr.bf16.mxu0 0
    %1719 = vmatpush1.bf16.msra.mxu0 0
    %1720 = vmatprep.subr.bf16.mxu0 0
    %1721 = vmatpush1.bf16.msra.mxu0 0
    %1722 = vmatprep.subr.bf16.mxu0 0
    %1723 = vmatpush1.bf16.msra.mxu0 0
    %1724 = vmatprep.subr.bf16.mxu0 0
    %1725 = vmatpush1.bf16.msra.mxu0 0
    %1726 = vmatprep.subr.bf16.mxu0 0
    %1727 = vmatpush1.bf16.msra.mxu0 0
    %1728 = vmatprep.mubr.bf16.mxu0 %v1618
    %1729 = vmatmul.mubr.bf16.gmra.mrb[0].mxu0 %v416
    %v1730 = vpop.f32.mrb[0].mxu0
    %v1731 = vadd.f32 %v291, %v1730
    %v1732 = vpop.f32.mrb[0].mxu0
    %v1733 = vadd.f32 %v295, %v1732
    %v1734 = vpop.f32.mrb[0].mxu0
    %v1735 = vpop.f32.mrb[0].mxu0
    %1736 = vdwg.mxu0
    %1737 = vmatprep.subr.bf16.mxu0 %v1144
    %1738 = vmatpush1.bf16.msra.mxu0 %v1143
    %1739 = vmatprep.subr.bf16.mxu0 %v1169
    %1740 = vmatpush1.bf16.msra.mxu0 %v1168
    %1741 = vmatprep.subr.bf16.mxu0 %v1194
    %1742 = vmatpush1.bf16.msra.mxu0 %v1193
    %1743 = vmatprep.subr.bf16.mxu0 %v1219
    %1744 = vmatpush1.bf16.msra.mxu0 %v1218
    %1745 = vmatprep.subr.bf16.mxu0 %v1244
    %1746 = vmatpush1.bf16.msra.mxu0 %v1243
    %1747 = vmatprep.subr.bf16.mxu0 %v1269
    %1748 = vmatpush1.bf16.msra.mxu0 %v1268
    %1749 = vmatprep.subr.bf16.mxu0 %v1294
    %1750 = vmatpush1.bf16.msra.mxu0 %v1293
    %1751 = vmatprep.subr.bf16.mxu0 %v1319
    %1752 = vmatpush1.bf16.msra.mxu0 %v1318
    %1753 = vmatprep.subr.bf16.mxu0 %v1344
    %1754 = vmatpush1.bf16.msra.mxu0 %v1343
    %1755 = vmatprep.subr.bf16.mxu0 %v1631
    %1756 = vmatpush1.bf16.msra.mxu0 %v1628
    %1757 = vmatprep.subr.bf16.mxu0 0
    %1758 = vmatpush1.bf16.msra.mxu0 0
    %1759 = vmatprep.subr.bf16.mxu0 0
    %1760 = vmatpush1.bf16.msra.mxu0 0
    %1761 = vmatprep.subr.bf16.mxu0 0
    %1762 = vmatpush1.bf16.msra.mxu0 0
    %1763 = vmatprep.subr.bf16.mxu0 0
    %1764 = vmatpush1.bf16.msra.mxu0 0
    %1765 = vmatprep.subr.bf16.mxu0 0
    %1766 = vmatpush1.bf16.msra.mxu0 0
    %1767 = vmatprep.subr.bf16.mxu0 0
    %1768 = vmatpush1.bf16.msra.mxu0 0
    %1769 = vmatprep.mubr.bf16.mxu0 %v1618
    %1770 = vmatmul.mubr.bf16.gmra.mrb[0].mxu0 %v416
    %v1771 = vpop.f32.mrb[0].mxu0
    %v1772 = vadd.f32 %v299, %v1771
    %v1773 = vpop.f32.mrb[0].mxu0
    %v1774 = vadd.f32 %v303, %v1773
    %v1775 = vpop.f32.mrb[0].mxu0
    %v1776 = vpop.f32.mrb[0].mxu0
    %1777 = vdwg.mxu0
    %1778 = vmatprep.subr.bf16.mxu0 %v1146
    %1779 = vmatpush1.bf16.msra.mxu0 %v1145
    %1780 = vmatprep.subr.bf16.mxu0 %v1171
    %1781 = vmatpush1.bf16.msra.mxu0 %v1170
    %1782 = vmatprep.subr.bf16.mxu0 %v1196
    %1783 = vmatpush1.bf16.msra.mxu0 %v1195
    %1784 = vmatprep.subr.bf16.mxu0 %v1221
    %1785 = vmatpush1.bf16.msra.mxu0 %v1220
    %1786 = vmatprep.subr.bf16.mxu0 %v1246
    %1787 = vmatpush1.bf16.msra.mxu0 %v1245
    %1788 = vmatprep.subr.bf16.mxu0 %v1271
    %1789 = vmatpush1.bf16.msra.mxu0 %v1270
    %1790 = vmatprep.subr.bf16.mxu0 %v1296
    %1791 = vmatpush1.bf16.msra.mxu0 %v1295
    %1792 = vmatprep.subr.bf16.mxu0 %v1321
    %1793 = vmatpush1.bf16.msra.mxu0 %v1320
    %1794 = vmatprep.subr.bf16.mxu0 %v1346
    %1795 = vmatpush1.bf16.msra.mxu0 %v1345
    %1796 = vmatprep.subr.bf16.mxu0 %v1637
    %1797 = vmatpush1.bf16.msra.mxu0 %v1634
    %1798 = vmatprep.subr.bf16.mxu0 0
    %1799 = vmatpush1.bf16.msra.mxu0 0
    %1800 = vmatprep.subr.bf16.mxu0 0
    %1801 = vmatpush1.bf16.msra.mxu0 0
    %1802 = vmatprep.subr.bf16.mxu0 0
    %1803 = vmatpush1.bf16.msra.mxu0 0
    %1804 = vmatprep.subr.bf16.mxu0 0
    %1805 = vmatpush1.bf16.msra.mxu0 0
    %1806 = vmatprep.subr.bf16.mxu0 0
    %1807 = vmatpush1.bf16.msra.mxu0 0
    %1808 = vmatprep.subr.bf16.mxu0 0
    %1809 = vmatpush1.bf16.msra.mxu0 0
    %1810 = vmatprep.mubr.bf16.mxu0 %v1618
    %1811 = vmatmul.mubr.bf16.gmra.mrb[0].mxu0 %v416
    %v1812 = vpop.f32.mrb[0].mxu0
    %v1813 = vadd.f32 %v307, %v1812
    %v1814 = vpop.f32.mrb[0].mxu0
    %v1815 = vadd.f32 %v311, %v1814
    %v1816 = vpop.f32.mrb[0].mxu0
    %v1817 = vpop.f32.mrb[0].mxu0
    %1818 = vdwg.mxu0
    %1819 = vmatprep.subr.bf16.mxu0 %v1148
    %1820 = vmatpush1.bf16.msra.mxu0 %v1147
    %1821 = vmatprep.subr.bf16.mxu0 %v1173
    %1822 = vmatpush1.bf16.msra.mxu0 %v1172
    %1823 = vmatprep.subr.bf16.mxu0 %v1198
    %1824 = vmatpush1.bf16.msra.mxu0 %v1197
    %1825 = vmatprep.subr.bf16.mxu0 %v1223
    %1826 = vmatpush1.bf16.msra.mxu0 %v1222
    %1827 = vmatprep.subr.bf16.mxu0 %v1248
    %1828 = vmatpush1.bf16.msra.mxu0 %v1247
    %1829 = vmatprep.subr.bf16.mxu0 %v1273
    %1830 = vmatpush1.bf16.msra.mxu0 %v1272
    %1831 = vmatprep.subr.bf16.mxu0 %v1298
    %1832 = vmatpush1.bf16.msra.mxu0 %v1297
    %1833 = vmatprep.subr.bf16.mxu0 %v1323
    %1834 = vmatpush1.bf16.msra.mxu0 %v1322
    %1835 = vmatprep.subr.bf16.mxu0 %v1348
    %1836 = vmatpush1.bf16.msra.mxu0 %v1347
    %1837 = vmatprep.subr.bf16.mxu0 %v1643
    %1838 = vmatpush1.bf16.msra.mxu0 %v1640
    %1839 = vmatprep.subr.bf16.mxu0 0
    %1840 = vmatpush1.bf16.msra.mxu0 0
    %1841 = vmatprep.subr.bf16.mxu0 0
    %1842 = vmatpush1.bf16.msra.mxu0 0
    %1843 = vmatprep.subr.bf16.mxu0 0
    %1844 = vmatpush1.bf16.msra.mxu0 0
    %1845 = vmatprep.subr.bf16.mxu0 0
    %1846 = vmatpush1.bf16.msra.mxu0 0
    %1847 = vmatprep.subr.bf16.mxu0 0
    %1848 = vmatpush1.bf16.msra.mxu0 0
    %1849 = vmatprep.subr.bf16.mxu0 0
    %1850 = vmatpush1.bf16.msra.mxu0 0
    %1851 = vmatprep.mubr.bf16.mxu0 %v1618
    %1852 = vmatmul.mubr.bf16.gmra.mrb[0].mxu0 %v416
    %v1853 = vpop.f32.mrb[0].mxu0
    %v1854 = vadd.f32 %v315, %v1853
    %v1855 = vpop.f32.mrb[0].mxu0
    %v1856 = vadd.f32 %v319, %v1855
    %v1857 = vpop.f32.mrb[0].mxu0
    %v1858 = vpop.f32.mrb[0].mxu0
    %1859 = vdwg.mxu0
    %1860 = vmatprep.subr.bf16.mxu0 %v1150
    %1861 = vmatpush1.bf16.msra.mxu0 %v1149
    %1862 = vmatprep.subr.bf16.mxu0 %v1175
    %1863 = vmatpush1.bf16.msra.mxu0 %v1174
    %1864 = vmatprep.subr.bf16.mxu0 %v1200
    %1865 = vmatpush1.bf16.msra.mxu0 %v1199
    %1866 = vmatprep.subr.bf16.mxu0 %v1225
    %1867 = vmatpush1.bf16.msra.mxu0 %v1224
    %1868 = vmatprep.subr.bf16.mxu0 %v1250
    %1869 = vmatpush1.bf16.msra.mxu0 %v1249
    %1870 = vmatprep.subr.bf16.mxu0 %v1275
    %1871 = vmatpush1.bf16.msra.mxu0 %v1274
    %1872 = vmatprep.subr.bf16.mxu0 %v1300
    %1873 = vmatpush1.bf16.msra.mxu0 %v1299
    %1874 = vmatprep.subr.bf16.mxu0 %v1325
    %1875 = vmatpush1.bf16.msra.mxu0 %v1324
    %1876 = vmatprep.subr.bf16.mxu0 %v1350
    %1877 = vmatpush1.bf16.msra.mxu0 %v1349
    %1878 = vmatprep.subr.bf16.mxu0 %v1649
    %1879 = vmatpush1.bf16.msra.mxu0 %v1646
    %1880 = vmatprep.subr.bf16.mxu0 0
    %1881 = vmatpush1.bf16.msra.mxu0 0
    %1882 = vmatprep.subr.bf16.mxu0 0
    %1883 = vmatpush1.bf16.msra.mxu0 0
    %1884 = vmatprep.subr.bf16.mxu0 0
    %1885 = vmatpush1.bf16.msra.mxu0 0
    %1886 = vmatprep.subr.bf16.mxu0 0
    %1887 = vmatpush1.bf16.msra.mxu0 0
    %1888 = vmatprep.subr.bf16.mxu0 0
    %1889 = vmatpush1.bf16.msra.mxu0 0
    %1890 = vmatprep.subr.bf16.mxu0 0
    %1891 = vmatpush1.bf16.msra.mxu0 0
    %1892 = vmatprep.mubr.bf16.mxu0 %v1618
    %1893 = vmatmul.mubr.bf16.gmra.mrb[0].mxu0 %v416
    %v1894 = vpop.f32.mrb[0].mxu0
    %v1895 = vadd.f32 %v323, %v1894
    %v1896 = vpop.f32.mrb[0].mxu0
    %v1897 = vadd.f32 %v327, %v1896
    %v1898 = vpop.f32.mrb[0].mxu0
    %v1899 = vpop.f32.mrb[0].mxu0
    %1900 = vdwg.mxu0
    %1901 = vmatprep.subr.bf16.mxu0 %v1152
    %1902 = vmatpush1.bf16.msra.mxu0 %v1151
    %1903 = vmatprep.subr.bf16.mxu0 %v1177
    %1904 = vmatpush1.bf16.msra.mxu0 %v1176
    %1905 = vmatprep.subr.bf16.mxu0 %v1202
    %1906 = vmatpush1.bf16.msra.mxu0 %v1201
    %1907 = vmatprep.subr.bf16.mxu0 %v1227
    %1908 = vmatpush1.bf16.msra.mxu0 %v1226
    %1909 = vmatprep.subr.bf16.mxu0 %v1252
    %1910 = vmatpush1.bf16.msra.mxu0 %v1251
    %1911 = vmatprep.subr.bf16.mxu0 %v1277
    %1912 = vmatpush1.bf16.msra.mxu0 %v1276
    %1913 = vmatprep.subr.bf16.mxu0 %v1302
    %1914 = vmatpush1.bf16.msra.mxu0 %v1301
    %1915 = vmatprep.subr.bf16.mxu0 %v1327
    %1916 = vmatpush1.bf16.msra.mxu0 %v1326
    %1917 = vmatprep.subr.bf16.mxu0 %v1352
    %1918 = vmatpush1.bf16.msra.mxu0 %v1351
    %1919 = vmatprep.subr.bf16.mxu0 %v1655
    %1920 = vmatpush1.bf16.msra.mxu0 %v1652
    %1921 = vmatprep.subr.bf16.mxu0 0
    %1922 = vmatpush1.bf16.msra.mxu0 0
    %1923 = vmatprep.subr.bf16.mxu0 0
    %1924 = vmatpush1.bf16.msra.mxu0 0
    %1925 = vmatprep.subr.bf16.mxu0 0
    %1926 = vmatpush1.bf16.msra.mxu0 0
    %1927 = vmatprep.subr.bf16.mxu0 0
    %1928 = vmatpush1.bf16.msra.mxu0 0
    %1929 = vmatprep.subr.bf16.mxu0 0
    %1930 = vmatpush1.bf16.msra.mxu0 0
    %1931 = vmatprep.subr.bf16.mxu0 0
    %1932 = vmatpush1.bf16.msra.mxu0 0
    %1933 = vmatprep.mubr.bf16.mxu0 %v1618
    %1934 = vmatmul.mubr.bf16.gmra.mrb[0].mxu0 %v416
    %v1935 = vpop.f32.mrb[0].mxu0
    %v1936 = vadd.f32 %v331, %v1935
    %v1937 = vpop.f32.mrb[0].mxu0
    %v1938 = vadd.f32 %v335, %v1937
    %v1939 = vpop.f32.mrb[0].mxu0
    %v1940 = vpop.f32.mrb[0].mxu0
    %1941 = vdwg.mxu0
    %1942 = vmatprep.subr.bf16.mxu0 %v1154
    %1943 = vmatpush1.bf16.msra.mxu0 %v1153
    %1944 = vmatprep.subr.bf16.mxu0 %v1179
    %1945 = vmatpush1.bf16.msra.mxu0 %v1178
    %1946 = vmatprep.subr.bf16.mxu0 %v1204
    %1947 = vmatpush1.bf16.msra.mxu0 %v1203
    %1948 = vmatprep.subr.bf16.mxu0 %v1229
    %1949 = vmatpush1.bf16.msra.mxu0 %v1228
    %1950 = vmatprep.subr.bf16.mxu0 %v1254
    %1951 = vmatpush1.bf16.msra.mxu0 %v1253
    %1952 = vmatprep.subr.bf16.mxu0 %v1279
    %1953 = vmatpush1.bf16.msra.mxu0 %v1278
    %1954 = vmatprep.subr.bf16.mxu0 %v1304
    %1955 = vmatpush1.bf16.msra.mxu0 %v1303
    %1956 = vmatprep.subr.bf16.mxu0 %v1329
    %1957 = vmatpush1.bf16.msra.mxu0 %v1328
    %1958 = vmatprep.subr.bf16.mxu0 %v1354
    %1959 = vmatpush1.bf16.msra.mxu0 %v1353
    %1960 = vmatprep.subr.bf16.mxu0 %v1661
    %1961 = vmatpush1.bf16.msra.mxu0 %v1658
    %1962 = vmatprep.subr.bf16.mxu0 0
    %1963 = vmatpush1.bf16.msra.mxu0 0
    %1964 = vmatprep.subr.bf16.mxu0 0
    %1965 = vmatpush1.bf16.msra.mxu0 0
    %1966 = vmatprep.subr.bf16.mxu0 0
    %1967 = vmatpush1.bf16.msra.mxu0 0
    %1968 = vmatprep.subr.bf16.mxu0 0
    %1969 = vmatpush1.bf16.msra.mxu0 0
    %1970 = vmatprep.subr.bf16.mxu0 0
    %1971 = vmatpush1.bf16.msra.mxu0 0
    %1972 = vmatprep.subr.bf16.mxu0 0
    %1973 = vmatpush1.bf16.msra.mxu0 0
    %1974 = vmatprep.mubr.bf16.mxu0 %v1618
    %1975 = vmatmul.mubr.bf16.gmra.mrb[0].mxu0 %v416
    %v1976 = vpop.f32.mrb[0].mxu0
    %v1977 = vadd.f32 %v339, %v1976
    %v1978 = vpop.f32.mrb[0].mxu0
    %v1979 = vadd.f32 %v343, %v1978
    %v1980 = vpop.f32.mrb[0].mxu0
    %v1981 = vpop.f32.mrb[0].mxu0
    %1982 = vdwg.mxu0
    %1983 = vmatprep.subr.bf16.mxu0 %v1156
    %1984 = vmatpush1.bf16.msra.mxu0 %v1155
    %1985 = vmatprep.subr.bf16.mxu0 %v1181
    %1986 = vmatpush1.bf16.msra.mxu0 %v1180
    %1987 = vmatprep.subr.bf16.mxu0 %v1206
    %1988 = vmatpush1.bf16.msra.mxu0 %v1205
    %1989 = vmatprep.subr.bf16.mxu0 %v1231
    %1990 = vmatpush1.bf16.msra.mxu0 %v1230
    %1991 = vmatprep.subr.bf16.mxu0 %v1256
    %1992 = vmatpush1.bf16.msra.mxu0 %v1255
    %1993 = vmatprep.subr.bf16.mxu0 %v1281
    %1994 = vmatpush1.bf16.msra.mxu0 %v1280
    %1995 = vmatprep.subr.bf16.mxu0 %v1306
    %1996 = vmatpush1.bf16.msra.mxu0 %v1305
    %1997 = vmatprep.subr.bf16.mxu0 %v1331
    %1998 = vmatpush1.bf16.msra.mxu0 %v1330
    %1999 = vmatprep.subr.bf16.mxu0 %v1356
    %2000 = vmatpush1.bf16.msra.mxu0 %v1355
    %2001 = vmatprep.subr.bf16.mxu0 %v1667
    %2002 = vmatpush1.bf16.msra.mxu0 %v1664
    %2003 = vmatprep.subr.bf16.mxu0 0
    %2004 = vmatpush1.bf16.msra.mxu0 0
    %2005 = vmatprep.subr.bf16.mxu0 0
    %2006 = vmatpush1.bf16.msra.mxu0 0
    %2007 = vmatprep.subr.bf16.mxu0 0
    %2008 = vmatpush1.bf16.msra.mxu0 0
    %2009 = vmatprep.subr.bf16.mxu0 0
    %2010 = vmatpush1.bf16.msra.mxu0 0
    %2011 = vmatprep.subr.bf16.mxu0 0
    %2012 = vmatpush1.bf16.msra.mxu0 0
    %2013 = vmatprep.subr.bf16.mxu0 0
    %2014 = vmatpush1.bf16.msra.mxu0 0
    %2015 = vmatprep.mubr.bf16.mxu0 %v1618
    %2016 = vmatmul.mubr.bf16.gmra.mrb[0].mxu0 %v416
    %v2017 = vpop.f32.mrb[0].mxu0
    %v2018 = vadd.f32 %v347, %v2017
    %v2019 = vpop.f32.mrb[0].mxu0
    %v2020 = vadd.f32 %v351, %v2019
    %v2021 = vpop.f32.mrb[0].mxu0
    %v2022 = vpop.f32.mrb[0].mxu0
    %2023 = vdwg.mxu0
    %2024 = vmatprep.subr.bf16.mxu0 %v1158
    %2025 = vmatpush1.bf16.msra.mxu0 %v1157
    %2026 = vmatprep.subr.bf16.mxu0 %v1183
    %2027 = vmatpush1.bf16.msra.mxu0 %v1182
    %2028 = vmatprep.subr.bf16.mxu0 %v1208
    %2029 = vmatpush1.bf16.msra.mxu0 %v1207
    %2030 = vmatprep.subr.bf16.mxu0 %v1233
    %2031 = vmatpush1.bf16.msra.mxu0 %v1232
    %2032 = vmatprep.subr.bf16.mxu0 %v1258
    %2033 = vmatpush1.bf16.msra.mxu0 %v1257
    %2034 = vmatprep.subr.bf16.mxu0 %v1283
    %2035 = vmatpush1.bf16.msra.mxu0 %v1282
    %2036 = vmatprep.subr.bf16.mxu0 %v1308
    %2037 = vmatpush1.bf16.msra.mxu0 %v1307
    %2038 = vmatprep.subr.bf16.mxu0 %v1333
    %2039 = vmatpush1.bf16.msra.mxu0 %v1332
    %2040 = vmatprep.subr.bf16.mxu0 %v1358
    %2041 = vmatpush1.bf16.msra.mxu0 %v1357
    %2042 = vmatprep.subr.bf16.mxu0 %v1673
    %2043 = vmatpush1.bf16.msra.mxu0 %v1670
    %2044 = vmatprep.subr.bf16.mxu0 0
    %2045 = vmatpush1.bf16.msra.mxu0 0
    %2046 = vmatprep.subr.bf16.mxu0 0
    %2047 = vmatpush1.bf16.msra.mxu0 0
    %2048 = vmatprep.subr.bf16.mxu0 0
    %2049 = vmatpush1.bf16.msra.mxu0 0
    %2050 = vmatprep.subr.bf16.mxu0 0
    %2051 = vmatpush1.bf16.msra.mxu0 0
    %2052 = vmatprep.subr.bf16.mxu0 0
    %2053 = vmatpush1.bf16.msra.mxu0 0
    %2054 = vmatprep.subr.bf16.mxu0 0
    %2055 = vmatpush1.bf16.msra.mxu0 0
    %2056 = vmatprep.mubr.bf16.mxu0 %v1618
    %2057 = vmatmul.mubr.bf16.gmra.mrb[0].mxu0 %v416
    %v2058 = vpop.f32.mrb[0].mxu0
    %v2059 = vadd.f32 %v355, %v2058
    %v2060 = vpop.f32.mrb[0].mxu0
    %v2061 = vadd.f32 %v359, %v2060
    %v2062 = vpop.f32.mrb[0].mxu0
    %v2063 = vpop.f32.mrb[0].mxu0
    %2064 = vdwg.mxu0
    %2065 = vmatprep.subr.bf16.mxu0 %v1160
    %2066 = vmatpush1.bf16.msra.mxu0 %v1159
    %2067 = vmatprep.subr.bf16.mxu0 %v1185
    %2068 = vmatpush1.bf16.msra.mxu0 %v1184
    %2069 = vmatprep.subr.bf16.mxu0 %v1210
    %2070 = vmatpush1.bf16.msra.mxu0 %v1209
    %2071 = vmatprep.subr.bf16.mxu0 %v1235
    %2072 = vmatpush1.bf16.msra.mxu0 %v1234
    %2073 = vmatprep.subr.bf16.mxu0 %v1260
    %2074 = vmatpush1.bf16.msra.mxu0 %v1259
    %2075 = vmatprep.subr.bf16.mxu0 %v1285
    %2076 = vmatpush1.bf16.msra.mxu0 %v1284
    %2077 = vmatprep.subr.bf16.mxu0 %v1310
    %2078 = vmatpush1.bf16.msra.mxu0 %v1309
    %2079 = vmatprep.subr.bf16.mxu0 %v1335
    %2080 = vmatpush1.bf16.msra.mxu0 %v1334
    %2081 = vmatprep.subr.bf16.mxu0 %v1360
    %2082 = vmatpush1.bf16.msra.mxu0 %v1359
    %2083 = vmatprep.subr.bf16.mxu0 %v1679
    %2084 = vmatpush1.bf16.msra.mxu0 %v1676
    %2085 = vmatprep.subr.bf16.mxu0 0
    %2086 = vmatpush1.bf16.msra.mxu0 0
    %2087 = vmatprep.subr.bf16.mxu0 0
    %2088 = vmatpush1.bf16.msra.mxu0 0
    %2089 = vmatprep.subr.bf16.mxu0 0
    %2090 = vmatpush1.bf16.msra.mxu0 0
    %2091 = vmatprep.subr.bf16.mxu0 0
    %2092 = vmatpush1.bf16.msra.mxu0 0
    %2093 = vmatprep.subr.bf16.mxu0 0
    %2094 = vmatpush1.bf16.msra.mxu0 0
    %2095 = vmatprep.subr.bf16.mxu0 0
    %2096 = vmatpush1.bf16.msra.mxu0 0
    %2097 = vmatprep.mubr.bf16.mxu0 %v1618
    %2098 = vmatmul.mubr.bf16.gmra.mrb[0].mxu0 %v416
    %v2099 = vpop.f32.mrb[0].mxu0
    %v2100 = vadd.f32 %v363, %v2099
    %v2101 = vpop.f32.mrb[0].mxu0
    %v2102 = vadd.f32 %v367, %v2101
    %v2103 = vpop.f32.mrb[0].mxu0
    %v2104 = vpop.f32.mrb[0].mxu0
    %2105 = vdwg.mxu0
    %2106 = vmatprep.subr.bf16.mxu0 %v1162
    %2107 = vmatpush1.bf16.msra.mxu0 %v1161
    %2108 = vmatprep.subr.bf16.mxu0 %v1187
    %2109 = vmatpush1.bf16.msra.mxu0 %v1186
    %2110 = vmatprep.subr.bf16.mxu0 %v1212
    %2111 = vmatpush1.bf16.msra.mxu0 %v1211
    %2112 = vmatprep.subr.bf16.mxu0 %v1237
    %2113 = vmatpush1.bf16.msra.mxu0 %v1236
    %2114 = vmatprep.subr.bf16.mxu0 %v1262
    %2115 = vmatpush1.bf16.msra.mxu0 %v1261
    %2116 = vmatprep.subr.bf16.mxu0 %v1287
    %2117 = vmatpush1.bf16.msra.mxu0 %v1286
    %2118 = vmatprep.subr.bf16.mxu0 %v1312
    %2119 = vmatpush1.bf16.msra.mxu0 %v1311
    %2120 = vmatprep.subr.bf16.mxu0 %v1337
    %2121 = vmatpush1.bf16.msra.mxu0 %v1336
    %2122 = vmatprep.subr.bf16.mxu0 %v1362
    %2123 = vmatpush1.bf16.msra.mxu0 %v1361
    %2124 = vmatprep.subr.bf16.mxu0 %v1685
    %2125 = vmatpush1.bf16.msra.mxu0 %v1682
    %2126 = vmatprep.subr.bf16.mxu0 0
    %2127 = vmatpush1.bf16.msra.mxu0 0
    %2128 = vmatprep.subr.bf16.mxu0 0
    %2129 = vmatpush1.bf16.msra.mxu0 0
    %2130 = vmatprep.subr.bf16.mxu0 0
    %2131 = vmatpush1.bf16.msra.mxu0 0
    %2132 = vmatprep.subr.bf16.mxu0 0
    %2133 = vmatpush1.bf16.msra.mxu0 0
    %2134 = vmatprep.subr.bf16.mxu0 0
    %2135 = vmatpush1.bf16.msra.mxu0 0
    %2136 = vmatprep.subr.bf16.mxu0 0
    %2137 = vmatpush1.bf16.msra.mxu0 0
    %2138 = vmatprep.mubr.bf16.mxu0 %v1618
    %2139 = vmatmul.mubr.bf16.gmra.mrb[0].mxu0 %v416
    %v2140 = vpop.f32.mrb[0].mxu0
    %v2141 = vadd.f32 %v371, %v2140
    %v2142 = vpop.f32.mrb[0].mxu0
    %v2143 = vadd.f32 %v375, %v2142
    %v2144 = vpop.f32.mrb[0].mxu0
    %v2145 = vpop.f32.mrb[0].mxu0
    %2146 = vdwg.mxu0
    %2147 = vmatprep.subr.bf16.mxu0 %v1164
    %2148 = vmatpush1.bf16.msra.mxu0 %v1163
    %2149 = vmatprep.subr.bf16.mxu0 %v1189
    %2150 = vmatpush1.bf16.msra.mxu0 %v1188
    %2151 = vmatprep.subr.bf16.mxu0 %v1214
    %2152 = vmatpush1.bf16.msra.mxu0 %v1213
    %2153 = vmatprep.subr.bf16.mxu0 %v1239
    %2154 = vmatpush1.bf16.msra.mxu0 %v1238
    %2155 = vmatprep.subr.bf16.mxu0 %v1264
    %2156 = vmatpush1.bf16.msra.mxu0 %v1263
    %2157 = vmatprep.subr.bf16.mxu0 %v1289
    %2158 = vmatpush1.bf16.msra.mxu0 %v1288
    %2159 = vmatprep.subr.bf16.mxu0 %v1314
    %2160 = vmatpush1.bf16.msra.mxu0 %v1313
    %2161 = vmatprep.subr.bf16.mxu0 %v1339
    %2162 = vmatpush1.bf16.msra.mxu0 %v1338
    %2163 = vmatprep.subr.bf16.mxu0 %v1364
    %2164 = vmatpush1.bf16.msra.mxu0 %v1363
    %2165 = vmatprep.subr.bf16.mxu0 %v1691
    %2166 = vmatpush1.bf16.msra.mxu0 %v1688
    %2167 = vmatprep.subr.bf16.mxu0 0
    %2168 = vmatpush1.bf16.msra.mxu0 0
    %2169 = vmatprep.subr.bf16.mxu0 0
    %2170 = vmatpush1.bf16.msra.mxu0 0
    %2171 = vmatprep.subr.bf16.mxu0 0
    %2172 = vmatpush1.bf16.msra.mxu0 0
    %2173 = vmatprep.subr.bf16.mxu0 0
    %2174 = vmatpush1.bf16.msra.mxu0 0
    %2175 = vmatprep.subr.bf16.mxu0 0
    %2176 = vmatpush1.bf16.msra.mxu0 0
    %2177 = vmatprep.subr.bf16.mxu0 0
    %2178 = vmatpush1.bf16.msra.mxu0 0
    %2179 = vmatprep.mubr.bf16.mxu0 %v1618
    %2180 = vmatmul.mubr.bf16.gmra.mrb[0].mxu0 %v416
    %v2181 = vpop.f32.mrb[0].mxu0
    %v2182 = vadd.f32 %v379, %v2181
    %v2183 = vpop.f32.mrb[0].mxu0
    %v2184 = vadd.f32 %v383, %v2183
    %v2185 = vpop.f32.mrb[0].mxu0
    %v2186 = vpop.f32.mrb[0].mxu0
    %2187 = vdwg.mxu0
    %2188 = vmatprep.subr.bf16.mxu0 0
    %2189 = vmatpush1.bf16.msra.mxu0 %v1165
    %2190 = vmatprep.subr.bf16.mxu0 0
    %2191 = vmatpush1.bf16.msra.mxu0 %v1190
    %2192 = vmatprep.subr.bf16.mxu0 0
    %2193 = vmatpush1.bf16.msra.mxu0 %v1215
    %2194 = vmatprep.subr.bf16.mxu0 0
    %2195 = vmatpush1.bf16.msra.mxu0 %v1240
    %2196 = vmatprep.subr.bf16.mxu0 0
    %2197 = vmatpush1.bf16.msra.mxu0 %v1265
    %2198 = vmatprep.subr.bf16.mxu0 0
    %2199 = vmatpush1.bf16.msra.mxu0 %v1290
    %2200 = vmatprep.subr.bf16.mxu0 0
    %2201 = vmatpush1.bf16.msra.mxu0 %v1315
    %2202 = vmatprep.subr.bf16.mxu0 0
    %2203 = vmatpush1.bf16.msra.mxu0 %v1340
    %2204 = vmatprep.subr.bf16.mxu0 0
    %2205 = vmatpush1.bf16.msra.mxu0 %v1365
    %2206 = vmatprep.subr.bf16.mxu0 0
    %2207 = vmatpush1.bf16.msra.mxu0 %v1694
    %2208 = vmatprep.subr.bf16.mxu0 0
    %2209 = vmatpush1.bf16.msra.mxu0 0
    %2210 = vmatprep.subr.bf16.mxu0 0
    %2211 = vmatpush1.bf16.msra.mxu0 0
    %2212 = vmatprep.subr.bf16.mxu0 0
    %2213 = vmatpush1.bf16.msra.mxu0 0
    %2214 = vmatprep.subr.bf16.mxu0 0
    %2215 = vmatpush1.bf16.msra.mxu0 0
    %2216 = vmatprep.subr.bf16.mxu0 0
    %2217 = vmatpush1.bf16.msra.mxu0 0
    %2218 = vmatprep.subr.bf16.mxu0 0
    %2219 = vmatpush1.bf16.msra.mxu0 0
    %2220 = vmatprep.mubr.bf16.mxu0 %v1618
    %2221 = vmatmul.mubr.bf16.gmra.mrb[0].mxu0 %v416
    %v2222 = vpop.f32.mrb[0].mxu0
    %v2223 = vadd.f32 %v387, %v2222
    %v2224 = vpop.f32.mrb[0].mxu0
    %v2225 = vpop.f32.mrb[0].mxu0
    %v2226 = vpop.f32.mrb[0].mxu0
    %2227 = vdwg.mxu0
    %vm2228 = vcmp.ge.f32.partialorder %v1731, 0.0
    %vm2229 = vcmp.ge.f32.partialorder %v1733, 0.0
    %vm2230 = vcmp.ge.f32.partialorder %v1772, 0.0
    %vm2231 = vcmp.ge.f32.partialorder %v1774, 0.0
    %vm2232 = vcmp.ge.f32.partialorder %v1813, 0.0
    %vm2233 = vcmp.ge.f32.partialorder %v1815, 0.0
    %vm2234 = vcmp.ge.f32.partialorder %v1854, 0.0
    %vm2235 = vcmp.ge.f32.partialorder %v1856, 0.0
    %vm2236 = vcmp.ge.f32.partialorder %v1895, 0.0
    %vm2237 = vcmp.ge.f32.partialorder %v1897, 0.0
    %vm2238 = vcmp.ge.f32.partialorder %v1936, 0.0
    %vm2239 = vcmp.ge.f32.partialorder %v1938, 0.0
    %vm2240 = vcmp.ge.f32.partialorder %v1977, 0.0
    %vm2241 = vcmp.ge.f32.partialorder %v1979, 0.0
    %vm2242 = vcmp.ge.f32.partialorder %v2018, 0.0
    %vm2243 = vcmp.ge.f32.partialorder %v2020, 0.0
    %vm2244 = vcmp.ge.f32.partialorder %v2059, 0.0
    %vm2245 = vcmp.ge.f32.partialorder %v2061, 0.0
    %vm2246 = vcmp.ge.f32.partialorder %v2100, 0.0
    %vm2247 = vcmp.ge.f32.partialorder %v2102, 0.0
    %vm2248 = vcmp.ge.f32.partialorder %v2141, 0.0
    %vm2249 = vcmp.ge.f32.partialorder %v2143, 0.0
    %vm2250 = vcmp.ge.f32.partialorder %v2182, 0.0
    %vm2251 = vcmp.ge.f32.partialorder %v2184, 0.0
    %vm2252 = vcmp.ge.f32.partialorder %v2223, 0.0
    %v2253 = vld [vmem:[%s3] sm:$0xff]
    %v2254 = vld [vmem:[%s3 + $0x8] sm:$0xff]
    %v2255 = vld [vmem:[%s3 + $0x10] sm:$0xff]
    %v2256 = vld [vmem:[%s3 + $0x18] sm:$0x1]
    %v2261 = vlaneseq
    %v2262 = vshrl.u32 %v2261, 7
    %v2263 = vsub.s32 0, %v2262
    %v2264 = vrot.slane %v2253, %v2263
    %v2265 = vlaneseq
    %v2266 = vshrl.u32 %v2265, 7
    %v2267 = vsub.s32 1, %v2266
    %v2268 = vrot.slane %v2253, %v2267
    %v2269 = vlaneseq
    %v2270 = vshrl.u32 %v2269, 7
    %v2271 = vsub.s32 2, %v2270
    %v2272 = vrot.slane %v2253, %v2271
    %v2273 = vlaneseq
    %v2274 = vshrl.u32 %v2273, 7
    %v2275 = vsub.s32 3, %v2274
    %v2276 = vrot.slane %v2253, %v2275
    %v2277 = vlaneseq
    %v2278 = vshrl.u32 %v2277, 7
    %v2279 = vsub.s32 4, %v2278
    %v2280 = vrot.slane %v2253, %v2279
    %v2281 = vlaneseq
    %v2282 = vshrl.u32 %v2281, 7
    %v2283 = vsub.s32 5, %v2282
    %v2284 = vrot.slane %v2253, %v2283
    %v2285 = vlaneseq
    %v2286 = vshrl.u32 %v2285, 7
    %v2287 = vsub.s32 6, %v2286
    %v2288 = vrot.slane %v2253, %v2287
    %v2289 = vlaneseq
    %v2290 = vshrl.u32 %v2289, 7
    %v2291 = vsub.s32 7, %v2290
    %v2292 = vrot.slane %v2253, %v2291
    %v2293 = vlaneseq
    %v2294 = vshrl.u32 %v2293, 7
    %v2295 = vsub.s32 0, %v2294
    %v2296 = vrot.slane %v2254, %v2295
    %v2297 = vlaneseq
    %v2298 = vshrl.u32 %v2297, 7
    %v2299 = vsub.s32 1, %v2298
    %v2300 = vrot.slane %v2254, %v2299
    %v2301 = vlaneseq
    %v2302 = vshrl.u32 %v2301, 7
    %v2303 = vsub.s32 2, %v2302
    %v2304 = vrot.slane %v2254, %v2303
    %v2305 = vlaneseq
    %v2306 = vshrl.u32 %v2305, 7
    %v2307 = vsub.s32 3, %v2306
    %v2308 = vrot.slane %v2254, %v2307
    %v2309 = vlaneseq
    %v2310 = vshrl.u32 %v2309, 7
    %v2311 = vsub.s32 4, %v2310
    %v2312 = vrot.slane %v2254, %v2311
    %v2313 = vlaneseq
    %v2314 = vshrl.u32 %v2313, 7
    %v2315 = vsub.s32 5, %v2314
    %v2316 = vrot.slane %v2254, %v2315
    %v2317 = vlaneseq
    %v2318 = vshrl.u32 %v2317, 7
    %v2319 = vsub.s32 6, %v2318
    %v2320 = vrot.slane %v2254, %v2319
    %v2321 = vlaneseq
    %v2322 = vshrl.u32 %v2321, 7
    %v2323 = vsub.s32 7, %v2322
    %v2324 = vrot.slane %v2254, %v2323
    %v2325 = vlaneseq
    %v2326 = vshrl.u32 %v2325, 7
    %v2327 = vsub.s32 0, %v2326
    %v2328 = vrot.slane %v2255, %v2327
    %v2329 = vlaneseq
    %v2330 = vshrl.u32 %v2329, 7
    %v2331 = vsub.s32 1, %v2330
    %v2332 = vrot.slane %v2255, %v2331
    %v2333 = vlaneseq
    %v2334 = vshrl.u32 %v2333, 7
    %v2335 = vsub.s32 2, %v2334
    %v2336 = vrot.slane %v2255, %v2335
    %v2337 = vlaneseq
    %v2338 = vshrl.u32 %v2337, 7
    %v2339 = vsub.s32 3, %v2338
    %v2340 = vrot.slane %v2255, %v2339
    %v2341 = vlaneseq
    %v2342 = vshrl.u32 %v2341, 7
    %v2343 = vsub.s32 4, %v2342
    %v2344 = vrot.slane %v2255, %v2343
    %v2345 = vlaneseq
    %v2346 = vshrl.u32 %v2345, 7
    %v2347 = vsub.s32 5, %v2346
    %v2348 = vrot.slane %v2255, %v2347
    %v2349 = vlaneseq
    %v2350 = vshrl.u32 %v2349, 7
    %v2351 = vsub.s32 6, %v2350
    %v2352 = vrot.slane %v2255, %v2351
    %v2353 = vlaneseq
    %v2354 = vshrl.u32 %v2353, 7
    %v2355 = vsub.s32 7, %v2354
    %v2356 = vrot.slane %v2255, %v2355
    %v2357 = vlaneseq
    %v2358 = vshrl.u32 %v2357, 7
    %v2359 = vsub.s32 0, %v2358
    %v2360 = vrot.slane %v2256, %v2359
    %v2386 = vmul.f32 %v2264, %v1731
    %v2387 = vmul.f32 %v2268, %v1733
    %v2388 = vmul.f32 %v2272, %v1772
    %v2389 = vmul.f32 %v2276, %v1774
    %v2390 = vmul.f32 %v2280, %v1813
    %v2391 = vmul.f32 %v2284, %v1815
    %v2392 = vmul.f32 %v2288, %v1854
    %v2393 = vmul.f32 %v2292, %v1856
    %v2394 = vmul.f32 %v2296, %v1895
    %v2395 = vmul.f32 %v2300, %v1897
    %v2396 = vmul.f32 %v2304, %v1936
    %v2397 = vmul.f32 %v2308, %v1938
    %v2398 = vmul.f32 %v2312, %v1977
    %v2399 = vmul.f32 %v2316, %v1979
    %v2400 = vmul.f32 %v2320, %v2018
    %v2401 = vmul.f32 %v2324, %v2020
    %v2402 = vmul.f32 %v2328, %v2059
    %v2403 = vmul.f32 %v2332, %v2061
    %v2404 = vmul.f32 %v2336, %v2100
    %v2405 = vmul.f32 %v2340, %v2102
    %v2406 = vmul.f32 %v2344, %v2141
    %v2407 = vmul.f32 %v2348, %v2143
    %v2408 = vmul.f32 %v2352, %v2182
    %v2409 = vmul.f32 %v2356, %v2184
    %v2410 = vmul.f32 %v2360, %v2223
    %v2411 = vsel %vm2228, %v1731, %v2386
    %v2412 = vsel %vm2229, %v1733, %v2387
    %v2413 = vsel %vm2230, %v1772, %v2388
    %v2414 = vsel %vm2231, %v1774, %v2389
    %v2415 = vsel %vm2232, %v1813, %v2390
    %v2416 = vsel %vm2233, %v1815, %v2391
    %v2417 = vsel %vm2234, %v1854, %v2392
    %v2418 = vsel %vm2235, %v1856, %v2393
    %v2419 = vsel %vm2236, %v1895, %v2394
    %v2420 = vsel %vm2237, %v1897, %v2395
    %v2421 = vsel %vm2238, %v1936, %v2396
    %v2422 = vsel %vm2239, %v1938, %v2397
    %v2423 = vsel %vm2240, %v1977, %v2398
    %v2424 = vsel %vm2241, %v1979, %v2399
    %v2425 = vsel %vm2242, %v2018, %v2400
    %v2426 = vsel %vm2243, %v2020, %v2401
    %v2427 = vsel %vm2244, %v2059, %v2402
    %v2428 = vsel %vm2245, %v2061, %v2403
    %v2429 = vsel %vm2246, %v2100, %v2404
    %v2430 = vsel %vm2247, %v2102, %v2405
    %v2431 = vsel %vm2248, %v2141, %v2406
    %v2432 = vsel %vm2249, %v2143, %v2407
    %v2433 = vsel %vm2250, %v2182, %v2408
    %v2434 = vsel %vm2251, %v2184, %v2409
    %v2435 = vsel %vm2252, %v2223, %v2410
    %2436 = vst [vmem:[%s4] sm:$0xff] %v2411
    %2437 = vst [vmem:[%s4 + $0x8] sm:$0xff] %v2412
    %2438 = vst [vmem:[%s4 + $0x10] sm:$0xff] %v2413
    %2439 = vst [vmem:[%s4 + $0x18] sm:$0xff] %v2414
    %2440 = vst [vmem:[%s4 + $0x20] sm:$0xff] %v2415
    %2441 = vst [vmem:[%s4 + $0x28] sm:$0xff] %v2416
    %2442 = vst [vmem:[%s4 + $0x30] sm:$0xff] %v2417
    %2443 = vst [vmem:[%s4 + $0x38] sm:$0xff] %v2418
    %2444 = vst [vmem:[%s4 + $0x40] sm:$0xff] %v2419
    %2445 = vst [vmem:[%s4 + $0x48] sm:$0xff] %v2420
    %2446 = vst [vmem:[%s4 + $0x50] sm:$0xff] %v2421
    %2447 = vst [vmem:[%s4 + $0x58] sm:$0xff] %v2422
    %2448 = vst [vmem:[%s4 + $0x60] sm:$0xff] %v2423
    %2449 = vst [vmem:[%s4 + $0x68] sm:$0xff] %v2424
    %2450 = vst [vmem:[%s4 + $0x70] sm:$0xff] %v2425
    %2451 = vst [vmem:[%s4 + $0x78] sm:$0xff] %v2426
    %2452 = vst [vmem:[%s4 + $0x80] sm:$0xff] %v2427
    %2453 = vst [vmem:[%s4 + $0x88] sm:$0xff] %v2428
    %2454 = vst [vmem:[%s4 + $0x90] sm:$0xff] %v2429
    %2455 = vst [vmem:[%s4 + $0x98] sm:$0xff] %v2430
    %2456 = vst [vmem:[%s4 + $0xa0] sm:$0xff] %v2431
    %2457 = vst [vmem:[%s4 + $0xa8] sm:$0xff] %v2432
    %2458 = vst [vmem:[%s4 + $0xb0] sm:$0xff] %v2433
    %2459 = vst [vmem:[%s4 + $0xb8] sm:$0xff] %v2434
    %2460 = vst [vmem:[%s4 + $0xc0] sm:$0xff] %v2435
    // Predicated region
    $region22: #{generator_forward.4} parent=1 // pred_check
      _
    $region23: #{generator_forward.4} parent=1 // pred_check_branch
      %2462 = sbr.rel (0) target = $region25
    $region24: #{generator_forward.4} parent=1 // pred_region
      _
    $region25: #{generator_forward.4} parent=1 // pred_fallthru
      _
    // Predicated region
    $region26: #{generator_forward.4} parent=1 // pred_check
      _
    $region27: #{generator_forward.4} parent=1 // pred_check_branch
      %2464 = sbr.rel (0) target = $region29
    $region28: #{generator_forward.4} parent=1 // pred_region
      _
    $region29: #{generator_forward.4} parent=1 // pred_fallthru
      _
    %2465 = vsyncpa [#allocation3], 1

// kernel: generator_forward.6
$region0: #{generator_forward.6}
  #allocation0 [shape = 'u32[]', space=smem, size = 0x4, offset = 0x4, fixed_abs, tag = 'smem constant byte address 0x4 - core index']
  #allocation1 [shape = 'u32[144,128]{1,0:T(1,128)}', space=vmem, size = 0x12000, scoped, tag = 'internal scratch']
  %s0 = inlined_call_operand.vmem [shape: bf16[592,128], index: 0, kind: input, shape index: {}]
  %s1 = inlined_call_operand.hbm [shape: bf16[128,128], index: 1, kind: input, shape index: {}]
  %s2 = inlined_call_operand.hbm [shape: f32[1,128], index: 2, kind: input, shape index: {}]
  %s3 = inlined_call_operand.hbm [shape: f32[1,128], index: 3, kind: input, shape index: {}]
  %s4 = inlined_call_operand.vmem [shape: f32[592,128], index: 4, kind: output, shape index: {}]
  %s5 = sld [smem:[#allocation0]]
  $region61: #{generator_forward.6} parent=0
    _
  %s7 = ssub.s32 1, %s5
  %s8 = scalar_select 0, %s7, %s5
  $region1: #{generator_forward.6} parent=0
    #allocation2 [shape = 'u8[32768]{0}', space=vmem, size = 0x8000, scoped, tag = 'input window, operand 1, single buffered']
    #allocation3 [shape = 's32[2]{0}', space=sflag, size = 0x8, scoped, tag = 'scoped memory for generator_forward.6']
    #allocation4 [shape = 'u8[512]{0}', space=vmem, size = 0x400, scoped, tag = 'input window, operand 2, single buffered']
    #allocation5 [shape = 's32[1]{0}', space=sflag, size = 0x4, scoped, tag = 'scoped memory for generator_forward.6']
    #allocation6 [shape = 'u8[512]{0}', space=vmem, size = 0x400, scoped, tag = 'input window, operand 3, single buffered']
    %9 = vsyncpa [#allocation3], 0
    %10 = vsyncpa [#allocation5], 0
    loop: start=0, step=1, limit=4
    $region2: #{generator_forward.6} parent=1 // loop_pre_header
      _
    $region3: #{generator_forward.6} parent=1 // loop_header
      %s12 = sphi 0, %s16
      %p13 = scmp.ge.s32.totalorder %s12, 4
      %s22 = sphi 0, %s24
      %s25 = sphi 0, %s22
      %s26 = sphi 0, %s25
      %s42 = sphi 0, %s26
      %s46 = sphi 0, %s46
      %s48 = sphi 0, %s46
      %s49 = sphi 0, %s48
      %s63 = sphi 0, %s49
      %s67 = sphi 0, %s67
      %s69 = sphi 0, %s67
      %s70 = sphi 0, %s69
      %s84 = sphi 0, %s70
      %s88 = sphi 0, %s88
      %s90 = sphi 0, %s88
      %s91 = sphi 0, %s90
      %s105 = sphi 0, %s91
      %s111 = sphi 0, %s113
      %s114 = sphi 0, %s111
      %s115 = sphi 0, %s114
      %s131 = sphi 0, %s115
    $region4: #{generator_forward.6} parent=1 // loop_header_branch
      %15 = sbr.rel (%p13) target = $region8
    $region5: #{generator_forward.6} parent=1 // loop_body
      %s17 = ssub.s32 %s12, 1
      %s18 = ssub.s32 %s12, 2
      %s19 = sadd.s32 %s12, 1
      %s20 = ssub.s32 %s12, %s19
      %p21 = scmp.eq.s32.totalorder %s20, 0
      %s23 = sadd.s32 %s22, 1
      %s24 = scalar_select %p21, %s22, %s23
      %p27 = pneg %p21
      %p28 = scmp.eq.s32.totalorder %s12, 1
      %p29 = por %p27, %p28
      %p30 = scmp.ne.s32.totalorder %s22, %s25
      %p31 = scmp.eq.s32.totalorder %s12, 0
      %p32 = por %p30, %p31
      %p33 = scmp.ne.s32.totalorder %s22, %s25
      %p34 = scmp.eq.s32.totalorder %s17, 1
      %p35 = por %p33, %p34
      %p36 = scmp.ne.s32.totalorder %s25, %s26
      %p37 = scmp.eq.s32.totalorder %s17, 0
      %p38 = por %p36, %p37
      %p39 = scmp.ne.s32.totalorder %s25, %s26
      %p40 = scmp.eq.s32.totalorder %s18, 1
      %p41 = por %p39, %p40
      %p43 = scmp.ne.s32.totalorder %s26, %s42
      %p44 = scmp.eq.s32.totalorder %s18, 0
      %p45 = por %p43, %p44
      %s47 = sadd.s32 %s46, 1
      %p50 = scmp.eq.s32.totalorder %s12, 1
      %p51 = scmp.ne.s32.totalorder %s46, %s48
      %p52 = scmp.eq.s32.totalorder %s12, 0
      %p53 = por %p51, %p52
      %p54 = scmp.ne.s32.totalorder %s46, %s48
      %p55 = scmp.eq.s32.totalorder %s17, 1
      %p56 = por %p54, %p55
      %p57 = scmp.ne.s32.totalorder %s48, %s49
      %p58 = scmp.eq.s32.totalorder %s17, 0
      %p59 = por %p57, %p58
      %p60 = scmp.ne.s32.totalorder %s48, %s49
      %p61 = scmp.eq.s32.totalorder %s18, 1
      %p62 = por %p60, %p61
      %p64 = scmp.ne.s32.totalorder %s49, %s63
      %p65 = scmp.eq.s32.totalorder %s18, 0
      %p66 = por %p64, %p65
      %s68 = sadd.s32 %s67, 1
      %p71 = scmp.eq.s32.totalorder %s12, 1
      %p72 = scmp.ne.s32.totalorder %s67, %s69
      %p73 = scmp.eq.s32.totalorder %s12, 0
      %p74 = por %p72, %p73
      %p75 = scmp.ne.s32.totalorder %s67, %s69
      %p76 = scmp.eq.s32.totalorder %s17, 1
      %p77 = por %p75, %p76
      %p78 = scmp.ne.s32.totalorder %s69, %s70
      %p79 = scmp.eq.s32.totalorder %s17, 0
      %p80 = por %p78, %p79
      %p81 = scmp.ne.s32.totalorder %s69, %s70
      %p82 = scmp.eq.s32.totalorder %s18, 1
      %p83 = por %p81, %p82
      %p85 = scmp.ne.s32.totalorder %s70, %s84
      %p86 = scmp.eq.s32.totalorder %s18, 0
      %p87 = por %p85, %p86
      %s89 = sadd.s32 %s88, 1
      %p92 = scmp.eq.s32.totalorder %s12, 1
      %p93 = scmp.ne.s32.totalorder %s88, %s90
      %p94 = scmp.eq.s32.totalorder %s12, 0
      %p95 = por %p93, %p94
      %p96 = scmp.ne.s32.totalorder %s88, %s90
      %p97 = scmp.eq.s32.totalorder %s17, 1
      %p98 = por %p96, %p97
      %p99 = scmp.ne.s32.totalorder %s90, %s91
      %p100 = scmp.eq.s32.totalorder %s17, 0
      %p101 = por %p99, %p100
      %p102 = scmp.ne.s32.totalorder %s90, %s91
      %p103 = scmp.eq.s32.totalorder %s18, 1
      %p104 = por %p102, %p103
      %p106 = scmp.ne.s32.totalorder %s91, %s105
      %p107 = scmp.eq.s32.totalorder %s18, 0
      %p108 = por %p106, %p107
      %s109 = ssub.s32 %s12, %s19
      %p110 = scmp.eq.s32.totalorder %s109, 0
      %s112 = sadd.s32 %s111, 1
      %s113 = scalar_select %p110, %s111, %s112
      %p116 = pneg %p110
      %p117 = scmp.eq.s32.totalorder %s12, 1
      %p118 = por %p116, %p117
      %p119 = scmp.ne.s32.totalorder %s111, %s114
      %p120 = scmp.eq.s32.totalorder %s12, 0
      %p121 = por %p119, %p120
      %p122 = scmp.ne.s32.totalorder %s111, %s114
      %p123 = scmp.eq.s32.totalorder %s17, 1
      %p124 = por %p122, %p123
      %p125 = scmp.ne.s32.totalorder %s114, %s115
      %p126 = scmp.eq.s32.totalorder %s17, 0
      %p127 = por %p125, %p126
      %p128 = scmp.ne.s32.totalorder %s114, %s115
      %p129 = scmp.eq.s32.totalorder %s18, 1
      %p130 = por %p128, %p129
      %p132 = scmp.ne.s32.totalorder %s115, %s131
      %p133 = scmp.eq.s32.totalorder %s18, 0
      %p134 = por %p132, %p133
      %p135 = scmp.le.s32.totalorder 1, %s12
      %p136 = scmp.lt.s32.totalorder %s12, 3
      %p137 = pnand %p135, %p136
      %p138 = pneg %p137
      // Predicated region
      $region9: #{generator_forward.6} parent=5 // pred_check
        _
      $region10: #{generator_forward.6} parent=5 // pred_check_branch
        %140 = sbr.rel (%p137) target = $region12
      $region11: #{generator_forward.6} parent=5 // pred_region
        %s141 = ssub.s32 %s12, 1
        // Predicated region
        $region13: #{generator_forward.6} parent=11 // pred_check
          %p142 = pneg %p59
        $region14: #{generator_forward.6} parent=11 // pred_check_branch
          %144 = sbr.rel (%p142) target = $region16
        $region15: #{generator_forward.6} parent=11 // pred_region
          %s146 = ssub.s32 1024, 1024
          %147 = vsyncadd [#allocation3], %s146
          %s148 = sshll.u32 [#allocation2], 4
          %s149 = int_to_ptr.vmem [resolvable:$true] %s148
          %154 = dma.hbm_to_vmem [thread:$0]  %s1, 1024, %s149, [#allocation3], 64, 64, 4
        $region16: #{generator_forward.6} parent=11 // pred_fallthru
          _
        // Predicated region
        $region17: #{generator_forward.6} parent=11 // pred_check
          %p155 = pneg %p80
        $region18: #{generator_forward.6} parent=11 // pred_check_branch
          %157 = sbr.rel (%p155) target = $region20
        $region19: #{generator_forward.6} parent=11 // pred_region
          %s159 = ssub.s32 16, 16
          %160 = vsyncadd [#allocation5], %s159
          %s162 = sshll.u32 [#allocation4], 4
          %s163 = int_to_ptr.vmem [resolvable:$true] %s162
          %165 = dma.hbm_to_vmem [thread:$0]  %s2, 16, %s163, [#allocation5]
        $region20: #{generator_forward.6} parent=11 // pred_fallthru
          _
        // Predicated region
        $region21: #{generator_forward.6} parent=11 // pred_check
          %p166 = pneg %p101
        $region22: #{generator_forward.6} parent=11 // pred_check_branch
          %168 = sbr.rel (%p166) target = $region24
        $region23: #{generator_forward.6} parent=11 // pred_region
          %s170 = ssub.s32 16, 16
          %171 = vsyncadd [#allocation5], %s170
          %s173 = sshll.u32 [#allocation6], 4
          %s174 = int_to_ptr.vmem [resolvable:$true] %s173
          %176 = dma.hbm_to_vmem [thread:$0]  %s3, 16, %s174, [#allocation5]
        $region24: #{generator_forward.6} parent=11 // pred_fallthru
          _
      $region12: #{generator_forward.6} parent=5 // pred_fallthru
        _
      %p177 = scmp.lt.s32.totalorder %s12, 2
      // Predicated region
      $region25: #{generator_forward.6} parent=5 // pred_check
        %p178 = pneg %p177
      $region26: #{generator_forward.6} parent=5 // pred_check_branch
        %180 = sbr.rel (%p178) target = $region28
      $region27: #{generator_forward.6} parent=5 // pred_region
        // Predicated region
        $region29: #{generator_forward.6} parent=27 // pred_check
          %p181 = pneg %p32
        $region30: #{generator_forward.6} parent=27 // pred_check_branch
          %183 = sbr.rel (%p181) target = $region32
        $region31: #{generator_forward.6} parent=27 // pred_region
          %s184 = smul.u32 37, %s12
          %p185 = scmp.lt.s32.totalorder %s184, 73
          %s186 = scalar_select %p185, %s184, 73
          %s187 = smul.addr %s186, 4
          %s188 = scalar_lea.vmem %s0, %s187
          %s189 = smul.u32 37, %s12
        $region32: #{generator_forward.6} parent=27 // pred_fallthru
          _
      $region28: #{generator_forward.6} parent=5 // pred_fallthru
        _
      %p190 = scmp.le.s32.totalorder 1, %s12
      %p191 = scmp.lt.s32.totalorder %s12, 3
      %p192 = pnand %p190, %p191
      %p193 = pneg %p192
      // Predicated region
      $region33: #{generator_forward.6} parent=5 // pred_check
        _
      $region34: #{generator_forward.6} parent=5 // pred_check_branch
        %195 = sbr.rel (%p192) target = $region36
      $region35: #{generator_forward.6} parent=5 // pred_region
        %s196 = ssub.s32 %s12, 1
        // Predicated region
        $region37: #{generator_forward.6} parent=35 // pred_check
          %p197 = pneg %p59
        $region38: #{generator_forward.6} parent=35 // pred_check_branch
          %199 = sbr.rel (%p197) target = $region40
        $region39: #{generator_forward.6} parent=35 // pred_region
          %200 = dma.done [#allocation3], 1024
        $region40: #{generator_forward.6} parent=35 // pred_fallthru
          _
        // Predicated region
        $region41: #{generator_forward.6} parent=35 // pred_check
          %p201 = pneg %p80
        $region42: #{generator_forward.6} parent=35 // pred_check_branch
          %203 = sbr.rel (%p201) target = $region44
        $region43: #{generator_forward.6} parent=35 // pred_region
          %204 = dma.done [#allocation5], 16
        $region44: #{generator_forward.6} parent=35 // pred_fallthru
          _
        // Predicated region
        $region45: #{generator_forward.6} parent=35 // pred_check
          %p205 = pneg %p101
        $region46: #{generator_forward.6} parent=35 // pred_check_branch
          %207 = sbr.rel (%p205) target = $region48
        $region47: #{generator_forward.6} parent=35 // pred_region
          %208 = dma.done [#allocation5], 16
        $region48: #{generator_forward.6} parent=35 // pred_fallthru
          _
        %s209 = smul.u32 37, %s17
        %p210 = scmp.lt.s32.totalorder %s209, 73
        %s211 = scalar_select %p210, %s209, 73
        %s212 = smul.addr %s211, 4
        %s213 = scalar_lea.vmem %s0, %s212
        %p214 = pneg %p38
        %p215 = pneg %p35
        %p216 = pneg %p59
        %p217 = pneg %p56
        %p218 = pneg %p80
        %p219 = pneg %p77
        %p220 = pneg %p101
        %p221 = pneg %p98
        %p222 = pneg %p127
        %p223 = pneg %p124
        %s224 = smul.u32 37, %s17
        %p225 = scmp.lt.s32.totalorder %s224, 73
        %s226 = scalar_select %p225, %s224, 73
        %s227 = smul.addr %s226, 8
        %s228 = scalar_lea.vmem %s4, %s227
        %s229 = smul.u32 37, %s17
        %p230 = scmp.lt.s32.totalorder %s229, 73
        %s231 = scalar_select %p230, %s229, 73
        %s232 = smul.addr %s231, 4
        %s233 = scalar_lea.vmem %s0, %s232
        %s234 = smul.u32 37, %s17
        %s235 = smul.u32 37, %s17
        %p236 = scmp.lt.s32.totalorder %s235, 73
        %s237 = scalar_select %p236, %s235, 73
        %s238 = smul.addr %s237, 8
        %s239 = scalar_lea.vmem %s4, %s238
        %s240 = smul.u32 37, %s17
        %v242 = vld [vmem:[%s233] sm:$0xf]
        %v243 = vld [vmem:[%s233 + $0x4] sm:$0xf]
        %v244 = vld [vmem:[%s233 + $0x8] sm:$0xf]
        %v245 = vld [vmem:[%s233 + $0xc] sm:$0xf]
        %v246 = vld [vmem:[%s233 + $0x10] sm:$0xf]
        %v247 = vld [vmem:[%s233 + $0x14] sm:$0xf]
        %v248 = vld [vmem:[%s233 + $0x18] sm:$0xf]
        %v249 = vld [vmem:[%s233 + $0x1c] sm:$0xf]
        %v250 = vld [vmem:[%s233 + $0x20] sm:$0xf]
        %v251 = vld [vmem:[%s233 + $0x24] sm:$0xf]
        %v252 = vld [vmem:[%s233 + $0x28] sm:$0xf]
        %v253 = vld [vmem:[%s233 + $0x2c] sm:$0xf]
        %v254 = vld [vmem:[%s233 + $0x30] sm:$0xf]
        %v255 = vld [vmem:[%s233 + $0x34] sm:$0xf]
        %v256 = vld [vmem:[%s233 + $0x38] sm:$0xf]
        %v257 = vld [vmem:[%s233 + $0x3c] sm:$0xf]
        %v258 = vld [vmem:[%s233 + $0x40] sm:$0xf]
        %v259 = vld [vmem:[%s233 + $0x44] sm:$0xf]
        %v260 = vld [vmem:[%s233 + $0x48] sm:$0xf]
        %v261 = vld [vmem:[%s233 + $0x4c] sm:$0xf]
        %v262 = vld [vmem:[%s233 + $0x50] sm:$0xf]
        %v263 = vld [vmem:[%s233 + $0x54] sm:$0xf]
        %v264 = vld [vmem:[%s233 + $0x58] sm:$0xf]
        %v265 = vld [vmem:[%s233 + $0x5c] sm:$0xf]
        %v266 = vld [vmem:[%s233 + $0x60] sm:$0xf]
        %v267 = vld [vmem:[%s233 + $0x64] sm:$0xf]
        %v268 = vld [vmem:[%s233 + $0x68] sm:$0xf]
        %v269 = vld [vmem:[%s233 + $0x6c] sm:$0xf]
        %v270 = vld [vmem:[%s233 + $0x70] sm:$0xf]
        %v271 = vld [vmem:[%s233 + $0x74] sm:$0xf]
        %v272 = vld [vmem:[%s233 + $0x78] sm:$0xf]
        %v273 = vld [vmem:[%s233 + $0x7c] sm:$0xf]
        %v274 = vld [vmem:[%s233 + $0x80] sm:$0xf]
        %v275 = vld [vmem:[%s233 + $0x84] sm:$0xf]
        %v276 = vld [vmem:[%s233 + $0x88] sm:$0xf]
        %v277 = vld [vmem:[%s233 + $0x8c] sm:$0xf]
        %v278 = vld [vmem:[%s233 + $0x90] sm:$0xf]
        %v279 = vld [vmem:[#allocation2] sm:$0xf]
        %v280 = vld [vmem:[#allocation2 + $0x4] sm:$0xf]
        %v281 = vld [vmem:[#allocation2 + $0x8] sm:$0xf]
        %v282 = vld [vmem:[#allocation2 + $0xc] sm:$0xf]
        %v283 = vld [vmem:[#allocation2 + $0x10] sm:$0xf]
        %v284 = vld [vmem:[#allocation2 + $0x14] sm:$0xf]
        %v285 = vld [vmem:[#allocation2 + $0x18] sm:$0xf]
        %v286 = vld [vmem:[#allocation2 + $0x1c] sm:$0xf]
        %v287 = vld [vmem:[#allocation2 + $0x20] sm:$0xf]
        %v288 = vld [vmem:[#allocation2 + $0x24] sm:$0xf]
        %v289 = vld [vmem:[#allocation2 + $0x28] sm:$0xf]
        %v290 = vld [vmem:[#allocation2 + $0x2c] sm:$0xf]
        %v291 = vld [vmem:[#allocation2 + $0x30] sm:$0xf]
        %v292 = vld [vmem:[#allocation2 + $0x34] sm:$0xf]
        %v293 = vld [vmem:[#allocation2 + $0x38] sm:$0xf]
        %v294 = vld [vmem:[#allocation2 + $0x3c] sm:$0xf]
        %v295 = vld [vmem:[#allocation4] sm:$0x1]
        %v297 = vlaneseq
        %v298 = vshrl.u32 %v297, 7
        %v299 = vsub.s32 0, %v298
        %v300 = vrot.slane %v295, %v299
        %v339 = vunpack.c.l.b16 %v242
        %v340 = vunpack.c.l.b16 %v243
        %v341 = vunpack.c.l.b16 %v244
        %v342 = vunpack.c.l.b16 %v245
        %v343 = vunpack.c.l.b16 %v246
        %v344 = vunpack.c.l.b16 %v247
        %v345 = vunpack.c.l.b16 %v248
        %v346 = vunpack.c.l.b16 %v249
        %v347 = vunpack.c.l.b16 %v250
        %v348 = vunpack.c.l.b16 %v251
        %v349 = vunpack.c.l.b16 %v252
        %v350 = vunpack.c.l.b16 %v253
        %v351 = vunpack.c.l.b16 %v254
        %v352 = vunpack.c.l.b16 %v255
        %v353 = vunpack.c.l.b16 %v256
        %v354 = vunpack.c.l.b16 %v257
        %v355 = vunpack.c.l.b16 %v258
        %v356 = vunpack.c.l.b16 %v259
        %v357 = vunpack.c.l.b16 %v260
        %v358 = vunpack.c.l.b16 %v261
        %v359 = vunpack.c.l.b16 %v262
        %v360 = vunpack.c.l.b16 %v263
        %v361 = vunpack.c.l.b16 %v264
        %v362 = vunpack.c.l.b16 %v265
        %v363 = vunpack.c.l.b16 %v266
        %v364 = vunpack.c.l.b16 %v267
        %v365 = vunpack.c.l.b16 %v268
        %v366 = vunpack.c.l.b16 %v269
        %v367 = vunpack.c.l.b16 %v270
        %v368 = vunpack.c.l.b16 %v271
        %v369 = vunpack.c.l.b16 %v272
        %v370 = vunpack.c.l.b16 %v273
        %v371 = vunpack.c.l.b16 %v274
        %v372 = vunpack.c.l.b16 %v275
        %v373 = vunpack.c.l.b16 %v276
        %v374 = vunpack.c.l.b16 %v277
        %v375 = vunpack.c.l.b16 %v278
        %v376 = vpack.c.b16 %v340, %v339
        %v377 = vpack.c.b16 %v342, %v341
        %v378 = vpack.c.b16 %v344, %v343
        %v379 = vpack.c.b16 %v346, %v345
        %v380 = vpack.c.b16 %v348, %v347
        %v381 = vpack.c.b16 %v350, %v349
        %v382 = vpack.c.b16 %v352, %v351
        %v383 = vpack.c.b16 %v354, %v353
        %v384 = vpack.c.b16 %v356, %v355
        %v385 = vpack.c.b16 %v358, %v357
        %v386 = vpack.c.b16 %v360, %v359
        %v387 = vpack.c.b16 %v362, %v361
        %v388 = vpack.c.b16 %v364, %v363
        %v389 = vpack.c.b16 %v366, %v365
        %v390 = vpack.c.b16 %v368, %v367
        %v391 = vpack.c.b16 %v370, %v369
        %v392 = vpack.c.b16 %v372, %v371
        %v393 = vpack.c.b16 %v374, %v373
        %v394 = vpack.c.b16 %v375, %v375
        %v430 = vunpack.c.l.b16 %v279
        %v431 = vunpack.c.l.b16 %v280
        %v432 = vunpack.c.l.b16 %v281
        %v433 = vunpack.c.l.b16 %v282
        %v434 = vunpack.c.l.b16 %v283
        %v435 = vunpack.c.l.b16 %v284
        %v436 = vunpack.c.l.b16 %v285
        %v437 = vunpack.c.l.b16 %v286
        %v438 = vunpack.c.l.b16 %v287
        %v439 = vunpack.c.l.b16 %v288
        %v440 = vunpack.c.l.b16 %v289
        %v441 = vunpack.c.l.b16 %v290
        %v442 = vunpack.c.l.b16 %v291
        %v443 = vunpack.c.l.b16 %v292
        %v444 = vunpack.c.l.b16 %v293
        %v445 = vunpack.c.l.b16 %v294
        %v446 = vpack.c.b16 %v431, %v430
        %v447 = vpack.c.b16 %v433, %v432
        %v448 = vpack.c.b16 %v435, %v434
        %v449 = vpack.c.b16 %v437, %v436
        %v450 = vpack.c.b16 %v439, %v438
        %v451 = vpack.c.b16 %v441, %v440
        %v452 = vpack.c.b16 %v443, %v442
        %v453 = vpack.c.b16 %v445, %v444
        %462 = vmatprep.subr.bf16.mxu0 0
        %463 = vmatpush1.bf16.msra.mxu0 %v446
        %464 = vmatprep.subr.bf16.mxu0 0
        %465 = vmatpush1.bf16.msra.mxu0 %v447
        %466 = vmatprep.subr.bf16.mxu0 0
        %467 = vmatpush1.bf16.msra.mxu0 %v448
        %468 = vmatprep.subr.bf16.mxu0 0
        %469 = vmatpush1.bf16.msra.mxu0 %v449
        %470 = vmatprep.subr.bf16.mxu0 0
        %471 = vmatpush1.bf16.msra.mxu0 %v450
        %472 = vmatprep.subr.bf16.mxu0 0
        %473 = vmatpush1.bf16.msra.mxu0 %v451
        %474 = vmatprep.subr.bf16.mxu0 0
        %475 = vmatpush1.bf16.msra.mxu0 %v452
        %476 = vmatprep.subr.bf16.mxu0 0
        %477 = vmatpush1.bf16.msra.mxu0 %v453
        %478 = vmatprep.subr.bf16.mxu0 0
        %479 = vmatpush1.bf16.msra.mxu0 0
        %480 = vmatprep.subr.bf16.mxu0 0
        %481 = vmatpush1.bf16.msra.mxu0 0
        %482 = vmatprep.subr.bf16.mxu0 0
        %483 = vmatpush1.bf16.msra.mxu0 0
        %484 = vmatprep.subr.bf16.mxu0 0
        %485 = vmatpush1.bf16.msra.mxu0 0
        %486 = vmatprep.subr.bf16.mxu0 0
        %487 = vmatpush1.bf16.msra.mxu0 0
        %488 = vmatprep.subr.bf16.mxu0 0
        %489 = vmatpush1.bf16.msra.mxu0 0
        %490 = vmatprep.subr.bf16.mxu0 0
        %491 = vmatpush1.bf16.msra.mxu0 0
        %492 = vmatprep.subr.bf16.mxu0 0
        %493 = vmatpush1.bf16.msra.mxu0 0
        %494 = vmatprep.mubr.bf16.mxu0 0
        %495 = vmatmul.mubr.bf16.gmra.mrb[0].mxu0 %v376
        %v496 = vpop.f32.mrb[0].mxu0
        %v497 = vadd.f32 %v300, %v496
        %v498 = vpop.f32.mrb[0].mxu0
        %v499 = vpop.f32.mrb[0].mxu0
        %v500 = vadd.f32 %v300, %v499
        %v501 = vpop.f32.mrb[0].mxu0
        %502 = vmatprep.mubr.bf16.mxu0 0
        %503 = vmatmul.mubr.bf16.gmra.mrb[0].mxu0 %v377
        %v504 = vpop.f32.mrb[0].mxu0
        %v505 = vadd.f32 %v300, %v504
        %v506 = vpop.f32.mrb[0].mxu0
        %v507 = vpop.f32.mrb[0].mxu0
        %v508 = vadd.f32 %v300, %v507
        %v509 = vpop.f32.mrb[0].mxu0
        %510 = vmatprep.mubr.bf16.mxu0 0
        %511 = vmatmul.mubr.bf16.gmra.mrb[0].mxu0 %v378
        %v512 = vpop.f32.mrb[0].mxu0
        %v513 = vadd.f32 %v300, %v512
        %v514 = vpop.f32.mrb[0].mxu0
        %v515 = vpop.f32.mrb[0].mxu0
        %v516 = vadd.f32 %v300, %v515
        %v517 = vpop.f32.mrb[0].mxu0
        %518 = vmatprep.mubr.bf16.mxu0 0
        %519 = vmatmul.mubr.bf16.gmra.mrb[0].mxu0 %v379
        %v520 = vpop.f32.mrb[0].mxu0
        %v521 = vadd.f32 %v300, %v520
        %v522 = vpop.f32.mrb[0].mxu0
        %v523 = vpop.f32.mrb[0].mxu0
        %v524 = vadd.f32 %v300, %v523
        %v525 = vpop.f32.mrb[0].mxu0
        %526 = vmatprep.mubr.bf16.mxu0 0
        %527 = vmatmul.mubr.bf16.gmra.mrb[0].mxu0 %v380
        %v528 = vpop.f32.mrb[0].mxu0
        %v529 = vadd.f32 %v300, %v528
        %v530 = vpop.f32.mrb[0].mxu0
        %v531 = vpop.f32.mrb[0].mxu0
        %v532 = vadd.f32 %v300, %v531
        %v533 = vpop.f32.mrb[0].mxu0
        %534 = vmatprep.mubr.bf16.mxu0 0
        %535 = vmatmul.mubr.bf16.gmra.mrb[0].mxu0 %v381
        %v536 = vpop.f32.mrb[0].mxu0
        %v537 = vadd.f32 %v300, %v536
        %v538 = vpop.f32.mrb[0].mxu0
        %v539 = vpop.f32.mrb[0].mxu0
        %v540 = vadd.f32 %v300, %v539
        %v541 = vpop.f32.mrb[0].mxu0
        %542 = vmatprep.mubr.bf16.mxu0 0
        %543 = vmatmul.mubr.bf16.gmra.mrb[0].mxu0 %v382
        %v544 = vpop.f32.mrb[0].mxu0
        %v545 = vadd.f32 %v300, %v544
        %v546 = vpop.f32.mrb[0].mxu0
        %v547 = vpop.f32.mrb[0].mxu0
        %v548 = vadd.f32 %v300, %v547
        %v549 = vpop.f32.mrb[0].mxu0
        %550 = vmatprep.mubr.bf16.mxu0 0
        %551 = vmatmul.mubr.bf16.gmra.mrb[0].mxu0 %v383
        %v552 = vpop.f32.mrb[0].mxu0
        %v553 = vadd.f32 %v300, %v552
        %v554 = vpop.f32.mrb[0].mxu0
        %v555 = vpop.f32.mrb[0].mxu0
        %v556 = vadd.f32 %v300, %v555
        %v557 = vpop.f32.mrb[0].mxu0
        %558 = vmatprep.mubr.bf16.mxu0 0
        %559 = vmatmul.mubr.bf16.gmra.mrb[0].mxu0 %v384
        %v560 = vpop.f32.mrb[0].mxu0
        %v561 = vadd.f32 %v300, %v560
        %v562 = vpop.f32.mrb[0].mxu0
        %v563 = vpop.f32.mrb[0].mxu0
        %v564 = vadd.f32 %v300, %v563
        %v565 = vpop.f32.mrb[0].mxu0
        %566 = vmatprep.mubr.bf16.mxu0 0
        %567 = vmatmul.mubr.bf16.gmra.mrb[0].mxu0 %v385
        %v568 = vpop.f32.mrb[0].mxu0
        %v569 = vadd.f32 %v300, %v568
        %v570 = vpop.f32.mrb[0].mxu0
        %v571 = vpop.f32.mrb[0].mxu0
        %v572 = vadd.f32 %v300, %v571
        %v573 = vpop.f32.mrb[0].mxu0
        %574 = vmatprep.mubr.bf16.mxu0 0
        %575 = vmatmul.mubr.bf16.gmra.mrb[0].mxu0 %v386
        %v576 = vpop.f32.mrb[0].mxu0
        %v577 = vadd.f32 %v300, %v576
        %v578 = vpop.f32.mrb[0].mxu0
        %v579 = vpop.f32.mrb[0].mxu0
        %v580 = vadd.f32 %v300, %v579
        %v581 = vpop.f32.mrb[0].mxu0
        %582 = vmatprep.mubr.bf16.mxu0 0
        %583 = vmatmul.mubr.bf16.gmra.mrb[0].mxu0 %v387
        %v584 = vpop.f32.mrb[0].mxu0
        %v585 = vadd.f32 %v300, %v584
        %v586 = vpop.f32.mrb[0].mxu0
        %v587 = vpop.f32.mrb[0].mxu0
        %v588 = vadd.f32 %v300, %v587
        %v589 = vpop.f32.mrb[0].mxu0
        %590 = vmatprep.mubr.bf16.mxu0 0
        %591 = vmatmul.mubr.bf16.gmra.mrb[0].mxu0 %v388
        %v592 = vpop.f32.mrb[0].mxu0
        %v593 = vadd.f32 %v300, %v592
        %v594 = vpop.f32.mrb[0].mxu0
        %v595 = vpop.f32.mrb[0].mxu0
        %v596 = vadd.f32 %v300, %v595
        %v597 = vpop.f32.mrb[0].mxu0
        %598 = vmatprep.mubr.bf16.mxu0 0
        %599 = vmatmul.mubr.bf16.gmra.mrb[0].mxu0 %v389
        %v600 = vpop.f32.mrb[0].mxu0
        %v601 = vadd.f32 %v300, %v600
        %v602 = vpop.f32.mrb[0].mxu0
        %v603 = vpop.f32.mrb[0].mxu0
        %v604 = vadd.f32 %v300, %v603
        %v605 = vpop.f32.mrb[0].mxu0
        %606 = vmatprep.mubr.bf16.mxu0 0
        %607 = vmatmul.mubr.bf16.gmra.mrb[0].mxu0 %v390
        %v608 = vpop.f32.mrb[0].mxu0
        %v609 = vadd.f32 %v300, %v608
        %v610 = vpop.f32.mrb[0].mxu0
        %v611 = vpop.f32.mrb[0].mxu0
        %v612 = vadd.f32 %v300, %v611
        %v613 = vpop.f32.mrb[0].mxu0
        %614 = vmatprep.mubr.bf16.mxu0 0
        %615 = vmatmul.mubr.bf16.gmra.mrb[0].mxu0 %v391
        %v616 = vpop.f32.mrb[0].mxu0
        %v617 = vadd.f32 %v300, %v616
        %v618 = vpop.f32.mrb[0].mxu0
        %v619 = vpop.f32.mrb[0].mxu0
        %v620 = vadd.f32 %v300, %v619
        %v621 = vpop.f32.mrb[0].mxu0
        %622 = vmatprep.mubr.bf16.mxu0 0
        %623 = vmatmul.mubr.bf16.gmra.mrb[0].mxu0 %v392
        %v624 = vpop.f32.mrb[0].mxu0
        %v625 = vadd.f32 %v300, %v624
        %v626 = vpop.f32.mrb[0].mxu0
        %v627 = vpop.f32.mrb[0].mxu0
        %v628 = vadd.f32 %v300, %v627
        %v629 = vpop.f32.mrb[0].mxu0
        %630 = vmatprep.mubr.bf16.mxu0 0
        %631 = vmatmul.mubr.bf16.gmra.mrb[0].mxu0 %v393
        %v632 = vpop.f32.mrb[0].mxu0
        %v633 = vadd.f32 %v300, %v632
        %v634 = vpop.f32.mrb[0].mxu0
        %v635 = vpop.f32.mrb[0].mxu0
        %v636 = vadd.f32 %v300, %v635
        %v637 = vpop.f32.mrb[0].mxu0
        %638 = vmatprep.mubr.bf16.mxu0 0
        %639 = vmatmul.mubr.bf16.gmra.mrb[0].mxu0 %v394
        %v640 = vpop.f32.mrb[0].mxu0
        %v641 = vadd.f32 %v300, %v640
        %v642 = vpop.f32.mrb[0].mxu0
        %v643 = vpop.f32.mrb[0].mxu0
        %v644 = vpop.f32.mrb[0].mxu0
        %645 = vdwg.mxu0
        %vm646 = vcmp.ge.f32.partialorder %v497, 0.0
        %vm647 = vcmp.ge.f32.partialorder %v500, 0.0
        %vm648 = vcmp.ge.f32.partialorder %v505, 0.0
        %vm649 = vcmp.ge.f32.partialorder %v508, 0.0
        %vm650 = vcmp.ge.f32.partialorder %v513, 0.0
        %vm651 = vcmp.ge.f32.partialorder %v516, 0.0
        %vm652 = vcmp.ge.f32.partialorder %v521, 0.0
        %vm653 = vcmp.ge.f32.partialorder %v524, 0.0
        %vm654 = vcmp.ge.f32.partialorder %v529, 0.0
        %vm655 = vcmp.ge.f32.partialorder %v532, 0.0
        %vm656 = vcmp.ge.f32.partialorder %v537, 0.0
        %vm657 = vcmp.ge.f32.partialorder %v540, 0.0
        %vm658 = vcmp.ge.f32.partialorder %v545, 0.0
        %vm659 = vcmp.ge.f32.partialorder %v548, 0.0
        %vm660 = vcmp.ge.f32.partialorder %v553, 0.0
        %vm661 = vcmp.ge.f32.partialorder %v556, 0.0
        %vm662 = vcmp.ge.f32.partialorder %v561, 0.0
        %vm663 = vcmp.ge.f32.partialorder %v564, 0.0
        %vm664 = vcmp.ge.f32.partialorder %v569, 0.0
        %vm665 = vcmp.ge.f32.partialorder %v572, 0.0
        %vm666 = vcmp.ge.f32.partialorder %v577, 0.0
        %vm667 = vcmp.ge.f32.partialorder %v580, 0.0
        %vm668 = vcmp.ge.f32.partialorder %v585, 0.0
        %vm669 = vcmp.ge.f32.partialorder %v588, 0.0
        %vm670 = vcmp.ge.f32.partialorder %v593, 0.0
        %vm671 = vcmp.ge.f32.partialorder %v596, 0.0
        %vm672 = vcmp.ge.f32.partialorder %v601, 0.0
        %vm673 = vcmp.ge.f32.partialorder %v604, 0.0
        %vm674 = vcmp.ge.f32.partialorder %v609, 0.0
        %vm675 = vcmp.ge.f32.partialorder %v612, 0.0
        %vm676 = vcmp.ge.f32.partialorder %v617, 0.0
        %vm677 = vcmp.ge.f32.partialorder %v620, 0.0
        %vm678 = vcmp.ge.f32.partialorder %v625, 0.0
        %vm679 = vcmp.ge.f32.partialorder %v628, 0.0
        %vm680 = vcmp.ge.f32.partialorder %v633, 0.0
        %vm681 = vcmp.ge.f32.partialorder %v636, 0.0
        %vm682 = vcmp.ge.f32.partialorder %v641, 0.0
        %v683 = vld [vmem:[#allocation6] sm:$0x1]
        %v685 = vlaneseq
        %v686 = vshrl.u32 %v685, 7
        %v687 = vsub.s32 0, %v686
        %v688 = vrot.slane %v683, %v687
        %v690 = vmul.f32 %v688, %v497
        %v691 = vmul.f32 %v688, %v500
        %v692 = vmul.f32 %v688, %v505
        %v693 = vmul.f32 %v688, %v508
        %v694 = vmul.f32 %v688, %v513
        %v695 = vmul.f32 %v688, %v516
        %v696 = vmul.f32 %v688, %v521
        %v697 = vmul.f32 %v688, %v524
        %v698 = vmul.f32 %v688, %v529
        %v699 = vmul.f32 %v688, %v532
        %v700 = vmul.f32 %v688, %v537
        %v701 = vmul.f32 %v688, %v540
        %v702 = vmul.f32 %v688, %v545
        %v703 = vmul.f32 %v688, %v548
        %v704 = vmul.f32 %v688, %v553
        %v705 = vmul.f32 %v688, %v556
        %v706 = vmul.f32 %v688, %v561
        %v707 = vmul.f32 %v688, %v564
        %v708 = vmul.f32 %v688, %v569
        %v709 = vmul.f32 %v688, %v572
        %v710 = vmul.f32 %v688, %v577
        %v711 = vmul.f32 %v688, %v580
        %v712 = vmul.f32 %v688, %v585
        %v713 = vmul.f32 %v688, %v588
        %v714 = vmul.f32 %v688, %v593
        %v715 = vmul.f32 %v688, %v596
        %v716 = vmul.f32 %v688, %v601
        %v717 = vmul.f32 %v688, %v604
        %v718 = vmul.f32 %v688, %v609
        %v719 = vmul.f32 %v688, %v612
        %v720 = vmul.f32 %v688, %v617
        %v721 = vmul.f32 %v688, %v620
        %v722 = vmul.f32 %v688, %v625
        %v723 = vmul.f32 %v688, %v628
        %v724 = vmul.f32 %v688, %v633
        %v725 = vmul.f32 %v688, %v636
        %v726 = vmul.f32 %v688, %v641
        %v727 = vsel %vm646, %v497, %v690
        %v728 = vsel %vm647, %v500, %v691
        %v729 = vsel %vm648, %v505, %v692
        %v730 = vsel %vm649, %v508, %v693
        %v731 = vsel %vm650, %v513, %v694
        %v732 = vsel %vm651, %v516, %v695
        %v733 = vsel %vm652, %v521, %v696
        %v734 = vsel %vm653, %v524, %v697
        %v735 = vsel %vm654, %v529, %v698
        %v736 = vsel %vm655, %v532, %v699
        %v737 = vsel %vm656, %v537, %v700
        %v738 = vsel %vm657, %v540, %v701
        %v739 = vsel %vm658, %v545, %v702
        %v740 = vsel %vm659, %v548, %v703
        %v741 = vsel %vm660, %v553, %v704
        %v742 = vsel %vm661, %v556, %v705
        %v743 = vsel %vm662, %v561, %v706
        %v744 = vsel %vm663, %v564, %v707
        %v745 = vsel %vm664, %v569, %v708
        %v746 = vsel %vm665, %v572, %v709
        %v747 = vsel %vm666, %v577, %v710
        %v748 = vsel %vm667, %v580, %v711
        %v749 = vsel %vm668, %v585, %v712
        %v750 = vsel %vm669, %v588, %v713
        %v751 = vsel %vm670, %v593, %v714
        %v752 = vsel %vm671, %v596, %v715
        %v753 = vsel %vm672, %v601, %v716
        %v754 = vsel %vm673, %v604, %v717
        %v755 = vsel %vm674, %v609, %v718
        %v756 = vsel %vm675, %v612, %v719
        %v757 = vsel %vm676, %v617, %v720
        %v758 = vsel %vm677, %v620, %v721
        %v759 = vsel %vm678, %v625, %v722
        %v760 = vsel %vm679, %v628, %v723
        %v761 = vsel %vm680, %v633, %v724
        %v762 = vsel %vm681, %v636, %v725
        %v763 = vsel %vm682, %v641, %v726
        %764 = vst [vmem:[%s239] sm:$0xff] %v727
        %765 = vst [vmem:[%s239 + $0x8] sm:$0xff] %v728
        %766 = vst [vmem:[%s239 + $0x10] sm:$0xff] %v729
        %767 = vst [vmem:[%s239 + $0x18] sm:$0xff] %v730
        %768 = vst [vmem:[%s239 + $0x20] sm:$0xff] %v731
        %769 = vst [vmem:[%s239 + $0x28] sm:$0xff] %v732
        %770 = vst [vmem:[%s239 + $0x30] sm:$0xff] %v733
        %771 = vst [vmem:[%s239 + $0x38] sm:$0xff] %v734
        %772 = vst [vmem:[%s239 + $0x40] sm:$0xff] %v735
        %773 = vst [vmem:[%s239 + $0x48] sm:$0xff] %v736
        %774 = vst [vmem:[%s239 + $0x50] sm:$0xff] %v737
        %775 = vst [vmem:[%s239 + $0x58] sm:$0xff] %v738
        %776 = vst [vmem:[%s239 + $0x60] sm:$0xff] %v739
        %777 = vst [vmem:[%s239 + $0x68] sm:$0xff] %v740
        %778 = vst [vmem:[%s239 + $0x70] sm:$0xff] %v741
        %779 = vst [vmem:[%s239 + $0x78] sm:$0xff] %v742
        %780 = vst [vmem:[%s239 + $0x80] sm:$0xff] %v743
        %781 = vst [vmem:[%s239 + $0x88] sm:$0xff] %v744
        %782 = vst [vmem:[%s239 + $0x90] sm:$0xff] %v745
        %783 = vst [vmem:[%s239 + $0x98] sm:$0xff] %v746
        %784 = vst [vmem:[%s239 + $0xa0] sm:$0xff] %v747
        %785 = vst [vmem:[%s239 + $0xa8] sm:$0xff] %v748
        %786 = vst [vmem:[%s239 + $0xb0] sm:$0xff] %v749
        %787 = vst [vmem:[%s239 + $0xb8] sm:$0xff] %v750
        %788 = vst [vmem:[%s239 + $0xc0] sm:$0xff] %v751
        %789 = vst [vmem:[%s239 + $0xc8] sm:$0xff] %v752
        %790 = vst [vmem:[%s239 + $0xd0] sm:$0xff] %v753
        %791 = vst [vmem:[%s239 + $0xd8] sm:$0xff] %v754
        %792 = vst [vmem:[%s239 + $0xe0] sm:$0xff] %v755
        %793 = vst [vmem:[%s239 + $0xe8] sm:$0xff] %v756
        %794 = vst [vmem:[%s239 + $0xf0] sm:$0xff] %v757
        %795 = vst [vmem:[%s239 + $0xf8] sm:$0xff] %v758
        %796 = vst [vmem:[%s239 + $0x100] sm:$0xff] %v759
        %797 = vst [vmem:[%s239 + $0x108] sm:$0xff] %v760
        %798 = vst [vmem:[%s239 + $0x110] sm:$0xff] %v761
        %799 = vst [vmem:[%s239 + $0x118] sm:$0xff] %v762
        %800 = vst [vmem:[%s239 + $0x120] sm:$0xff] %v763
        %s801 = smul.u32 37, %s17
        %p802 = scmp.lt.s32.totalorder %s801, 73
        %s803 = scalar_select %p802, %s801, 73
        %s804 = smul.addr %s803, 8
        %s805 = scalar_lea.vmem %s4, %s804
        // Predicated region
        $region49: #{generator_forward.6} parent=35 // pred_check
          %p806 = pneg %p124
        $region50: #{generator_forward.6} parent=35 // pred_check_branch
          %808 = sbr.rel (%p806) target = $region52
        $region51: #{generator_forward.6} parent=35 // pred_region
          %s809 = smul.u32 37, %s17
        $region52: #{generator_forward.6} parent=35 // pred_fallthru
          _
      $region36: #{generator_forward.6} parent=5 // pred_fallthru
        _
      %p810 = scmp.le.s32.totalorder 2, %s12
      // Predicated region
      $region53: #{generator_forward.6} parent=5 // pred_check
        %p811 = pneg %p810
      $region54: #{generator_forward.6} parent=5 // pred_check_branch
        %813 = sbr.rel (%p811) target = $region56
      $region55: #{generator_forward.6} parent=5 // pred_region
        %s814 = ssub.s32 %s12, 2
        // Predicated region
        $region57: #{generator_forward.6} parent=55 // pred_check
          %p815 = pneg %p130
        $region58: #{generator_forward.6} parent=55 // pred_check_branch
          %817 = sbr.rel (%p815) target = $region60
        $region59: #{generator_forward.6} parent=55 // pred_region
          %s818 = smul.u32 37, %s18
          %p819 = scmp.lt.s32.totalorder %s818, 73
          %s820 = scalar_select %p819, %s818, 73
          %s821 = smul.addr %s820, 8
          %s822 = scalar_lea.vmem %s4, %s821
        $region60: #{generator_forward.6} parent=55 // pred_fallthru
          _
      $region56: #{generator_forward.6} parent=5 // pred_fallthru
        _
    $region6: #{generator_forward.6} parent=1 // loop_footer
      %s16 = sadd.s32 1, %s12
    $region7: #{generator_forward.6} parent=1 // loop_footer_branch
      %11 = sbr.rel target = $region3
    $region8: #{generator_forward.6} parent=1 // loop_exit
      _
    %823 = vsyncpa [#allocation3], 1
    %s824 = scalar_lea.sflag [#allocation3], 1
    %825 = vsyncpa %s824, 1
    %826 = vsyncpa [#allocation5], 1

// kernel: generator_forward.7
$region0: #{generator_forward.7}
  #allocation0 [shape = 'u32[]', space=smem, size = 0x4, offset = 0x4, fixed_abs, tag = 'smem constant byte address 0x4 - core index']
  #allocation1 [shape = 'u32[144,128]{1,0:T(1,128)}', space=vmem, size = 0x12000, scoped, tag = 'internal scratch']
  %s0 = inlined_call_operand.vmem [shape: bf16[1568,784], index: 0, kind: input, shape index: {}]
  %s1 = inlined_call_operand.vmem [shape: bf16[784,128], index: 1, kind: input, shape index: {}]
  %s2 = inlined_call_operand.vmem [shape: f32[1,128], index: 2, kind: input, shape index: {}]
  %s3 = inlined_call_operand.vmem [shape: f32[1,128], index: 3, kind: input, shape index: {}]
  %s4 = inlined_call_operand.vmem [shape: f32[1568,128], index: 4, kind: output, shape index: {}]
  %s5 = sld [smem:[#allocation0]]
  $region49: #{generator_forward.7} parent=0
    _
  %s7 = ssub.s32 1, %s5
  %s8 = scalar_select 0, %s7, %s5
  loop: start=0, step=1, limit=6
  $region2: #{generator_forward.7} parent=0 // loop_pre_header
    _
  $region3: #{generator_forward.7} parent=0 // loop_header
    %s10 = sphi 0, %s14
    %p11 = scmp.ge.s32.totalorder %s10, 6
    %s20 = sphi 0, %s22
    %s23 = sphi 0, %s20
    %s24 = sphi 0, %s23
    %s40 = sphi 0, %s24
    %s44 = sphi 0, %s44
    %s46 = sphi 0, %s44
    %s47 = sphi 0, %s46
    %s61 = sphi 0, %s47
    %s65 = sphi 0, %s65
    %s67 = sphi 0, %s65
    %s68 = sphi 0, %s67
    %s82 = sphi 0, %s68
    %s86 = sphi 0, %s86
    %s88 = sphi 0, %s86
    %s89 = sphi 0, %s88
    %s103 = sphi 0, %s89
    %s109 = sphi 0, %s111
    %s112 = sphi 0, %s109
    %s113 = sphi 0, %s112
    %s129 = sphi 0, %s113
  $region4: #{generator_forward.7} parent=0 // loop_header_branch
    %13 = sbr.rel (%p11) target = $region8
  $region5: #{generator_forward.7} parent=0 // loop_body
    %s15 = ssub.s32 %s10, 1
    %s16 = ssub.s32 %s10, 2
    %s17 = sadd.s32 %s10, 1
    %s18 = ssub.s32 %s10, %s17
    %p19 = scmp.eq.s32.totalorder %s18, 0
    %s21 = sadd.s32 %s20, 1
    %s22 = scalar_select %p19, %s20, %s21
    %p25 = pneg %p19
    %p26 = scmp.eq.s32.totalorder %s10, 3
    %p27 = por %p25, %p26
    %p28 = scmp.ne.s32.totalorder %s20, %s23
    %p29 = scmp.eq.s32.totalorder %s10, 0
    %p30 = por %p28, %p29
    %p31 = scmp.ne.s32.totalorder %s20, %s23
    %p32 = scmp.eq.s32.totalorder %s15, 3
    %p33 = por %p31, %p32
    %p34 = scmp.ne.s32.totalorder %s23, %s24
    %p35 = scmp.eq.s32.totalorder %s15, 0
    %p36 = por %p34, %p35
    %p37 = scmp.ne.s32.totalorder %s23, %s24
    %p38 = scmp.eq.s32.totalorder %s16, 3
    %p39 = por %p37, %p38
    %p41 = scmp.ne.s32.totalorder %s24, %s40
    %p42 = scmp.eq.s32.totalorder %s16, 0
    %p43 = por %p41, %p42
    %s45 = sadd.s32 %s44, 1
    %p48 = scmp.eq.s32.totalorder %s10, 3
    %p49 = scmp.ne.s32.totalorder %s44, %s46
    %p50 = scmp.eq.s32.totalorder %s10, 0
    %p51 = por %p49, %p50
    %p52 = scmp.ne.s32.totalorder %s44, %s46
    %p53 = scmp.eq.s32.totalorder %s15, 3
    %p54 = por %p52, %p53
    %p55 = scmp.ne.s32.totalorder %s46, %s47
    %p56 = scmp.eq.s32.totalorder %s15, 0
    %p57 = por %p55, %p56
    %p58 = scmp.ne.s32.totalorder %s46, %s47
    %p59 = scmp.eq.s32.totalorder %s16, 3
    %p60 = por %p58, %p59
    %p62 = scmp.ne.s32.totalorder %s47, %s61
    %p63 = scmp.eq.s32.totalorder %s16, 0
    %p64 = por %p62, %p63
    %s66 = sadd.s32 %s65, 1
    %p69 = scmp.eq.s32.totalorder %s10, 3
    %p70 = scmp.ne.s32.totalorder %s65, %s67
    %p71 = scmp.eq.s32.totalorder %s10, 0
    %p72 = por %p70, %p71
    %p73 = scmp.ne.s32.totalorder %s65, %s67
    %p74 = scmp.eq.s32.totalorder %s15, 3
    %p75 = por %p73, %p74
    %p76 = scmp.ne.s32.totalorder %s67, %s68
    %p77 = scmp.eq.s32.totalorder %s15, 0
    %p78 = por %p76, %p77
    %p79 = scmp.ne.s32.totalorder %s67, %s68
    %p80 = scmp.eq.s32.totalorder %s16, 3
    %p81 = por %p79, %p80
    %p83 = scmp.ne.s32.totalorder %s68, %s82
    %p84 = scmp.eq.s32.totalorder %s16, 0
    %p85 = por %p83, %p84
    %s87 = sadd.s32 %s86, 1
    %p90 = scmp.eq.s32.totalorder %s10, 3
    %p91 = scmp.ne.s32.totalorder %s86, %s88
    %p92 = scmp.eq.s32.totalorder %s10, 0
    %p93 = por %p91, %p92
    %p94 = scmp.ne.s32.totalorder %s86, %s88
    %p95 = scmp.eq.s32.totalorder %s15, 3
    %p96 = por %p94, %p95
    %p97 = scmp.ne.s32.totalorder %s88, %s89
    %p98 = scmp.eq.s32.totalorder %s15, 0
    %p99 = por %p97, %p98
    %p100 = scmp.ne.s32.totalorder %s88, %s89
    %p101 = scmp.eq.s32.totalorder %s16, 3
    %p102 = por %p100, %p101
    %p104 = scmp.ne.s32.totalorder %s89, %s103
    %p105 = scmp.eq.s32.totalorder %s16, 0
    %p106 = por %p104, %p105
    %s107 = ssub.s32 %s10, %s17
    %p108 = scmp.eq.s32.totalorder %s107, 0
    %s110 = sadd.s32 %s109, 1
    %s111 = scalar_select %p108, %s109, %s110
    %p114 = pneg %p108
    %p115 = scmp.eq.s32.totalorder %s10, 3
    %p116 = por %p114, %p115
    %p117 = scmp.ne.s32.totalorder %s109, %s112
    %p118 = scmp.eq.s32.totalorder %s10, 0
    %p119 = por %p117, %p118
    %p120 = scmp.ne.s32.totalorder %s109, %s112
    %p121 = scmp.eq.s32.totalorder %s15, 3
    %p122 = por %p120, %p121
    %p123 = scmp.ne.s32.totalorder %s112, %s113
    %p124 = scmp.eq.s32.totalorder %s15, 0
    %p125 = por %p123, %p124
    %p126 = scmp.ne.s32.totalorder %s112, %s113
    %p127 = scmp.eq.s32.totalorder %s16, 3
    %p128 = por %p126, %p127
    %p130 = scmp.ne.s32.totalorder %s113, %s129
    %p131 = scmp.eq.s32.totalorder %s16, 0
    %p132 = por %p130, %p131
    %p133 = scmp.le.s32.totalorder 1, %s10
    %p134 = scmp.lt.s32.totalorder %s10, 5
    %p135 = pnand %p133, %p134
    %p136 = pneg %p135
    // Predicated region
    $region9: #{generator_forward.7} parent=5 // pred_check
      _
    $region10: #{generator_forward.7} parent=5 // pred_check_branch
      %138 = sbr.rel (%p135) target = $region12
    $region11: #{generator_forward.7} parent=5 // pred_region
      %s139 = ssub.s32 %s10, 1
      // Predicated region
      $region13: #{generator_forward.7} parent=11 // pred_check
        %p140 = pneg %p57
      $region14: #{generator_forward.7} parent=11 // pred_check_branch
        %142 = sbr.rel (%p140) target = $region16
      $region15: #{generator_forward.7} parent=11 // pred_region
        _
      $region16: #{generator_forward.7} parent=11 // pred_fallthru
        _
      // Predicated region
      $region17: #{generator_forward.7} parent=11 // pred_check
        %p143 = pneg %p78
      $region18: #{generator_forward.7} parent=11 // pred_check_branch
        %145 = sbr.rel (%p143) target = $region20
      $region19: #{generator_forward.7} parent=11 // pred_region
        _
      $region20: #{generator_forward.7} parent=11 // pred_fallthru
        _
      // Predicated region
      $region21: #{generator_forward.7} parent=11 // pred_check
        %p146 = pneg %p99
      $region22: #{generator_forward.7} parent=11 // pred_check_branch
        %148 = sbr.rel (%p146) target = $region24
      $region23: #{generator_forward.7} parent=11 // pred_region
        _
      $region24: #{generator_forward.7} parent=11 // pred_fallthru
        _
    $region12: #{generator_forward.7} parent=5 // pred_fallthru
      _
    %p149 = scmp.lt.s32.totalorder %s10, 4
    // Predicated region
    $region25: #{generator_forward.7} parent=5 // pred_check
      %p150 = pneg %p149
    $region26: #{generator_forward.7} parent=5 // pred_check_branch
      %152 = sbr.rel (%p150) target = $region28
    $region27: #{generator_forward.7} parent=5 // pred_region
      // Predicated region
      $region29: #{generator_forward.7} parent=27 // pred_check
        %p153 = pneg %p30
      $region30: #{generator_forward.7} parent=27 // pred_check_branch
        %155 = sbr.rel (%p153) target = $region32
      $region31: #{generator_forward.7} parent=27 // pred_region
        %s156 = smul.u32 49, %s10
        %p157 = scmp.lt.s32.totalorder %s156, 195
        %s158 = scalar_select %p157, %s156, 195
        %s159 = smul.addr %s158, 7
        %s160 = smul.addr %s159, 4
        %s161 = scalar_lea.vmem %s0, %s160
        %s162 = smul.u32 49, %s10
      $region32: #{generator_forward.7} parent=27 // pred_fallthru
        _
    $region28: #{generator_forward.7} parent=5 // pred_fallthru
      _
    %p163 = scmp.le.s32.totalorder 1, %s10
    %p164 = scmp.lt.s32.totalorder %s10, 5
    %p165 = pnand %p163, %p164
    %p166 = pneg %p165
    // Predicated region
    $region33: #{generator_forward.7} parent=5 // pred_check
      _
    $region34: #{generator_forward.7} parent=5 // pred_check_branch
      %168 = sbr.rel (%p165) target = $region36
    $region35: #{generator_forward.7} parent=5 // pred_region
      %s169 = ssub.s32 %s10, 1
      %s170 = smul.u32 49, %s15
      %p171 = scmp.lt.s32.totalorder %s170, 195
      %s172 = scalar_select %p171, %s170, 195
      %s173 = smul.addr %s172, 7
      %s174 = smul.addr %s173, 4
      %s175 = scalar_lea.vmem %s0, %s174
      %p176 = pneg %p36
      %p177 = pneg %p33
      %p178 = pneg %p57
      %p179 = pneg %p54
      %p180 = pneg %p78
      %p181 = pneg %p75
      %p182 = pneg %p99
      %p183 = pneg %p96
      %p184 = pneg %p125
      %p185 = pneg %p122
      %s186 = smul.u32 49, %s15
      %p187 = scmp.lt.s32.totalorder %s186, 195
      %s188 = scalar_select %p187, %s186, 195
      %s189 = smul.addr %s188, 8
      %s190 = scalar_lea.vmem %s4, %s189
      %s191 = smul.u32 49, %s15
      %p192 = scmp.lt.s32.totalorder %s191, 195
      %s193 = scalar_select %p192, %s191, 195
      %s194 = smul.addr %s193, 7
      %s195 = smul.addr %s194, 4
      %s196 = scalar_lea.vmem %s0, %s195
      %s197 = smul.u32 49, %s15
      %s198 = smul.u32 49, %s15
      %p199 = scmp.lt.s32.totalorder %s198, 195
      %s200 = scalar_select %p199, %s198, 195
      %s201 = smul.addr %s200, 8
      %s202 = scalar_lea.vmem %s4, %s201
      %s203 = smul.u32 49, %s15
      %v205 = vld [vmem:[%s196] sm:$0xff]
      %v206 = vld [vmem:[%s196 + $0x8] sm:$0xff]
      %v207 = vld [vmem:[%s196 + $0x10] sm:$0xff]
      %v208 = vld [vmem:[%s196 + $0x18] sm:$0xf]
      %v209 = vld [vmem:[%s196 + $0x1c] sm:$0xff]
      %v210 = vld [vmem:[%s196 + $0x24] sm:$0xff]
      %v211 = vld [vmem:[%s196 + $0x2c] sm:$0xff]
      %v212 = vld [vmem:[%s196 + $0x34] sm:$0xf]
      %v213 = vld [vmem:[%s196 + $0x38] sm:$0xff]
      %v214 = vld [vmem:[%s196 + $0x40] sm:$0xff]
      %v215 = vld [vmem:[%s196 + $0x48] sm:$0xff]
      %v216 = vld [vmem:[%s196 + $0x50] sm:$0xf]
      %v217 = vld [vmem:[%s196 + $0x54] sm:$0xff]
      %v218 = vld [vmem:[%s196 + $0x5c] sm:$0xff]
      %v219 = vld [vmem:[%s196 + $0x64] sm:$0xff]
      %v220 = vld [vmem:[%s196 + $0x6c] sm:$0xf]
      %v221 = vld [vmem:[%s196 + $0x70] sm:$0xff]
      %v222 = vld [vmem:[%s196 + $0x78] sm:$0xff]
      %v223 = vld [vmem:[%s196 + $0x80] sm:$0xff]
      %v224 = vld [vmem:[%s196 + $0x88] sm:$0xf]
      %v225 = vld [vmem:[%s196 + $0x8c] sm:$0xff]
      %v226 = vld [vmem:[%s196 + $0x94] sm:$0xff]
      %v227 = vld [vmem:[%s196 + $0x9c] sm:$0xff]
      %v228 = vld [vmem:[%s196 + $0xa4] sm:$0xf]
      %v229 = vld [vmem:[%s196 + $0xa8] sm:$0xff]
      %v230 = vld [vmem:[%s196 + $0xb0] sm:$0xff]
      %v231 = vld [vmem:[%s196 + $0xb8] sm:$0xff]
      %v232 = vld [vmem:[%s196 + $0xc0] sm:$0xf]
      %v233 = vld [vmem:[%s196 + $0xc4] sm:$0xff]
      %v234 = vld [vmem:[%s196 + $0xcc] sm:$0xff]
      %v235 = vld [vmem:[%s196 + $0xd4] sm:$0xff]
      %v236 = vld [vmem:[%s196 + $0xdc] sm:$0xf]
      %v237 = vld [vmem:[%s196 + $0xe0] sm:$0xff]
      %v238 = vld [vmem:[%s196 + $0xe8] sm:$0xff]
      %v239 = vld [vmem:[%s196 + $0xf0] sm:$0xff]
      %v240 = vld [vmem:[%s196 + $0xf8] sm:$0xf]
      %v241 = vld [vmem:[%s196 + $0xfc] sm:$0xff]
      %v242 = vld [vmem:[%s196 + $0x104] sm:$0xff]
      %v243 = vld [vmem:[%s196 + $0x10c] sm:$0xff]
      %v244 = vld [vmem:[%s196 + $0x114] sm:$0xf]
      %v245 = vld [vmem:[%s196 + $0x118] sm:$0xff]
      %v246 = vld [vmem:[%s196 + $0x120] sm:$0xff]
      %v247 = vld [vmem:[%s196 + $0x128] sm:$0xff]
      %v248 = vld [vmem:[%s196 + $0x130] sm:$0xf]
      %v249 = vld [vmem:[%s196 + $0x134] sm:$0xff]
      %v250 = vld [vmem:[%s196 + $0x13c] sm:$0xff]
      %v251 = vld [vmem:[%s196 + $0x144] sm:$0xff]
      %v252 = vld [vmem:[%s196 + $0x14c] sm:$0xf]
      %v253 = vld [vmem:[%s196 + $0x150] sm:$0xff]
      %v254 = vld [vmem:[%s196 + $0x158] sm:$0xff]
      %v255 = vld [vmem:[%s196 + $0x160] sm:$0xff]
      %v256 = vld [vmem:[%s196 + $0x168] sm:$0xf]
      %v257 = vld [vmem:[%s196 + $0x16c] sm:$0xff]
      %v258 = vld [vmem:[%s196 + $0x174] sm:$0xff]
      %v259 = vld [vmem:[%s196 + $0x17c] sm:$0xff]
      %v260 = vld [vmem:[%s196 + $0x184] sm:$0xf]
      %v261 = vld [vmem:[%s196 + $0x188] sm:$0xff]
      %v262 = vld [vmem:[%s196 + $0x190] sm:$0xff]
      %v263 = vld [vmem:[%s196 + $0x198] sm:$0xff]
      %v264 = vld [vmem:[%s196 + $0x1a0] sm:$0xf]
      %v265 = vld [vmem:[%s196 + $0x1a4] sm:$0xff]
      %v266 = vld [vmem:[%s196 + $0x1ac] sm:$0xff]
      %v267 = vld [vmem:[%s196 + $0x1b4] sm:$0xff]
      %v268 = vld [vmem:[%s196 + $0x1bc] sm:$0xf]
      %v269 = vld [vmem:[%s196 + $0x1c0] sm:$0xff]
      %v270 = vld [vmem:[%s196 + $0x1c8] sm:$0xff]
      %v271 = vld [vmem:[%s196 + $0x1d0] sm:$0xff]
      %v272 = vld [vmem:[%s196 + $0x1d8] sm:$0xf]
      %v273 = vld [vmem:[%s196 + $0x1dc] sm:$0xff]
      %v274 = vld [vmem:[%s196 + $0x1e4] sm:$0xff]
      %v275 = vld [vmem:[%s196 + $0x1ec] sm:$0xff]
      %v276 = vld [vmem:[%s196 + $0x1f4] sm:$0xf]
      %v277 = vld [vmem:[%s196 + $0x1f8] sm:$0xff]
      %v278 = vld [vmem:[%s196 + $0x200] sm:$0xff]
      %v279 = vld [vmem:[%s196 + $0x208] sm:$0xff]
      %v280 = vld [vmem:[%s196 + $0x210] sm:$0xf]
      %v281 = vld [vmem:[%s196 + $0x214] sm:$0xff]
      %v282 = vld [vmem:[%s196 + $0x21c] sm:$0xff]
      %v283 = vld [vmem:[%s196 + $0x224] sm:$0xff]
      %v284 = vld [vmem:[%s196 + $0x22c] sm:$0xf]
      %v285 = vld [vmem:[%s196 + $0x230] sm:$0xff]
      %v286 = vld [vmem:[%s196 + $0x238] sm:$0xff]
      %v287 = vld [vmem:[%s196 + $0x240] sm:$0xff]
      %v288 = vld [vmem:[%s196 + $0x248] sm:$0xf]
      %v289 = vld [vmem:[%s196 + $0x24c] sm:$0xff]
      %v290 = vld [vmem:[%s196 + $0x254] sm:$0xff]
      %v291 = vld [vmem:[%s196 + $0x25c] sm:$0xff]
      %v292 = vld [vmem:[%s196 + $0x264] sm:$0xf]
      %v293 = vld [vmem:[%s196 + $0x268] sm:$0xff]
      %v294 = vld [vmem:[%s196 + $0x270] sm:$0xff]
      %v295 = vld [vmem:[%s196 + $0x278] sm:$0xff]
      %v296 = vld [vmem:[%s196 + $0x280] sm:$0xf]
      %v297 = vld [vmem:[%s196 + $0x284] sm:$0xff]
      %v298 = vld [vmem:[%s196 + $0x28c] sm:$0xff]
      %v299 = vld [vmem:[%s196 + $0x294] sm:$0xff]
      %v300 = vld [vmem:[%s196 + $0x29c] sm:$0xf]
      %v301 = vld [vmem:[%s196 + $0x2a0] sm:$0xff]
      %v302 = vld [vmem:[%s196 + $0x2a8] sm:$0xff]
      %v303 = vld [vmem:[%s196 + $0x2b0] sm:$0xff]
      %v304 = vld [vmem:[%s196 + $0x2b8] sm:$0xf]
      %v305 = vld [vmem:[%s196 + $0x2bc] sm:$0xff]
      %v306 = vld [vmem:[%s196 + $0x2c4] sm:$0xff]
      %v307 = vld [vmem:[%s196 + $0x2cc] sm:$0xff]
      %v308 = vld [vmem:[%s196 + $0x2d4] sm:$0xf]
      %v309 = vld [vmem:[%s196 + $0x2d8] sm:$0xff]
      %v310 = vld [vmem:[%s196 + $0x2e0] sm:$0xff]
      %v311 = vld [vmem:[%s196 + $0x2e8] sm:$0xff]
      %v312 = vld [vmem:[%s196 + $0x2f0] sm:$0xf]
      %v313 = vld [vmem:[%s196 + $0x2f4] sm:$0xff]
      %v314 = vld [vmem:[%s196 + $0x2fc] sm:$0xff]
      %v315 = vld [vmem:[%s196 + $0x304] sm:$0xff]
      %v316 = vld [vmem:[%s196 + $0x30c] sm:$0xf]
      %v317 = vld [vmem:[%s196 + $0x310] sm:$0xff]
      %v318 = vld [vmem:[%s196 + $0x318] sm:$0xff]
      %v319 = vld [vmem:[%s196 + $0x320] sm:$0xff]
      %v320 = vld [vmem:[%s196 + $0x328] sm:$0xf]
      %v321 = vld [vmem:[%s196 + $0x32c] sm:$0xff]
      %v322 = vld [vmem:[%s196 + $0x334] sm:$0xff]
      %v323 = vld [vmem:[%s196 + $0x33c] sm:$0xff]
      %v324 = vld [vmem:[%s196 + $0x344] sm:$0xf]
      %v325 = vld [vmem:[%s196 + $0x348] sm:$0xff]
      %v326 = vld [vmem:[%s196 + $0x350] sm:$0xff]
      %v327 = vld [vmem:[%s196 + $0x358] sm:$0xff]
      %v328 = vld [vmem:[%s196 + $0x360] sm:$0xf]
      %v329 = vld [vmem:[%s196 + $0x364] sm:$0xff]
      %v330 = vld [vmem:[%s196 + $0x36c] sm:$0xff]
      %v331 = vld [vmem:[%s196 + $0x374] sm:$0xff]
      %v332 = vld [vmem:[%s196 + $0x37c] sm:$0xf]
      %v333 = vld [vmem:[%s196 + $0x380] sm:$0xff]
      %v334 = vld [vmem:[%s196 + $0x388] sm:$0xff]
      %v335 = vld [vmem:[%s196 + $0x390] sm:$0xff]
      %v336 = vld [vmem:[%s196 + $0x398] sm:$0xf]
      %v337 = vld [vmem:[%s196 + $0x39c] sm:$0xff]
      %v338 = vld [vmem:[%s196 + $0x3a4] sm:$0xff]
      %v339 = vld [vmem:[%s196 + $0x3ac] sm:$0xff]
      %v340 = vld [vmem:[%s196 + $0x3b4] sm:$0xf]
      %v341 = vld [vmem:[%s196 + $0x3b8] sm:$0xff]
      %v342 = vld [vmem:[%s196 + $0x3c0] sm:$0xff]
      %v343 = vld [vmem:[%s196 + $0x3c8] sm:$0xff]
      %v344 = vld [vmem:[%s196 + $0x3d0] sm:$0xf]
      %v345 = vld [vmem:[%s196 + $0x3d4] sm:$0xff]
      %v346 = vld [vmem:[%s196 + $0x3dc] sm:$0xff]
      %v347 = vld [vmem:[%s196 + $0x3e4] sm:$0xff]
      %v348 = vld [vmem:[%s196 + $0x3ec] sm:$0xf]
      %v349 = vld [vmem:[%s196 + $0x3f0] sm:$0xff]
      %v350 = vld [vmem:[%s196 + $0x3f8] sm:$0xff]
      %v351 = vld [vmem:[%s196 + $0x400] sm:$0xff]
      %v352 = vld [vmem:[%s196 + $0x408] sm:$0xf]
      %v353 = vld [vmem:[%s196 + $0x40c] sm:$0xff]
      %v354 = vld [vmem:[%s196 + $0x414] sm:$0xff]
      %v355 = vld [vmem:[%s196 + $0x41c] sm:$0xff]
      %v356 = vld [vmem:[%s196 + $0x424] sm:$0xf]
      %v357 = vld [vmem:[%s196 + $0x428] sm:$0xff]
      %v358 = vld [vmem:[%s196 + $0x430] sm:$0xff]
      %v359 = vld [vmem:[%s196 + $0x438] sm:$0xff]
      %v360 = vld [vmem:[%s196 + $0x440] sm:$0xf]
      %v361 = vld [vmem:[%s196 + $0x444] sm:$0xff]
      %v362 = vld [vmem:[%s196 + $0x44c] sm:$0xff]
      %v363 = vld [vmem:[%s196 + $0x454] sm:$0xff]
      %v364 = vld [vmem:[%s196 + $0x45c] sm:$0xf]
      %v365 = vld [vmem:[%s196 + $0x460] sm:$0xff]
      %v366 = vld [vmem:[%s196 + $0x468] sm:$0xff]
      %v367 = vld [vmem:[%s196 + $0x470] sm:$0xff]
      %v368 = vld [vmem:[%s196 + $0x478] sm:$0xf]
      %v369 = vld [vmem:[%s196 + $0x47c] sm:$0xff]
      %v370 = vld [vmem:[%s196 + $0x484] sm:$0xff]
      %v371 = vld [vmem:[%s196 + $0x48c] sm:$0xff]
      %v372 = vld [vmem:[%s196 + $0x494] sm:$0xf]
      %v373 = vld [vmem:[%s196 + $0x498] sm:$0xff]
      %v374 = vld [vmem:[%s196 + $0x4a0] sm:$0xff]
      %v375 = vld [vmem:[%s196 + $0x4a8] sm:$0xff]
      %v376 = vld [vmem:[%s196 + $0x4b0] sm:$0xf]
      %v377 = vld [vmem:[%s196 + $0x4b4] sm:$0xff]
      %v378 = vld [vmem:[%s196 + $0x4bc] sm:$0xff]
      %v379 = vld [vmem:[%s196 + $0x4c4] sm:$0xff]
      %v380 = vld [vmem:[%s196 + $0x4cc] sm:$0xf]
      %v381 = vld [vmem:[%s196 + $0x4d0] sm:$0xff]
      %v382 = vld [vmem:[%s196 + $0x4d8] sm:$0xff]
      %v383 = vld [vmem:[%s196 + $0x4e0] sm:$0xff]
      %v384 = vld [vmem:[%s196 + $0x4e8] sm:$0xf]
      %v385 = vld [vmem:[%s196 + $0x4ec] sm:$0xff]
      %v386 = vld [vmem:[%s196 + $0x4f4] sm:$0xff]
      %v387 = vld [vmem:[%s196 + $0x4fc] sm:$0xff]
      %v388 = vld [vmem:[%s196 + $0x504] sm:$0xf]
      %v389 = vld [vmem:[%s196 + $0x508] sm:$0xff]
      %v390 = vld [vmem:[%s196 + $0x510] sm:$0xff]
      %v391 = vld [vmem:[%s196 + $0x518] sm:$0xff]
      %v392 = vld [vmem:[%s196 + $0x520] sm:$0xf]
      %v393 = vld [vmem:[%s196 + $0x524] sm:$0xff]
      %v394 = vld [vmem:[%s196 + $0x52c] sm:$0xff]
      %v395 = vld [vmem:[%s196 + $0x534] sm:$0xff]
      %v396 = vld [vmem:[%s196 + $0x53c] sm:$0xf]
      %v397 = vld [vmem:[%s196 + $0x540] sm:$0xff]
      %v398 = vld [vmem:[%s196 + $0x548] sm:$0xff]
      %v399 = vld [vmem:[%s196 + $0x550] sm:$0xff]
      %v400 = vld [vmem:[%s196 + $0x558] sm:$0xf]
      %v401 = vld [vmem:[%s1] sm:$0xf]
      %v402 = vld [vmem:[%s1 + $0x4] sm:$0xf]
      %v403 = vld [vmem:[%s1 + $0x8] sm:$0xf]
      %v404 = vld [vmem:[%s1 + $0xc] sm:$0xf]
      %v405 = vld [vmem:[%s1 + $0x10] sm:$0xf]
      %v406 = vld [vmem:[%s1 + $0x14] sm:$0xf]
      %v407 = vld [vmem:[%s1 + $0x18] sm:$0xf]
      %v408 = vld [vmem:[%s1 + $0x1c] sm:$0xf]
      %v409 = vld [vmem:[%s1 + $0x20] sm:$0xf]
      %v410 = vld [vmem:[%s1 + $0x24] sm:$0xf]
      %v411 = vld [vmem:[%s1 + $0x28] sm:$0xf]
      %v412 = vld [vmem:[%s1 + $0x2c] sm:$0xf]
      %v413 = vld [vmem:[%s1 + $0x30] sm:$0xf]
      %v414 = vld [vmem:[%s1 + $0x34] sm:$0xf]
      %v415 = vld [vmem:[%s1 + $0x38] sm:$0xf]
      %v416 = vld [vmem:[%s1 + $0x3c] sm:$0xf]
      %v417 = vld [vmem:[%s1 + $0x40] sm:$0xf]
      %v418 = vld [vmem:[%s1 + $0x44] sm:$0xf]
      %v419 = vld [vmem:[%s1 + $0x48] sm:$0xf]
      %v420 = vld [vmem:[%s1 + $0x4c] sm:$0xf]
      %v421 = vld [vmem:[%s1 + $0x50] sm:$0xf]
      %v422 = vld [vmem:[%s1 + $0x54] sm:$0xf]
      %v423 = vld [vmem:[%s1 + $0x58] sm:$0xf]
      %v424 = vld [vmem:[%s1 + $0x5c] sm:$0xf]
      %v425 = vld [vmem:[%s1 + $0x60] sm:$0xf]
      %v426 = vld [vmem:[%s1 + $0x64] sm:$0xf]
      %v427 = vld [vmem:[%s1 + $0x68] sm:$0xf]
      %v428 = vld [vmem:[%s1 + $0x6c] sm:$0xf]
      %v429 = vld [vmem:[%s1 + $0x70] sm:$0xf]
      %v430 = vld [vmem:[%s1 + $0x74] sm:$0xf]
      %v431 = vld [vmem:[%s1 + $0x78] sm:$0xf]
      %v432 = vld [vmem:[%s1 + $0x7c] sm:$0xf]
      %v433 = vld [vmem:[%s1 + $0x80] sm:$0xf]
      %v434 = vld [vmem:[%s1 + $0x84] sm:$0xf]
      %v435 = vld [vmem:[%s1 + $0x88] sm:$0xf]
      %v436 = vld [vmem:[%s1 + $0x8c] sm:$0xf]
      %v437 = vld [vmem:[%s1 + $0x90] sm:$0xf]
      %v438 = vld [vmem:[%s1 + $0x94] sm:$0xf]
      %v439 = vld [vmem:[%s1 + $0x98] sm:$0xf]
      %v440 = vld [vmem:[%s1 + $0x9c] sm:$0xf]
      %v441 = vld [vmem:[%s1 + $0xa0] sm:$0xf]
      %v442 = vld [vmem:[%s1 + $0xa4] sm:$0xf]
      %v443 = vld [vmem:[%s1 + $0xa8] sm:$0xf]
      %v444 = vld [vmem:[%s1 + $0xac] sm:$0xf]
      %v445 = vld [vmem:[%s1 + $0xb0] sm:$0xf]
      %v446 = vld [vmem:[%s1 + $0xb4] sm:$0xf]
      %v447 = vld [vmem:[%s1 + $0xb8] sm:$0xf]
      %v448 = vld [vmem:[%s1 + $0xbc] sm:$0xf]
      %v449 = vld [vmem:[%s1 + $0xc0] sm:$0xf]
      %v450 = vld [vmem:[%s1 + $0xc4] sm:$0xf]
      %v451 = vld [vmem:[%s1 + $0xc8] sm:$0xf]
      %v452 = vld [vmem:[%s1 + $0xcc] sm:$0xf]
      %v453 = vld [vmem:[%s1 + $0xd0] sm:$0xf]
      %v454 = vld [vmem:[%s1 + $0xd4] sm:$0xf]
      %v455 = vld [vmem:[%s1 + $0xd8] sm:$0xf]
      %v456 = vld [vmem:[%s1 + $0xdc] sm:$0xf]
      %v457 = vld [vmem:[%s1 + $0xe0] sm:$0xf]
      %v458 = vld [vmem:[%s1 + $0xe4] sm:$0xf]
      %v459 = vld [vmem:[%s1 + $0xe8] sm:$0xf]
      %v460 = vld [vmem:[%s1 + $0xec] sm:$0xf]
      %v461 = vld [vmem:[%s1 + $0xf0] sm:$0xf]
      %v462 = vld [vmem:[%s1 + $0xf4] sm:$0xf]
      %v463 = vld [vmem:[%s1 + $0xf8] sm:$0xf]
      %v464 = vld [vmem:[%s1 + $0xfc] sm:$0xf]
      %v465 = vld [vmem:[%s1 + $0x100] sm:$0xf]
      %v466 = vld [vmem:[%s1 + $0x104] sm:$0xf]
      %v467 = vld [vmem:[%s1 + $0x108] sm:$0xf]
      %v468 = vld [vmem:[%s1 + $0x10c] sm:$0xf]
      %v469 = vld [vmem:[%s1 + $0x110] sm:$0xf]
      %v470 = vld [vmem:[%s1 + $0x114] sm:$0xf]
      %v471 = vld [vmem:[%s1 + $0x118] sm:$0xf]
      %v472 = vld [vmem:[%s1 + $0x11c] sm:$0xf]
      %v473 = vld [vmem:[%s1 + $0x120] sm:$0xf]
      %v474 = vld [vmem:[%s1 + $0x124] sm:$0xf]
      %v475 = vld [vmem:[%s1 + $0x128] sm:$0xf]
      %v476 = vld [vmem:[%s1 + $0x12c] sm:$0xf]
      %v477 = vld [vmem:[%s1 + $0x130] sm:$0xf]
      %v478 = vld [vmem:[%s1 + $0x134] sm:$0xf]
      %v479 = vld [vmem:[%s1 + $0x138] sm:$0xf]
      %v480 = vld [vmem:[%s1 + $0x13c] sm:$0xf]
      %v481 = vld [vmem:[%s1 + $0x140] sm:$0xf]
      %v482 = vld [vmem:[%s1 + $0x144] sm:$0xf]
      %v483 = vld [vmem:[%s1 + $0x148] sm:$0xf]
      %v484 = vld [vmem:[%s1 + $0x14c] sm:$0xf]
      %v485 = vld [vmem:[%s1 + $0x150] sm:$0xf]
      %v486 = vld [vmem:[%s1 + $0x154] sm:$0xf]
      %v487 = vld [vmem:[%s1 + $0x158] sm:$0xf]
      %v488 = vld [vmem:[%s1 + $0x15c] sm:$0xf]
      %v489 = vld [vmem:[%s1 + $0x160] sm:$0xf]
      %v490 = vld [vmem:[%s1 + $0x164] sm:$0xf]
      %v491 = vld [vmem:[%s1 + $0x168] sm:$0xf]
      %v492 = vld [vmem:[%s1 + $0x16c] sm:$0xf]
      %v493 = vld [vmem:[%s1 + $0x170] sm:$0xf]
      %v494 = vld [vmem:[%s1 + $0x174] sm:$0xf]
      %v495 = vld [vmem:[%s1 + $0x178] sm:$0xf]
      %v496 = vld [vmem:[%s1 + $0x17c] sm:$0xf]
      %v497 = vld [vmem:[%s1 + $0x180] sm:$0xf]
      %v498 = vld [vmem:[%s1 + $0x184] sm:$0xf]
      %v499 = vld [vmem:[%s2] sm:$0x1]
      %v501 = vlaneseq
      %v502 = vshrl.u32 %v501, 7
      %v503 = vsub.s32 0, %v502
      %v504 = vrot.slane %v499, %v503
      %v702 = vunpack.c.l.b16 %v205
      %v703 = vunpack.c.h.b16 %v205
      %v704 = vunpack.c.l.b16 %v206
      %v705 = vunpack.c.h.b16 %v206
      %v706 = vunpack.c.l.b16 %v207
      %v707 = vunpack.c.h.b16 %v207
      %v708 = vunpack.c.l.b16 %v208
      %v709 = vunpack.c.l.b16 %v209
      %v710 = vunpack.c.h.b16 %v209
      %v711 = vunpack.c.l.b16 %v210
      %v712 = vunpack.c.h.b16 %v210
      %v713 = vunpack.c.l.b16 %v211
      %v714 = vunpack.c.h.b16 %v211
      %v715 = vunpack.c.l.b16 %v212
      %v716 = vunpack.c.l.b16 %v213
      %v717 = vunpack.c.h.b16 %v213
      %v718 = vunpack.c.l.b16 %v214
      %v719 = vunpack.c.h.b16 %v214
      %v720 = vunpack.c.l.b16 %v215
      %v721 = vunpack.c.h.b16 %v215
      %v722 = vunpack.c.l.b16 %v216
      %v723 = vunpack.c.l.b16 %v217
      %v724 = vunpack.c.h.b16 %v217
      %v725 = vunpack.c.l.b16 %v218
      %v726 = vunpack.c.h.b16 %v218
      %v727 = vunpack.c.l.b16 %v219
      %v728 = vunpack.c.h.b16 %v219
      %v729 = vunpack.c.l.b16 %v220
      %v730 = vunpack.c.l.b16 %v221
      %v731 = vunpack.c.h.b16 %v221
      %v732 = vunpack.c.l.b16 %v222
      %v733 = vunpack.c.h.b16 %v222
      %v734 = vunpack.c.l.b16 %v223
      %v735 = vunpack.c.h.b16 %v223
      %v736 = vunpack.c.l.b16 %v224
      %v737 = vunpack.c.l.b16 %v225
      %v738 = vunpack.c.h.b16 %v225
      %v739 = vunpack.c.l.b16 %v226
      %v740 = vunpack.c.h.b16 %v226
      %v741 = vunpack.c.l.b16 %v227
      %v742 = vunpack.c.h.b16 %v227
      %v743 = vunpack.c.l.b16 %v228
      %v744 = vunpack.c.l.b16 %v229
      %v745 = vunpack.c.h.b16 %v229
      %v746 = vunpack.c.l.b16 %v230
      %v747 = vunpack.c.h.b16 %v230
      %v748 = vunpack.c.l.b16 %v231
      %v749 = vunpack.c.h.b16 %v231
      %v750 = vunpack.c.l.b16 %v232
      %v751 = vunpack.c.l.b16 %v233
      %v752 = vunpack.c.h.b16 %v233
      %v753 = vunpack.c.l.b16 %v234
      %v754 = vunpack.c.h.b16 %v234
      %v755 = vunpack.c.l.b16 %v235
      %v756 = vunpack.c.h.b16 %v235
      %v757 = vunpack.c.l.b16 %v236
      %v758 = vunpack.c.l.b16 %v237
      %v759 = vunpack.c.h.b16 %v237
      %v760 = vunpack.c.l.b16 %v238
      %v761 = vunpack.c.h.b16 %v238
      %v762 = vunpack.c.l.b16 %v239
      %v763 = vunpack.c.h.b16 %v239
      %v764 = vunpack.c.l.b16 %v240
      %v765 = vunpack.c.l.b16 %v241
      %v766 = vunpack.c.h.b16 %v241
      %v767 = vunpack.c.l.b16 %v242
      %v768 = vunpack.c.h.b16 %v242
      %v769 = vunpack.c.l.b16 %v243
      %v770 = vunpack.c.h.b16 %v243
      %v771 = vunpack.c.l.b16 %v244
      %v772 = vunpack.c.l.b16 %v245
      %v773 = vunpack.c.h.b16 %v245
      %v774 = vunpack.c.l.b16 %v246
      %v775 = vunpack.c.h.b16 %v246
      %v776 = vunpack.c.l.b16 %v247
      %v777 = vunpack.c.h.b16 %v247
      %v778 = vunpack.c.l.b16 %v248
      %v779 = vunpack.c.l.b16 %v249
      %v780 = vunpack.c.h.b16 %v249
      %v781 = vunpack.c.l.b16 %v250
      %v782 = vunpack.c.h.b16 %v250
      %v783 = vunpack.c.l.b16 %v251
      %v784 = vunpack.c.h.b16 %v251
      %v785 = vunpack.c.l.b16 %v252
      %v786 = vunpack.c.l.b16 %v253
      %v787 = vunpack.c.h.b16 %v253
      %v788 = vunpack.c.l.b16 %v254
      %v789 = vunpack.c.h.b16 %v254
      %v790 = vunpack.c.l.b16 %v255
      %v791 = vunpack.c.h.b16 %v255
      %v792 = vunpack.c.l.b16 %v256
      %v793 = vunpack.c.l.b16 %v257
      %v794 = vunpack.c.h.b16 %v257
      %v795 = vunpack.c.l.b16 %v258
      %v796 = vunpack.c.h.b16 %v258
      %v797 = vunpack.c.l.b16 %v259
      %v798 = vunpack.c.h.b16 %v259
      %v799 = vunpack.c.l.b16 %v260
      %v800 = vunpack.c.l.b16 %v261
      %v801 = vunpack.c.h.b16 %v261
      %v802 = vunpack.c.l.b16 %v262
      %v803 = vunpack.c.h.b16 %v262
      %v804 = vunpack.c.l.b16 %v263
      %v805 = vunpack.c.h.b16 %v263
      %v806 = vunpack.c.l.b16 %v264
      %v807 = vunpack.c.l.b16 %v265
      %v808 = vunpack.c.h.b16 %v265
      %v809 = vunpack.c.l.b16 %v266
      %v810 = vunpack.c.h.b16 %v266
      %v811 = vunpack.c.l.b16 %v267
      %v812 = vunpack.c.h.b16 %v267
      %v813 = vunpack.c.l.b16 %v268
      %v814 = vunpack.c.l.b16 %v269
      %v815 = vunpack.c.h.b16 %v269
      %v816 = vunpack.c.l.b16 %v270
      %v817 = vunpack.c.h.b16 %v270
      %v818 = vunpack.c.l.b16 %v271
      %v819 = vunpack.c.h.b16 %v271
      %v820 = vunpack.c.l.b16 %v272
      %v821 = vunpack.c.l.b16 %v273
      %v822 = vunpack.c.h.b16 %v273
      %v823 = vunpack.c.l.b16 %v274
      %v824 = vunpack.c.h.b16 %v274
      %v825 = vunpack.c.l.b16 %v275
      %v826 = vunpack.c.h.b16 %v275
      %v827 = vunpack.c.l.b16 %v276
      %v828 = vunpack.c.l.b16 %v277
      %v829 = vunpack.c.h.b16 %v277
      %v830 = vunpack.c.l.b16 %v278
      %v831 = vunpack.c.h.b16 %v278
      %v832 = vunpack.c.l.b16 %v279
      %v833 = vunpack.c.h.b16 %v279
      %v834 = vunpack.c.l.b16 %v280
      %v835 = vunpack.c.l.b16 %v281
      %v836 = vunpack.c.h.b16 %v281
      %v837 = vunpack.c.l.b16 %v282
      %v838 = vunpack.c.h.b16 %v282
      %v839 = vunpack.c.l.b16 %v283
      %v840 = vunpack.c.h.b16 %v283
      %v841 = vunpack.c.l.b16 %v284
      %v842 = vunpack.c.l.b16 %v285
      %v843 = vunpack.c.h.b16 %v285
      %v844 = vunpack.c.l.b16 %v286
      %v845 = vunpack.c.h.b16 %v286
      %v846 = vunpack.c.l.b16 %v287
      %v847 = vunpack.c.h.b16 %v287
      %v848 = vunpack.c.l.b16 %v288
      %v849 = vunpack.c.l.b16 %v289
      %v850 = vunpack.c.h.b16 %v289
      %v851 = vunpack.c.l.b16 %v290
      %v852 = vunpack.c.h.b16 %v290
      %v853 = vunpack.c.l.b16 %v291
      %v854 = vunpack.c.h.b16 %v291
      %v855 = vunpack.c.l.b16 %v292
      %v856 = vunpack.c.l.b16 %v293
      %v857 = vunpack.c.h.b16 %v293
      %v858 = vunpack.c.l.b16 %v294
      %v859 = vunpack.c.h.b16 %v294
      %v860 = vunpack.c.l.b16 %v295
      %v861 = vunpack.c.h.b16 %v295
      %v862 = vunpack.c.l.b16 %v296
      %v863 = vunpack.c.l.b16 %v297
      %v864 = vunpack.c.h.b16 %v297
      %v865 = vunpack.c.l.b16 %v298
      %v866 = vunpack.c.h.b16 %v298
      %v867 = vunpack.c.l.b16 %v299
      %v868 = vunpack.c.h.b16 %v299
      %v869 = vunpack.c.l.b16 %v300
      %v870 = vunpack.c.l.b16 %v301
      %v871 = vunpack.c.h.b16 %v301
      %v872 = vunpack.c.l.b16 %v302
      %v873 = vunpack.c.h.b16 %v302
      %v874 = vunpack.c.l.b16 %v303
      %v875 = vunpack.c.h.b16 %v303
      %v876 = vunpack.c.l.b16 %v304
      %v877 = vunpack.c.l.b16 %v305
      %v878 = vunpack.c.h.b16 %v305
      %v879 = vunpack.c.l.b16 %v306
      %v880 = vunpack.c.h.b16 %v306
      %v881 = vunpack.c.l.b16 %v307
      %v882 = vunpack.c.h.b16 %v307
      %v883 = vunpack.c.l.b16 %v308
      %v884 = vunpack.c.l.b16 %v309
      %v885 = vunpack.c.h.b16 %v309
      %v886 = vunpack.c.l.b16 %v310
      %v887 = vunpack.c.h.b16 %v310
      %v888 = vunpack.c.l.b16 %v311
      %v889 = vunpack.c.h.b16 %v311
      %v890 = vunpack.c.l.b16 %v312
      %v891 = vunpack.c.l.b16 %v313
      %v892 = vunpack.c.h.b16 %v313
      %v893 = vunpack.c.l.b16 %v314
      %v894 = vunpack.c.h.b16 %v314
      %v895 = vunpack.c.l.b16 %v315
      %v896 = vunpack.c.h.b16 %v315
      %v897 = vunpack.c.l.b16 %v316
      %v898 = vunpack.c.l.b16 %v317
      %v899 = vunpack.c.h.b16 %v317
      %v900 = vunpack.c.l.b16 %v318
      %v901 = vunpack.c.h.b16 %v318
      %v902 = vunpack.c.l.b16 %v319
      %v903 = vunpack.c.h.b16 %v319
      %v904 = vunpack.c.l.b16 %v320
      %v905 = vunpack.c.l.b16 %v321
      %v906 = vunpack.c.h.b16 %v321
      %v907 = vunpack.c.l.b16 %v322
      %v908 = vunpack.c.h.b16 %v322
      %v909 = vunpack.c.l.b16 %v323
      %v910 = vunpack.c.h.b16 %v323
      %v911 = vunpack.c.l.b16 %v324
      %v912 = vunpack.c.l.b16 %v325
      %v913 = vunpack.c.h.b16 %v325
      %v914 = vunpack.c.l.b16 %v326
      %v915 = vunpack.c.h.b16 %v326
      %v916 = vunpack.c.l.b16 %v327
      %v917 = vunpack.c.h.b16 %v327
      %v918 = vunpack.c.l.b16 %v328
      %v919 = vunpack.c.l.b16 %v329
      %v920 = vunpack.c.h.b16 %v329
      %v921 = vunpack.c.l.b16 %v330
      %v922 = vunpack.c.h.b16 %v330
      %v923 = vunpack.c.l.b16 %v331
      %v924 = vunpack.c.h.b16 %v331
      %v925 = vunpack.c.l.b16 %v332
      %v926 = vunpack.c.l.b16 %v333
      %v927 = vunpack.c.h.b16 %v333
      %v928 = vunpack.c.l.b16 %v334
      %v929 = vunpack.c.h.b16 %v334
      %v930 = vunpack.c.l.b16 %v335
      %v931 = vunpack.c.h.b16 %v335
      %v932 = vunpack.c.l.b16 %v336
      %v933 = vunpack.c.l.b16 %v337
      %v934 = vunpack.c.h.b16 %v337
      %v935 = vunpack.c.l.b16 %v338
      %v936 = vunpack.c.h.b16 %v338
      %v937 = vunpack.c.l.b16 %v339
      %v938 = vunpack.c.h.b16 %v339
      %v939 = vunpack.c.l.b16 %v340
      %v940 = vunpack.c.l.b16 %v341
      %v941 = vunpack.c.h.b16 %v341
      %v942 = vunpack.c.l.b16 %v342
      %v943 = vunpack.c.h.b16 %v342
      %v944 = vunpack.c.l.b16 %v343
      %v945 = vunpack.c.h.b16 %v343
      %v946 = vunpack.c.l.b16 %v344
      %v947 = vunpack.c.l.b16 %v345
      %v948 = vunpack.c.h.b16 %v345
      %v949 = vunpack.c.l.b16 %v346
      %v950 = vunpack.c.h.b16 %v346
      %v951 = vunpack.c.l.b16 %v347
      %v952 = vunpack.c.h.b16 %v347
      %v953 = vunpack.c.l.b16 %v348
      %v954 = vunpack.c.l.b16 %v349
      %v955 = vunpack.c.h.b16 %v349
      %v956 = vunpack.c.l.b16 %v350
      %v957 = vunpack.c.h.b16 %v350
      %v958 = vunpack.c.l.b16 %v351
      %v959 = vunpack.c.h.b16 %v351
      %v960 = vunpack.c.l.b16 %v352
      %v961 = vunpack.c.l.b16 %v353
      %v962 = vunpack.c.h.b16 %v353
      %v963 = vunpack.c.l.b16 %v354
      %v964 = vunpack.c.h.b16 %v354
      %v965 = vunpack.c.l.b16 %v355
      %v966 = vunpack.c.h.b16 %v355
      %v967 = vunpack.c.l.b16 %v356
      %v968 = vunpack.c.l.b16 %v357
      %v969 = vunpack.c.h.b16 %v357
      %v970 = vunpack.c.l.b16 %v358
      %v971 = vunpack.c.h.b16 %v358
      %v972 = vunpack.c.l.b16 %v359
      %v973 = vunpack.c.h.b16 %v359
      %v974 = vunpack.c.l.b16 %v360
      %v975 = vunpack.c.l.b16 %v361
      %v976 = vunpack.c.h.b16 %v361
      %v977 = vunpack.c.l.b16 %v362
      %v978 = vunpack.c.h.b16 %v362
      %v979 = vunpack.c.l.b16 %v363
      %v980 = vunpack.c.h.b16 %v363
      %v981 = vunpack.c.l.b16 %v364
      %v982 = vunpack.c.l.b16 %v365
      %v983 = vunpack.c.h.b16 %v365
      %v984 = vunpack.c.l.b16 %v366
      %v985 = vunpack.c.h.b16 %v366
      %v986 = vunpack.c.l.b16 %v367
      %v987 = vunpack.c.h.b16 %v367
      %v988 = vunpack.c.l.b16 %v368
      %v989 = vunpack.c.l.b16 %v369
      %v990 = vunpack.c.h.b16 %v369
      %v991 = vunpack.c.l.b16 %v370
      %v992 = vunpack.c.h.b16 %v370
      %v993 = vunpack.c.l.b16 %v371
      %v994 = vunpack.c.h.b16 %v371
      %v995 = vunpack.c.l.b16 %v372
      %v996 = vunpack.c.l.b16 %v373
      %v997 = vunpack.c.h.b16 %v373
      %v998 = vunpack.c.l.b16 %v374
      %v999 = vunpack.c.h.b16 %v374
      %v1000 = vunpack.c.l.b16 %v375
      %v1001 = vunpack.c.h.b16 %v375
      %v1002 = vunpack.c.l.b16 %v376
      %v1003 = vunpack.c.l.b16 %v377
      %v1004 = vunpack.c.h.b16 %v377
      %v1005 = vunpack.c.l.b16 %v378
      %v1006 = vunpack.c.h.b16 %v378
      %v1007 = vunpack.c.l.b16 %v379
      %v1008 = vunpack.c.h.b16 %v379
      %v1009 = vunpack.c.l.b16 %v380
      %v1010 = vunpack.c.l.b16 %v381
      %v1011 = vunpack.c.h.b16 %v381
      %v1012 = vunpack.c.l.b16 %v382
      %v1013 = vunpack.c.h.b16 %v382
      %v1014 = vunpack.c.l.b16 %v383
      %v1015 = vunpack.c.h.b16 %v383
      %v1016 = vunpack.c.l.b16 %v384
      %v1017 = vunpack.c.l.b16 %v385
      %v1018 = vunpack.c.h.b16 %v385
      %v1019 = vunpack.c.l.b16 %v386
      %v1020 = vunpack.c.h.b16 %v386
      %v1021 = vunpack.c.l.b16 %v387
      %v1022 = vunpack.c.h.b16 %v387
      %v1023 = vunpack.c.l.b16 %v388
      %v1024 = vunpack.c.l.b16 %v389
      %v1025 = vunpack.c.h.b16 %v389
      %v1026 = vunpack.c.l.b16 %v390
      %v1027 = vunpack.c.h.b16 %v390
      %v1028 = vunpack.c.l.b16 %v391
      %v1029 = vunpack.c.h.b16 %v391
      %v1030 = vunpack.c.l.b16 %v392
      %v1031 = vunpack.c.l.b16 %v393
      %v1032 = vunpack.c.h.b16 %v393
      %v1033 = vunpack.c.l.b16 %v394
      %v1034 = vunpack.c.h.b16 %v394
      %v1035 = vunpack.c.l.b16 %v395
      %v1036 = vunpack.c.h.b16 %v395
      %v1037 = vunpack.c.l.b16 %v396
      %v1038 = vunpack.c.l.b16 %v397
      %v1039 = vunpack.c.h.b16 %v397
      %v1040 = vunpack.c.l.b16 %v398
      %v1041 = vunpack.c.h.b16 %v398
      %v1042 = vunpack.c.l.b16 %v399
      %v1043 = vunpack.c.h.b16 %v399
      %v1044 = vunpack.c.l.b16 %v400
      %v1045 = vpack.c.b16 %v709, %v702
      %v1046 = vpack.c.b16 %v710, %v703
      %v1047 = vpack.c.b16 %v711, %v704
      %v1048 = vpack.c.b16 %v712, %v705
      %v1049 = vpack.c.b16 %v713, %v706
      %v1050 = vpack.c.b16 %v714, %v707
      %v1051 = vpack.c.b16 %v715, %v708
      %v1052 = vpack.c.b16 %v723, %v716
      %v1053 = vpack.c.b16 %v724, %v717
      %v1054 = vpack.c.b16 %v725, %v718
      %v1055 = vpack.c.b16 %v726, %v719
      %v1056 = vpack.c.b16 %v727, %v720
      %v1057 = vpack.c.b16 %v728, %v721
      %v1058 = vpack.c.b16 %v729, %v722
      %v1059 = vpack.c.b16 %v737, %v730
      %v1060 = vpack.c.b16 %v738, %v731
      %v1061 = vpack.c.b16 %v739, %v732
      %v1062 = vpack.c.b16 %v740, %v733
      %v1063 = vpack.c.b16 %v741, %v734
      %v1064 = vpack.c.b16 %v742, %v735
      %v1065 = vpack.c.b16 %v743, %v736
      %v1066 = vpack.c.b16 %v751, %v744
      %v1067 = vpack.c.b16 %v752, %v745
      %v1068 = vpack.c.b16 %v753, %v746
      %v1069 = vpack.c.b16 %v754, %v747
      %v1070 = vpack.c.b16 %v755, %v748
      %v1071 = vpack.c.b16 %v756, %v749
      %v1072 = vpack.c.b16 %v757, %v750
      %v1073 = vpack.c.b16 %v765, %v758
      %v1074 = vpack.c.b16 %v766, %v759
      %v1075 = vpack.c.b16 %v767, %v760
      %v1076 = vpack.c.b16 %v768, %v761
      %v1077 = vpack.c.b16 %v769, %v762
      %v1078 = vpack.c.b16 %v770, %v763
      %v1079 = vpack.c.b16 %v771, %v764
      %v1080 = vpack.c.b16 %v779, %v772
      %v1081 = vpack.c.b16 %v780, %v773
      %v1082 = vpack.c.b16 %v781, %v774
      %v1083 = vpack.c.b16 %v782, %v775
      %v1084 = vpack.c.b16 %v783, %v776
      %v1085 = vpack.c.b16 %v784, %v777
      %v1086 = vpack.c.b16 %v785, %v778
      %v1087 = vpack.c.b16 %v793, %v786
      %v1088 = vpack.c.b16 %v794, %v787
      %v1089 = vpack.c.b16 %v795, %v788
      %v1090 = vpack.c.b16 %v796, %v789
      %v1091 = vpack.c.b16 %v797, %v790
      %v1092 = vpack.c.b16 %v798, %v791
      %v1093 = vpack.c.b16 %v799, %v792
      %v1094 = vpack.c.b16 %v807, %v800
      %v1095 = vpack.c.b16 %v808, %v801
      %v1096 = vpack.c.b16 %v809, %v802
      %v1097 = vpack.c.b16 %v810, %v803
      %v1098 = vpack.c.b16 %v811, %v804
      %v1099 = vpack.c.b16 %v812, %v805
      %v1100 = vpack.c.b16 %v813, %v806
      %v1101 = vpack.c.b16 %v821, %v814
      %v1102 = vpack.c.b16 %v822, %v815
      %v1103 = vpack.c.b16 %v823, %v816
      %v1104 = vpack.c.b16 %v824, %v817
      %v1105 = vpack.c.b16 %v825, %v818
      %v1106 = vpack.c.b16 %v826, %v819
      %v1107 = vpack.c.b16 %v827, %v820
      %v1108 = vpack.c.b16 %v835, %v828
      %v1109 = vpack.c.b16 %v836, %v829
      %v1110 = vpack.c.b16 %v837, %v830
      %v1111 = vpack.c.b16 %v838, %v831
      %v1112 = vpack.c.b16 %v839, %v832
      %v1113 = vpack.c.b16 %v840, %v833
      %v1114 = vpack.c.b16 %v841, %v834
      %v1115 = vpack.c.b16 %v849, %v842
      %v1116 = vpack.c.b16 %v850, %v843
      %v1117 = vpack.c.b16 %v851, %v844
      %v1118 = vpack.c.b16 %v852, %v845
      %v1119 = vpack.c.b16 %v853, %v846
      %v1120 = vpack.c.b16 %v854, %v847
      %v1121 = vpack.c.b16 %v855, %v848
      %v1122 = vpack.c.b16 %v863, %v856
      %v1123 = vpack.c.b16 %v864, %v857
      %v1124 = vpack.c.b16 %v865, %v858
      %v1125 = vpack.c.b16 %v866, %v859
      %v1126 = vpack.c.b16 %v867, %v860
      %v1127 = vpack.c.b16 %v868, %v861
      %v1128 = vpack.c.b16 %v869, %v862
      %v1129 = vpack.c.b16 %v877, %v870
      %v1130 = vpack.c.b16 %v878, %v871
      %v1131 = vpack.c.b16 %v879, %v872
      %v1132 = vpack.c.b16 %v880, %v873
      %v1133 = vpack.c.b16 %v881, %v874
      %v1134 = vpack.c.b16 %v882, %v875
      %v1135 = vpack.c.b16 %v883, %v876
      %v1136 = vpack.c.b16 %v891, %v884
      %v1137 = vpack.c.b16 %v892, %v885
      %v1138 = vpack.c.b16 %v893, %v886
      %v1139 = vpack.c.b16 %v894, %v887
      %v1140 = vpack.c.b16 %v895, %v888
      %v1141 = vpack.c.b16 %v896, %v889
      %v1142 = vpack.c.b16 %v897, %v890
      %v1143 = vpack.c.b16 %v905, %v898
      %v1144 = vpack.c.b16 %v906, %v899
      %v1145 = vpack.c.b16 %v907, %v900
      %v1146 = vpack.c.b16 %v908, %v901
      %v1147 = vpack.c.b16 %v909, %v902
      %v1148 = vpack.c.b16 %v910, %v903
      %v1149 = vpack.c.b16 %v911, %v904
      %v1150 = vpack.c.b16 %v919, %v912
      %v1151 = vpack.c.b16 %v920, %v913
      %v1152 = vpack.c.b16 %v921, %v914
      %v1153 = vpack.c.b16 %v922, %v915
      %v1154 = vpack.c.b16 %v923, %v916
      %v1155 = vpack.c.b16 %v924, %v917
      %v1156 = vpack.c.b16 %v925, %v918
      %v1157 = vpack.c.b16 %v933, %v926
      %v1158 = vpack.c.b16 %v934, %v927
      %v1159 = vpack.c.b16 %v935, %v928
      %v1160 = vpack.c.b16 %v936, %v929
      %v1161 = vpack.c.b16 %v937, %v930
      %v1162 = vpack.c.b16 %v938, %v931
      %v1163 = vpack.c.b16 %v939, %v932
      %v1164 = vpack.c.b16 %v947, %v940
      %v1165 = vpack.c.b16 %v948, %v941
      %v1166 = vpack.c.b16 %v949, %v942
      %v1167 = vpack.c.b16 %v950, %v943
      %v1168 = vpack.c.b16 %v951, %v944
      %v1169 = vpack.c.b16 %v952, %v945
      %v1170 = vpack.c.b16 %v953, %v946
      %v1171 = vpack.c.b16 %v961, %v954
      %v1172 = vpack.c.b16 %v962, %v955
      %v1173 = vpack.c.b16 %v963, %v956
      %v1174 = vpack.c.b16 %v964, %v957
      %v1175 = vpack.c.b16 %v965, %v958
      %v1176 = vpack.c.b16 %v966, %v959
      %v1177 = vpack.c.b16 %v967, %v960
      %v1178 = vpack.c.b16 %v975, %v968
      %v1179 = vpack.c.b16 %v976, %v969
      %v1180 = vpack.c.b16 %v977, %v970
      %v1181 = vpack.c.b16 %v978, %v971
      %v1182 = vpack.c.b16 %v979, %v972
      %v1183 = vpack.c.b16 %v980, %v973
      %v1184 = vpack.c.b16 %v981, %v974
      %v1185 = vpack.c.b16 %v989, %v982
      %v1186 = vpack.c.b16 %v990, %v983
      %v1187 = vpack.c.b16 %v991, %v984
      %v1188 = vpack.c.b16 %v992, %v985
      %v1189 = vpack.c.b16 %v993, %v986
      %v1190 = vpack.c.b16 %v994, %v987
      %v1191 = vpack.c.b16 %v995, %v988
      %v1192 = vpack.c.b16 %v1003, %v996
      %v1193 = vpack.c.b16 %v1004, %v997
      %v1194 = vpack.c.b16 %v1005, %v998
      %v1195 = vpack.c.b16 %v1006, %v999
      %v1196 = vpack.c.b16 %v1007, %v1000
      %v1197 = vpack.c.b16 %v1008, %v1001
      %v1198 = vpack.c.b16 %v1009, %v1002
      %v1199 = vpack.c.b16 %v1017, %v1010
      %v1200 = vpack.c.b16 %v1018, %v1011
      %v1201 = vpack.c.b16 %v1019, %v1012
      %v1202 = vpack.c.b16 %v1020, %v1013
      %v1203 = vpack.c.b16 %v1021, %v1014
      %v1204 = vpack.c.b16 %v1022, %v1015
      %v1205 = vpack.c.b16 %v1023, %v1016
      %v1206 = vpack.c.b16 %v1031, %v1024
      %v1207 = vpack.c.b16 %v1032, %v1025
      %v1208 = vpack.c.b16 %v1033, %v1026
      %v1209 = vpack.c.b16 %v1034, %v1027
      %v1210 = vpack.c.b16 %v1035, %v1028
      %v1211 = vpack.c.b16 %v1036, %v1029
      %v1212 = vpack.c.b16 %v1037, %v1030
      %v1213 = vpack.c.b16 %v1038, %v1038
      %v1214 = vpack.c.b16 %v1039, %v1039
      %v1215 = vpack.c.b16 %v1040, %v1040
      %v1216 = vpack.c.b16 %v1041, %v1041
      %v1217 = vpack.c.b16 %v1042, %v1042
      %v1218 = vpack.c.b16 %v1043, %v1043
      %v1219 = vpack.c.b16 %v1044, %v1044
      %v1468 = vunpack.c.l.b16 %v401
      %v1469 = vunpack.c.l.b16 %v402
      %v1470 = vunpack.c.l.b16 %v403
      %v1471 = vunpack.c.l.b16 %v404
      %v1472 = vunpack.c.l.b16 %v405
      %v1473 = vunpack.c.l.b16 %v406
      %v1474 = vunpack.c.l.b16 %v407
      %v1475 = vunpack.c.l.b16 %v408
      %v1476 = vunpack.c.l.b16 %v409
      %v1477 = vunpack.c.l.b16 %v410
      %v1478 = vunpack.c.l.b16 %v411
      %v1479 = vunpack.c.l.b16 %v412
      %v1480 = vunpack.c.l.b16 %v413
      %v1481 = vunpack.c.l.b16 %v414
      %v1482 = vunpack.c.l.b16 %v415
      %v1483 = vunpack.c.l.b16 %v416
      %v1484 = vunpack.c.l.b16 %v417
      %v1485 = vunpack.c.l.b16 %v418
      %v1486 = vunpack.c.l.b16 %v419
      %v1487 = vunpack.c.l.b16 %v420
      %v1488 = vunpack.c.l.b16 %v421
      %v1489 = vunpack.c.l.b16 %v422
      %v1490 = vunpack.c.l.b16 %v423
      %v1491 = vunpack.c.l.b16 %v424
      %v1492 = vunpack.c.l.b16 %v425
      %v1493 = vunpack.c.l.b16 %v426
      %v1494 = vunpack.c.l.b16 %v427
      %v1495 = vunpack.c.l.b16 %v428
      %v1496 = vunpack.c.l.b16 %v429
      %v1497 = vunpack.c.l.b16 %v430
      %v1498 = vunpack.c.l.b16 %v431
      %v1499 = vunpack.c.l.b16 %v432
      %v1500 = vunpack.c.l.b16 %v433
      %v1501 = vunpack.c.l.b16 %v434
      %v1502 = vunpack.c.l.b16 %v435
      %v1503 = vunpack.c.l.b16 %v436
      %v1504 = vunpack.c.l.b16 %v437
      %v1505 = vunpack.c.l.b16 %v438
      %v1506 = vunpack.c.l.b16 %v439
      %v1507 = vunpack.c.l.b16 %v440
      %v1508 = vunpack.c.l.b16 %v441
      %v1509 = vunpack.c.l.b16 %v442
      %v1510 = vunpack.c.l.b16 %v443
      %v1511 = vunpack.c.l.b16 %v444
      %v1512 = vunpack.c.l.b16 %v445
      %v1513 = vunpack.c.l.b16 %v446
      %v1514 = vunpack.c.l.b16 %v447
      %v1515 = vunpack.c.l.b16 %v448
      %v1516 = vunpack.c.l.b16 %v449
      %v1517 = vunpack.c.l.b16 %v450
      %v1518 = vunpack.c.l.b16 %v451
      %v1519 = vunpack.c.l.b16 %v452
      %v1520 = vunpack.c.l.b16 %v453
      %v1521 = vunpack.c.l.b16 %v454
      %v1522 = vunpack.c.l.b16 %v455
      %v1523 = vunpack.c.l.b16 %v456
      %v1524 = vunpack.c.l.b16 %v457
      %v1525 = vunpack.c.l.b16 %v458
      %v1526 = vunpack.c.l.b16 %v459
      %v1527 = vunpack.c.l.b16 %v460
      %v1528 = vunpack.c.l.b16 %v461
      %v1529 = vunpack.c.l.b16 %v462
      %v1530 = vunpack.c.l.b16 %v463
      %v1531 = vunpack.c.l.b16 %v464
      %v1532 = vunpack.c.l.b16 %v465
      %v1533 = vunpack.c.l.b16 %v466
      %v1534 = vunpack.c.l.b16 %v467
      %v1535 = vunpack.c.l.b16 %v468
      %v1536 = vunpack.c.l.b16 %v469
      %v1537 = vunpack.c.l.b16 %v470
      %v1538 = vunpack.c.l.b16 %v471
      %v1539 = vunpack.c.l.b16 %v472
      %v1540 = vunpack.c.l.b16 %v473
      %v1541 = vunpack.c.l.b16 %v474
      %v1542 = vunpack.c.l.b16 %v475
      %v1543 = vunpack.c.l.b16 %v476
      %v1544 = vunpack.c.l.b16 %v477
      %v1545 = vunpack.c.l.b16 %v478
      %v1546 = vunpack.c.l.b16 %v479
      %v1547 = vunpack.c.l.b16 %v480
      %v1548 = vunpack.c.l.b16 %v481
      %v1549 = vunpack.c.l.b16 %v482
      %v1550 = vunpack.c.l.b16 %v483
      %v1551 = vunpack.c.l.b16 %v484
      %v1552 = vunpack.c.l.b16 %v485
      %v1553 = vunpack.c.l.b16 %v486
      %v1554 = vunpack.c.l.b16 %v487
      %v1555 = vunpack.c.l.b16 %v488
      %v1556 = vunpack.c.l.b16 %v489
      %v1557 = vunpack.c.l.b16 %v490
      %v1558 = vunpack.c.l.b16 %v491
      %v1559 = vunpack.c.l.b16 %v492
      %v1560 = vunpack.c.l.b16 %v493
      %v1561 = vunpack.c.l.b16 %v494
      %v1562 = vunpack.c.l.b16 %v495
      %v1563 = vunpack.c.l.b16 %v496
      %v1564 = vunpack.c.l.b16 %v497
      %v1565 = vunpack.c.l.b16 %v498
      %v1566 = vpack.c.b16 %v1469, %v1468
      %v1567 = vpack.c.b16 %v1471, %v1470
      %v1568 = vpack.c.b16 %v1473, %v1472
      %v1569 = vpack.c.b16 %v1475, %v1474
      %v1570 = vpack.c.b16 %v1477, %v1476
      %v1571 = vpack.c.b16 %v1479, %v1478
      %v1572 = vpack.c.b16 %v1481, %v1480
      %v1573 = vpack.c.b16 %v1483, %v1482
      %v1574 = vpack.c.b16 %v1485, %v1484
      %v1575 = vpack.c.b16 %v1487, %v1486
      %v1576 = vpack.c.b16 %v1489, %v1488
      %v1577 = vpack.c.b16 %v1491, %v1490
      %v1578 = vpack.c.b16 %v1493, %v1492
      %v1579 = vpack.c.b16 %v1495, %v1494
      %v1580 = vpack.c.b16 %v1497, %v1496
      %v1581 = vpack.c.b16 %v1499, %v1498
      %v1582 = vpack.c.b16 %v1501, %v1500
      %v1583 = vpack.c.b16 %v1503, %v1502
      %v1584 = vpack.c.b16 %v1505, %v1504
      %v1585 = vpack.c.b16 %v1507, %v1506
      %v1586 = vpack.c.b16 %v1509, %v1508
      %v1587 = vpack.c.b16 %v1511, %v1510
      %v1588 = vpack.c.b16 %v1513, %v1512
      %v1589 = vpack.c.b16 %v1515, %v1514
      %v1590 = vpack.c.b16 %v1517, %v1516
      %v1591 = vpack.c.b16 %v1519, %v1518
      %v1592 = vpack.c.b16 %v1521, %v1520
      %v1593 = vpack.c.b16 %v1523, %v1522
      %v1594 = vpack.c.b16 %v1525, %v1524
      %v1595 = vpack.c.b16 %v1527, %v1526
      %v1596 = vpack.c.b16 %v1529, %v1528
      %v1597 = vpack.c.b16 %v1531, %v1530
      %v1598 = vpack.c.b16 %v1533, %v1532
      %v1599 = vpack.c.b16 %v1535, %v1534
      %v1600 = vpack.c.b16 %v1537, %v1536
      %v1601 = vpack.c.b16 %v1539, %v1538
      %v1602 = vpack.c.b16 %v1541, %v1540
      %v1603 = vpack.c.b16 %v1543, %v1542
      %v1604 = vpack.c.b16 %v1545, %v1544
      %v1605 = vpack.c.b16 %v1547, %v1546
      %v1606 = vpack.c.b16 %v1549, %v1548
      %v1607 = vpack.c.b16 %v1551, %v1550
      %v1608 = vpack.c.b16 %v1553, %v1552
      %v1609 = vpack.c.b16 %v1555, %v1554
      %v1610 = vpack.c.b16 %v1557, %v1556
      %v1611 = vpack.c.b16 %v1559, %v1558
      %v1612 = vpack.c.b16 %v1561, %v1560
      %v1613 = vpack.c.b16 %v1563, %v1562
      %v1614 = vpack.c.b16 %v1565, %v1564
      %vm1664 = vcmask 130048
      %v1666 = vsel %vm1664, %v1051, 0
      %v1669 = vsel %vm1664, %v1058, 0
      %v1672 = vsel %vm1664, %v1065, 0
      %v1675 = vsel %vm1664, %v1072, 0
      %v1678 = vsel %vm1664, %v1079, 0
      %v1681 = vsel %vm1664, %v1086, 0
      %v1684 = vsel %vm1664, %v1093, 0
      %v1687 = vsel %vm1664, %v1100, 0
      %v1690 = vsel %vm1664, %v1107, 0
      %v1693 = vsel %vm1664, %v1114, 0
      %v1696 = vsel %vm1664, %v1121, 0
      %v1699 = vsel %vm1664, %v1128, 0
      %v1702 = vsel %vm1664, %v1135, 0
      %v1705 = vsel %vm1664, %v1142, 0
      %v1708 = vsel %vm1664, %v1149, 0
      %v1711 = vsel %vm1664, %v1156, 0
      %v1714 = vsel %vm1664, %v1163, 0
      %v1717 = vsel %vm1664, %v1170, 0
      %v1720 = vsel %vm1664, %v1177, 0
      %v1723 = vsel %vm1664, %v1184, 0
      %v1726 = vsel %vm1664, %v1191, 0
      %v1729 = vsel %vm1664, %v1198, 0
      %v1732 = vsel %vm1664, %v1205, 0
      %v1735 = vsel %vm1664, %v1212, 0
      %v1738 = vsel %vm1664, %v1219, 0
      %1740 = vmatprep.subr.bf16.mxu0 0
      %1741 = vmatpush1.bf16.msra.mxu0 %v1566
      %1742 = vmatprep.subr.bf16.mxu0 0
      %1743 = vmatpush1.bf16.msra.mxu0 %v1567
      %1744 = vmatprep.subr.bf16.mxu0 0
      %1745 = vmatpush1.bf16.msra.mxu0 %v1568
      %1746 = vmatprep.subr.bf16.mxu0 0
      %1747 = vmatpush1.bf16.msra.mxu0 %v1569
      %1748 = vmatprep.subr.bf16.mxu0 0
      %1749 = vmatpush1.bf16.msra.mxu0 %v1570
      %1750 = vmatprep.subr.bf16.mxu0 0
      %1751 = vmatpush1.bf16.msra.mxu0 %v1571
      %1752 = vmatprep.subr.bf16.mxu0 0
      %1753 = vmatpush1.bf16.msra.mxu0 %v1572
      %1754 = vmatprep.subr.bf16.mxu0 0
      %1755 = vmatpush1.bf16.msra.mxu0 %v1573
      %1756 = vmatprep.subr.bf16.mxu0 0
      %1757 = vmatpush1.bf16.msra.mxu0 %v1574
      %1758 = vmatprep.subr.bf16.mxu0 0
      %1759 = vmatpush1.bf16.msra.mxu0 %v1575
      %1760 = vmatprep.subr.bf16.mxu0 0
      %1761 = vmatpush1.bf16.msra.mxu0 %v1576
      %1762 = vmatprep.subr.bf16.mxu0 0
      %1763 = vmatpush1.bf16.msra.mxu0 %v1577
      %1764 = vmatprep.subr.bf16.mxu0 0
      %1765 = vmatpush1.bf16.msra.mxu0 %v1578
      %1766 = vmatprep.subr.bf16.mxu0 0
      %1767 = vmatpush1.bf16.msra.mxu0 %v1579
      %1768 = vmatprep.subr.bf16.mxu0 0
      %1769 = vmatpush1.bf16.msra.mxu0 %v1580
      %1770 = vmatprep.subr.bf16.mxu0 0
      %1771 = vmatpush1.bf16.msra.mxu0 %v1581
      %1772 = vmatprep.mubr.bf16.mxu0 %v1046
      %1773 = vmatmul.mubr.bf16.gmra.mrb[0].mxu0 %v1045
      %v1774 = vpop.f32.mrb[0].mxu0
      %v1775 = vadd.f32 %v504, %v1774
      %v1776 = vpop.f32.mrb[0].mxu0
      %v1777 = vpop.f32.mrb[0].mxu0
      %v1778 = vadd.f32 %v504, %v1777
      %v1779 = vpop.f32.mrb[0].mxu0
      %1780 = vmatprep.mubr.bf16.mxu0 %v1053
      %1781 = vmatmul.mubr.bf16.gmra.mrb[0].mxu0 %v1052
      %v1782 = vpop.f32.mrb[0].mxu0
      %v1783 = vadd.f32 %v504, %v1782
      %v1784 = vpop.f32.mrb[0].mxu0
      %v1785 = vpop.f32.mrb[0].mxu0
      %v1786 = vadd.f32 %v504, %v1785
      %v1787 = vpop.f32.mrb[0].mxu0
      %1788 = vmatprep.mubr.bf16.mxu0 %v1060
      %1789 = vmatmul.mubr.bf16.gmra.mrb[0].mxu0 %v1059
      %v1790 = vpop.f32.mrb[0].mxu0
      %v1791 = vadd.f32 %v504, %v1790
      %v1792 = vpop.f32.mrb[0].mxu0
      %v1793 = vpop.f32.mrb[0].mxu0
      %v1794 = vadd.f32 %v504, %v1793
      %v1795 = vpop.f32.mrb[0].mxu0
      %1796 = vmatprep.mubr.bf16.mxu0 %v1067
      %1797 = vmatmul.mubr.bf16.gmra.mrb[0].mxu0 %v1066
      %v1798 = vpop.f32.mrb[0].mxu0
      %v1799 = vadd.f32 %v504, %v1798
      %v1800 = vpop.f32.mrb[0].mxu0
      %v1801 = vpop.f32.mrb[0].mxu0
      %v1802 = vadd.f32 %v504, %v1801
      %v1803 = vpop.f32.mrb[0].mxu0
      %1804 = vmatprep.mubr.bf16.mxu0 %v1074
      %1805 = vmatmul.mubr.bf16.gmra.mrb[0].mxu0 %v1073
      %v1806 = vpop.f32.mrb[0].mxu0
      %v1807 = vadd.f32 %v504, %v1806
      %v1808 = vpop.f32.mrb[0].mxu0
      %v1809 = vpop.f32.mrb[0].mxu0
      %v1810 = vadd.f32 %v504, %v1809
      %v1811 = vpop.f32.mrb[0].mxu0
      %1812 = vmatprep.mubr.bf16.mxu0 %v1081
      %1813 = vmatmul.mubr.bf16.gmra.mrb[0].mxu0 %v1080
      %v1814 = vpop.f32.mrb[0].mxu0
      %v1815 = vadd.f32 %v504, %v1814
      %v1816 = vpop.f32.mrb[0].mxu0
      %v1817 = vpop.f32.mrb[0].mxu0
      %v1818 = vadd.f32 %v504, %v1817
      %v1819 = vpop.f32.mrb[0].mxu0
      %1820 = vmatprep.mubr.bf16.mxu0 %v1088
      %1821 = vmatmul.mubr.bf16.gmra.mrb[0].mxu0 %v1087
      %v1822 = vpop.f32.mrb[0].mxu0
      %v1823 = vadd.f32 %v504, %v1822
      %v1824 = vpop.f32.mrb[0].mxu0
      %v1825 = vpop.f32.mrb[0].mxu0
      %v1826 = vadd.f32 %v504, %v1825
      %v1827 = vpop.f32.mrb[0].mxu0
      %1828 = vmatprep.mubr.bf16.mxu0 %v1095
      %1829 = vmatmul.mubr.bf16.gmra.mrb[0].mxu0 %v1094
      %v1830 = vpop.f32.mrb[0].mxu0
      %v1831 = vadd.f32 %v504, %v1830
      %v1832 = vpop.f32.mrb[0].mxu0
      %v1833 = vpop.f32.mrb[0].mxu0
      %v1834 = vadd.f32 %v504, %v1833
      %v1835 = vpop.f32.mrb[0].mxu0
      %1836 = vmatprep.mubr.bf16.mxu0 %v1102
      %1837 = vmatmul.mubr.bf16.gmra.mrb[0].mxu0 %v1101
      %v1838 = vpop.f32.mrb[0].mxu0
      %v1839 = vadd.f32 %v504, %v1838
      %v1840 = vpop.f32.mrb[0].mxu0
      %v1841 = vpop.f32.mrb[0].mxu0
      %v1842 = vadd.f32 %v504, %v1841
      %v1843 = vpop.f32.mrb[0].mxu0
      %1844 = vmatprep.mubr.bf16.mxu0 %v1109
      %1845 = vmatmul.mubr.bf16.gmra.mrb[0].mxu0 %v1108
      %v1846 = vpop.f32.mrb[0].mxu0
      %v1847 = vadd.f32 %v504, %v1846
      %v1848 = vpop.f32.mrb[0].mxu0
      %v1849 = vpop.f32.mrb[0].mxu0
      %v1850 = vadd.f32 %v504, %v1849
      %v1851 = vpop.f32.mrb[0].mxu0
      %1852 = vmatprep.mubr.bf16.mxu0 %v1116
      %1853 = vmatmul.mubr.bf16.gmra.mrb[0].mxu0 %v1115
      %v1854 = vpop.f32.mrb[0].mxu0
      %v1855 = vadd.f32 %v504, %v1854
      %v1856 = vpop.f32.mrb[0].mxu0
      %v1857 = vpop.f32.mrb[0].mxu0
      %v1858 = vadd.f32 %v504, %v1857
      %v1859 = vpop.f32.mrb[0].mxu0
      %1860 = vmatprep.mubr.bf16.mxu0 %v1123
      %1861 = vmatmul.mubr.bf16.gmra.mrb[0].mxu0 %v1122
      %v1862 = vpop.f32.mrb[0].mxu0
      %v1863 = vadd.f32 %v504, %v1862
      %v1864 = vpop.f32.mrb[0].mxu0
      %v1865 = vpop.f32.mrb[0].mxu0
      %v1866 = vadd.f32 %v504, %v1865
      %v1867 = vpop.f32.mrb[0].mxu0
      %1868 = vmatprep.mubr.bf16.mxu0 %v1130
      %1869 = vmatmul.mubr.bf16.gmra.mrb[0].mxu0 %v1129
      %v1870 = vpop.f32.mrb[0].mxu0
      %v1871 = vadd.f32 %v504, %v1870
      %v1872 = vpop.f32.mrb[0].mxu0
      %v1873 = vpop.f32.mrb[0].mxu0
      %v1874 = vadd.f32 %v504, %v1873
      %v1875 = vpop.f32.mrb[0].mxu0
      %1876 = vmatprep.mubr.bf16.mxu0 %v1137
      %1877 = vmatmul.mubr.bf16.gmra.mrb[0].mxu0 %v1136
      %v1878 = vpop.f32.mrb[0].mxu0
      %v1879 = vadd.f32 %v504, %v1878
      %v1880 = vpop.f32.mrb[0].mxu0
      %v1881 = vpop.f32.mrb[0].mxu0
      %v1882 = vadd.f32 %v504, %v1881
      %v1883 = vpop.f32.mrb[0].mxu0
      %1884 = vmatprep.mubr.bf16.mxu0 %v1144
      %1885 = vmatmul.mubr.bf16.gmra.mrb[0].mxu0 %v1143
      %v1886 = vpop.f32.mrb[0].mxu0
      %v1887 = vadd.f32 %v504, %v1886
      %v1888 = vpop.f32.mrb[0].mxu0
      %v1889 = vpop.f32.mrb[0].mxu0
      %v1890 = vadd.f32 %v504, %v1889
      %v1891 = vpop.f32.mrb[0].mxu0
      %1892 = vmatprep.mubr.bf16.mxu0 %v1151
      %1893 = vmatmul.mubr.bf16.gmra.mrb[0].mxu0 %v1150
      %v1894 = vpop.f32.mrb[0].mxu0
      %v1895 = vadd.f32 %v504, %v1894
      %v1896 = vpop.f32.mrb[0].mxu0
      %v1897 = vpop.f32.mrb[0].mxu0
      %v1898 = vadd.f32 %v504, %v1897
      %v1899 = vpop.f32.mrb[0].mxu0
      %1900 = vmatprep.mubr.bf16.mxu0 %v1158
      %1901 = vmatmul.mubr.bf16.gmra.mrb[0].mxu0 %v1157
      %v1902 = vpop.f32.mrb[0].mxu0
      %v1903 = vadd.f32 %v504, %v1902
      %v1904 = vpop.f32.mrb[0].mxu0
      %v1905 = vpop.f32.mrb[0].mxu0
      %v1906 = vadd.f32 %v504, %v1905
      %v1907 = vpop.f32.mrb[0].mxu0
      %1908 = vmatprep.mubr.bf16.mxu0 %v1165
      %1909 = vmatmul.mubr.bf16.gmra.mrb[0].mxu0 %v1164
      %v1910 = vpop.f32.mrb[0].mxu0
      %v1911 = vadd.f32 %v504, %v1910
      %v1912 = vpop.f32.mrb[0].mxu0
      %v1913 = vpop.f32.mrb[0].mxu0
      %v1914 = vadd.f32 %v504, %v1913
      %v1915 = vpop.f32.mrb[0].mxu0
      %1916 = vmatprep.mubr.bf16.mxu0 %v1172
      %1917 = vmatmul.mubr.bf16.gmra.mrb[0].mxu0 %v1171
      %v1918 = vpop.f32.mrb[0].mxu0
      %v1919 = vadd.f32 %v504, %v1918
      %v1920 = vpop.f32.mrb[0].mxu0
      %v1921 = vpop.f32.mrb[0].mxu0
      %v1922 = vadd.f32 %v504, %v1921
      %v1923 = vpop.f32.mrb[0].mxu0
      %1924 = vmatprep.mubr.bf16.mxu0 %v1179
      %1925 = vmatmul.mubr.bf16.gmra.mrb[0].mxu0 %v1178
      %v1926 = vpop.f32.mrb[0].mxu0
      %v1927 = vadd.f32 %v504, %v1926
      %v1928 = vpop.f32.mrb[0].mxu0
      %v1929 = vpop.f32.mrb[0].mxu0
      %v1930 = vadd.f32 %v504, %v1929
      %v1931 = vpop.f32.mrb[0].mxu0
      %1932 = vmatprep.mubr.bf16.mxu0 %v1186
      %1933 = vmatmul.mubr.bf16.gmra.mrb[0].mxu0 %v1185
      %v1934 = vpop.f32.mrb[0].mxu0
      %v1935 = vadd.f32 %v504, %v1934
      %v1936 = vpop.f32.mrb[0].mxu0
      %v1937 = vpop.f32.mrb[0].mxu0
      %v1938 = vadd.f32 %v504, %v1937
      %v1939 = vpop.f32.mrb[0].mxu0
      %1940 = vmatprep.mubr.bf16.mxu0 %v1193
      %1941 = vmatmul.mubr.bf16.gmra.mrb[0].mxu0 %v1192
      %v1942 = vpop.f32.mrb[0].mxu0
      %v1943 = vadd.f32 %v504, %v1942
      %v1944 = vpop.f32.mrb[0].mxu0
      %v1945 = vpop.f32.mrb[0].mxu0
      %v1946 = vadd.f32 %v504, %v1945
      %v1947 = vpop.f32.mrb[0].mxu0
      %1948 = vmatprep.mubr.bf16.mxu0 %v1200
      %1949 = vmatmul.mubr.bf16.gmra.mrb[0].mxu0 %v1199
      %v1950 = vpop.f32.mrb[0].mxu0
      %v1951 = vadd.f32 %v504, %v1950
      %v1952 = vpop.f32.mrb[0].mxu0
      %v1953 = vpop.f32.mrb[0].mxu0
      %v1954 = vadd.f32 %v504, %v1953
      %v1955 = vpop.f32.mrb[0].mxu0
      %1956 = vmatprep.mubr.bf16.mxu0 %v1207
      %1957 = vmatmul.mubr.bf16.gmra.mrb[0].mxu0 %v1206
      %v1958 = vpop.f32.mrb[0].mxu0
      %v1959 = vadd.f32 %v504, %v1958
      %v1960 = vpop.f32.mrb[0].mxu0
      %v1961 = vpop.f32.mrb[0].mxu0
      %v1962 = vadd.f32 %v504, %v1961
      %v1963 = vpop.f32.mrb[0].mxu0
      %1964 = vmatprep.mubr.bf16.mxu0 %v1214
      %1965 = vmatmul.mubr.bf16.gmra.mrb[0].mxu0 %v1213
      %v1966 = vpop.f32.mrb[0].mxu0
      %v1967 = vadd.f32 %v504, %v1966
      %v1968 = vpop.f32.mrb[0].mxu0
      %v1969 = vpop.f32.mrb[0].mxu0
      %v1970 = vpop.f32.mrb[0].mxu0
      %1971 = vdwg.mxu0
      %1972 = vmatprep.subr.bf16.mxu0 0
      %1973 = vmatpush1.bf16.msra.mxu0 %v1582
      %1974 = vmatprep.subr.bf16.mxu0 0
      %1975 = vmatpush1.bf16.msra.mxu0 %v1583
      %1976 = vmatprep.subr.bf16.mxu0 0
      %1977 = vmatpush1.bf16.msra.mxu0 %v1584
      %1978 = vmatprep.subr.bf16.mxu0 0
      %1979 = vmatpush1.bf16.msra.mxu0 %v1585
      %1980 = vmatprep.subr.bf16.mxu0 0
      %1981 = vmatpush1.bf16.msra.mxu0 %v1586
      %1982 = vmatprep.subr.bf16.mxu0 0
      %1983 = vmatpush1.bf16.msra.mxu0 %v1587
      %1984 = vmatprep.subr.bf16.mxu0 0
      %1985 = vmatpush1.bf16.msra.mxu0 %v1588
      %1986 = vmatprep.subr.bf16.mxu0 0
      %1987 = vmatpush1.bf16.msra.mxu0 %v1589
      %1988 = vmatprep.subr.bf16.mxu0 0
      %1989 = vmatpush1.bf16.msra.mxu0 %v1590
      %1990 = vmatprep.subr.bf16.mxu0 0
      %1991 = vmatpush1.bf16.msra.mxu0 %v1591
      %1992 = vmatprep.subr.bf16.mxu0 0
      %1993 = vmatpush1.bf16.msra.mxu0 %v1592
      %1994 = vmatprep.subr.bf16.mxu0 0
      %1995 = vmatpush1.bf16.msra.mxu0 %v1593
      %1996 = vmatprep.subr.bf16.mxu0 0
      %1997 = vmatpush1.bf16.msra.mxu0 %v1594
      %1998 = vmatprep.subr.bf16.mxu0 0
      %1999 = vmatpush1.bf16.msra.mxu0 %v1595
      %2000 = vmatprep.subr.bf16.mxu0 0
      %2001 = vmatpush1.bf16.msra.mxu0 %v1596
      %2002 = vmatprep.subr.bf16.mxu0 0
      %2003 = vmatpush1.bf16.msra.mxu0 %v1597
      %2004 = vmatprep.mubr.bf16.mxu0 %v1048
      %2005 = vmatmul.mubr.bf16.gmra.mrb[0].mxu0 %v1047
      %v2006 = vpop.f32.mrb[0].mxu0
      %v2007 = vadd.f32 %v1775, %v2006
      %v2008 = vpop.f32.mrb[0].mxu0
      %v2009 = vpop.f32.mrb[0].mxu0
      %v2010 = vadd.f32 %v1778, %v2009
      %v2011 = vpop.f32.mrb[0].mxu0
      %2012 = vmatprep.mubr.bf16.mxu0 %v1055
      %2013 = vmatmul.mubr.bf16.gmra.mrb[0].mxu0 %v1054
      %v2014 = vpop.f32.mrb[0].mxu0
      %v2015 = vadd.f32 %v1783, %v2014
      %v2016 = vpop.f32.mrb[0].mxu0
      %v2017 = vpop.f32.mrb[0].mxu0
      %v2018 = vadd.f32 %v1786, %v2017
      %v2019 = vpop.f32.mrb[0].mxu0
      %2020 = vmatprep.mubr.bf16.mxu0 %v1062
      %2021 = vmatmul.mubr.bf16.gmra.mrb[0].mxu0 %v1061
      %v2022 = vpop.f32.mrb[0].mxu0
      %v2023 = vadd.f32 %v1791, %v2022
      %v2024 = vpop.f32.mrb[0].mxu0
      %v2025 = vpop.f32.mrb[0].mxu0
      %v2026 = vadd.f32 %v1794, %v2025
      %v2027 = vpop.f32.mrb[0].mxu0
      %2028 = vmatprep.mubr.bf16.mxu0 %v1069
      %2029 = vmatmul.mubr.bf16.gmra.mrb[0].mxu0 %v1068
      %v2030 = vpop.f32.mrb[0].mxu0
      %v2031 = vadd.f32 %v1799, %v2030
      %v2032 = vpop.f32.mrb[0].mxu0
      %v2033 = vpop.f32.mrb[0].mxu0
      %v2034 = vadd.f32 %v1802, %v2033
      %v2035 = vpop.f32.mrb[0].mxu0
      %2036 = vmatprep.mubr.bf16.mxu0 %v1076
      %2037 = vmatmul.mubr.bf16.gmra.mrb[0].mxu0 %v1075
      %v2038 = vpop.f32.mrb[0].mxu0
      %v2039 = vadd.f32 %v1807, %v2038
      %v2040 = vpop.f32.mrb[0].mxu0
      %v2041 = vpop.f32.mrb[0].mxu0
      %v2042 = vadd.f32 %v1810, %v2041
      %v2043 = vpop.f32.mrb[0].mxu0
      %2044 = vmatprep.mubr.bf16.mxu0 %v1083
      %2045 = vmatmul.mubr.bf16.gmra.mrb[0].mxu0 %v1082
      %v2046 = vpop.f32.mrb[0].mxu0
      %v2047 = vadd.f32 %v1815, %v2046
      %v2048 = vpop.f32.mrb[0].mxu0
      %v2049 = vpop.f32.mrb[0].mxu0
      %v2050 = vadd.f32 %v1818, %v2049
      %v2051 = vpop.f32.mrb[0].mxu0
      %2052 = vmatprep.mubr.bf16.mxu0 %v1090
      %2053 = vmatmul.mubr.bf16.gmra.mrb[0].mxu0 %v1089
      %v2054 = vpop.f32.mrb[0].mxu0
      %v2055 = vadd.f32 %v1823, %v2054
      %v2056 = vpop.f32.mrb[0].mxu0
      %v2057 = vpop.f32.mrb[0].mxu0
      %v2058 = vadd.f32 %v1826, %v2057
      %v2059 = vpop.f32.mrb[0].mxu0
      %2060 = vmatprep.mubr.bf16.mxu0 %v1097
      %2061 = vmatmul.mubr.bf16.gmra.mrb[0].mxu0 %v1096
      %v2062 = vpop.f32.mrb[0].mxu0
      %v2063 = vadd.f32 %v1831, %v2062
      %v2064 = vpop.f32.mrb[0].mxu0
      %v2065 = vpop.f32.mrb[0].mxu0
      %v2066 = vadd.f32 %v1834, %v2065
      %v2067 = vpop.f32.mrb[0].mxu0
      %2068 = vmatprep.mubr.bf16.mxu0 %v1104
      %2069 = vmatmul.mubr.bf16.gmra.mrb[0].mxu0 %v1103
      %v2070 = vpop.f32.mrb[0].mxu0
      %v2071 = vadd.f32 %v1839, %v2070
      %v2072 = vpop.f32.mrb[0].mxu0
      %v2073 = vpop.f32.mrb[0].mxu0
      %v2074 = vadd.f32 %v1842, %v2073
      %v2075 = vpop.f32.mrb[0].mxu0
      %2076 = vmatprep.mubr.bf16.mxu0 %v1111
      %2077 = vmatmul.mubr.bf16.gmra.mrb[0].mxu0 %v1110
      %v2078 = vpop.f32.mrb[0].mxu0
      %v2079 = vadd.f32 %v1847, %v2078
      %v2080 = vpop.f32.mrb[0].mxu0
      %v2081 = vpop.f32.mrb[0].mxu0
      %v2082 = vadd.f32 %v1850, %v2081
      %v2083 = vpop.f32.mrb[0].mxu0
      %2084 = vmatprep.mubr.bf16.mxu0 %v1118
      %2085 = vmatmul.mubr.bf16.gmra.mrb[0].mxu0 %v1117
      %v2086 = vpop.f32.mrb[0].mxu0
      %v2087 = vadd.f32 %v1855, %v2086
      %v2088 = vpop.f32.mrb[0].mxu0
      %v2089 = vpop.f32.mrb[0].mxu0
      %v2090 = vadd.f32 %v1858, %v2089
      %v2091 = vpop.f32.mrb[0].mxu0
      %2092 = vmatprep.mubr.bf16.mxu0 %v1125
      %2093 = vmatmul.mubr.bf16.gmra.mrb[0].mxu0 %v1124
      %v2094 = vpop.f32.mrb[0].mxu0
      %v2095 = vadd.f32 %v1863, %v2094
      %v2096 = vpop.f32.mrb[0].mxu0
      %v2097 = vpop.f32.mrb[0].mxu0
      %v2098 = vadd.f32 %v1866, %v2097
      %v2099 = vpop.f32.mrb[0].mxu0
      %2100 = vmatprep.mubr.bf16.mxu0 %v1132
      %2101 = vmatmul.mubr.bf16.gmra.mrb[0].mxu0 %v1131
      %v2102 = vpop.f32.mrb[0].mxu0
      %v2103 = vadd.f32 %v1871, %v2102
      %v2104 = vpop.f32.mrb[0].mxu0
      %v2105 = vpop.f32.mrb[0].mxu0
      %v2106 = vadd.f32 %v1874, %v2105
      %v2107 = vpop.f32.mrb[0].mxu0
      %2108 = vmatprep.mubr.bf16.mxu0 %v1139
      %2109 = vmatmul.mubr.bf16.gmra.mrb[0].mxu0 %v1138
      %v2110 = vpop.f32.mrb[0].mxu0
      %v2111 = vadd.f32 %v1879, %v2110
      %v2112 = vpop.f32.mrb[0].mxu0
      %v2113 = vpop.f32.mrb[0].mxu0
      %v2114 = vadd.f32 %v1882, %v2113
      %v2115 = vpop.f32.mrb[0].mxu0
      %2116 = vmatprep.mubr.bf16.mxu0 %v1146
      %2117 = vmatmul.mubr.bf16.gmra.mrb[0].mxu0 %v1145
      %v2118 = vpop.f32.mrb[0].mxu0
      %v2119 = vadd.f32 %v1887, %v2118
      %v2120 = vpop.f32.mrb[0].mxu0
      %v2121 = vpop.f32.mrb[0].mxu0
      %v2122 = vadd.f32 %v1890, %v2121
      %v2123 = vpop.f32.mrb[0].mxu0
      %2124 = vmatprep.mubr.bf16.mxu0 %v1153
      %2125 = vmatmul.mubr.bf16.gmra.mrb[0].mxu0 %v1152
      %v2126 = vpop.f32.mrb[0].mxu0
      %v2127 = vadd.f32 %v1895, %v2126
      %v2128 = vpop.f32.mrb[0].mxu0
      %v2129 = vpop.f32.mrb[0].mxu0
      %v2130 = vadd.f32 %v1898, %v2129
      %v2131 = vpop.f32.mrb[0].mxu0
      %2132 = vmatprep.mubr.bf16.mxu0 %v1160
      %2133 = vmatmul.mubr.bf16.gmra.mrb[0].mxu0 %v1159
      %v2134 = vpop.f32.mrb[0].mxu0
      %v2135 = vadd.f32 %v1903, %v2134
      %v2136 = vpop.f32.mrb[0].mxu0
      %v2137 = vpop.f32.mrb[0].mxu0
      %v2138 = vadd.f32 %v1906, %v2137
      %v2139 = vpop.f32.mrb[0].mxu0
      %2140 = vmatprep.mubr.bf16.mxu0 %v1167
      %2141 = vmatmul.mubr.bf16.gmra.mrb[0].mxu0 %v1166
      %v2142 = vpop.f32.mrb[0].mxu0
      %v2143 = vadd.f32 %v1911, %v2142
      %v2144 = vpop.f32.mrb[0].mxu0
      %v2145 = vpop.f32.mrb[0].mxu0
      %v2146 = vadd.f32 %v1914, %v2145
      %v2147 = vpop.f32.mrb[0].mxu0
      %2148 = vmatprep.mubr.bf16.mxu0 %v1174
      %2149 = vmatmul.mubr.bf16.gmra.mrb[0].mxu0 %v1173
      %v2150 = vpop.f32.mrb[0].mxu0
      %v2151 = vadd.f32 %v1919, %v2150
      %v2152 = vpop.f32.mrb[0].mxu0
      %v2153 = vpop.f32.mrb[0].mxu0
      %v2154 = vadd.f32 %v1922, %v2153
      %v2155 = vpop.f32.mrb[0].mxu0
      %2156 = vmatprep.mubr.bf16.mxu0 %v1181
      %2157 = vmatmul.mubr.bf16.gmra.mrb[0].mxu0 %v1180
      %v2158 = vpop.f32.mrb[0].mxu0
      %v2159 = vadd.f32 %v1927, %v2158
      %v2160 = vpop.f32.mrb[0].mxu0
      %v2161 = vpop.f32.mrb[0].mxu0
      %v2162 = vadd.f32 %v1930, %v2161
      %v2163 = vpop.f32.mrb[0].mxu0
      %2164 = vmatprep.mubr.bf16.mxu0 %v1188
      %2165 = vmatmul.mubr.bf16.gmra.mrb[0].mxu0 %v1187
      %v2166 = vpop.f32.mrb[0].mxu0
      %v2167 = vadd.f32 %v1935, %v2166
      %v2168 = vpop.f32.mrb[0].mxu0
      %v2169 = vpop.f32.mrb[0].mxu0
      %v2170 = vadd.f32 %v1938, %v2169
      %v2171 = vpop.f32.mrb[0].mxu0
      %2172 = vmatprep.mubr.bf16.mxu0 %v1195
      %2173 = vmatmul.mubr.bf16.gmra.mrb[0].mxu0 %v1194
      %v2174 = vpop.f32.mrb[0].mxu0
      %v2175 = vadd.f32 %v1943, %v2174
      %v2176 = vpop.f32.mrb[0].mxu0
      %v2177 = vpop.f32.mrb[0].mxu0
      %v2178 = vadd.f32 %v1946, %v2177
      %v2179 = vpop.f32.mrb[0].mxu0
      %2180 = vmatprep.mubr.bf16.mxu0 %v1202
      %2181 = vmatmul.mubr.bf16.gmra.mrb[0].mxu0 %v1201
      %v2182 = vpop.f32.mrb[0].mxu0
      %v2183 = vadd.f32 %v1951, %v2182
      %v2184 = vpop.f32.mrb[0].mxu0
      %v2185 = vpop.f32.mrb[0].mxu0
      %v2186 = vadd.f32 %v1954, %v2185
      %v2187 = vpop.f32.mrb[0].mxu0
      %2188 = vmatprep.mubr.bf16.mxu0 %v1209
      %2189 = vmatmul.mubr.bf16.gmra.mrb[0].mxu0 %v1208
      %v2190 = vpop.f32.mrb[0].mxu0
      %v2191 = vadd.f32 %v1959, %v2190
      %v2192 = vpop.f32.mrb[0].mxu0
      %v2193 = vpop.f32.mrb[0].mxu0
      %v2194 = vadd.f32 %v1962, %v2193
      %v2195 = vpop.f32.mrb[0].mxu0
      %2196 = vmatprep.mubr.bf16.mxu0 %v1216
      %2197 = vmatmul.mubr.bf16.gmra.mrb[0].mxu0 %v1215
      %v2198 = vpop.f32.mrb[0].mxu0
      %v2199 = vadd.f32 %v1967, %v2198
      %v2200 = vpop.f32.mrb[0].mxu0
      %v2201 = vpop.f32.mrb[0].mxu0
      %v2202 = vpop.f32.mrb[0].mxu0
      %2203 = vdwg.mxu0
      %2204 = vmatprep.subr.bf16.mxu0 0
      %2205 = vmatpush1.bf16.msra.mxu0 %v1598
      %2206 = vmatprep.subr.bf16.mxu0 0
      %2207 = vmatpush1.bf16.msra.mxu0 %v1599
      %2208 = vmatprep.subr.bf16.mxu0 0
      %2209 = vmatpush1.bf16.msra.mxu0 %v1600
      %2210 = vmatprep.subr.bf16.mxu0 0
      %2211 = vmatpush1.bf16.msra.mxu0 %v1601
      %2212 = vmatprep.subr.bf16.mxu0 0
      %2213 = vmatpush1.bf16.msra.mxu0 %v1602
      %2214 = vmatprep.subr.bf16.mxu0 0
      %2215 = vmatpush1.bf16.msra.mxu0 %v1603
      %2216 = vmatprep.subr.bf16.mxu0 0
      %2217 = vmatpush1.bf16.msra.mxu0 %v1604
      %2218 = vmatprep.subr.bf16.mxu0 0
      %2219 = vmatpush1.bf16.msra.mxu0 %v1605
      %2220 = vmatprep.subr.bf16.mxu0 0
      %2221 = vmatpush1.bf16.msra.mxu0 %v1606
      %2222 = vmatprep.subr.bf16.mxu0 0
      %2223 = vmatpush1.bf16.msra.mxu0 %v1607
      %2224 = vmatprep.subr.bf16.mxu0 0
      %2225 = vmatpush1.bf16.msra.mxu0 %v1608
      %2226 = vmatprep.subr.bf16.mxu0 0
      %2227 = vmatpush1.bf16.msra.mxu0 %v1609
      %2228 = vmatprep.subr.bf16.mxu0 0
      %2229 = vmatpush1.bf16.msra.mxu0 %v1610
      %2230 = vmatprep.subr.bf16.mxu0 0
      %2231 = vmatpush1.bf16.msra.mxu0 %v1611
      %2232 = vmatprep.subr.bf16.mxu0 0
      %2233 = vmatpush1.bf16.msra.mxu0 %v1612
      %2234 = vmatprep.subr.bf16.mxu0 0
      %2235 = vmatpush1.bf16.msra.mxu0 %v1613
      %2236 = vmatprep.mubr.bf16.mxu0 %v1050
      %2237 = vmatmul.mubr.bf16.gmra.mrb[0].mxu0 %v1049
      %v2238 = vpop.f32.mrb[0].mxu0
      %v2239 = vadd.f32 %v2007, %v2238
      %v2240 = vpop.f32.mrb[0].mxu0
      %v2241 = vpop.f32.mrb[0].mxu0
      %v2242 = vadd.f32 %v2010, %v2241
      %v2243 = vpop.f32.mrb[0].mxu0
      %2244 = vmatprep.mubr.bf16.mxu0 %v1057
      %2245 = vmatmul.mubr.bf16.gmra.mrb[0].mxu0 %v1056
      %v2246 = vpop.f32.mrb[0].mxu0
      %v2247 = vadd.f32 %v2015, %v2246
      %v2248 = vpop.f32.mrb[0].mxu0
      %v2249 = vpop.f32.mrb[0].mxu0
      %v2250 = vadd.f32 %v2018, %v2249
      %v2251 = vpop.f32.mrb[0].mxu0
      %2252 = vmatprep.mubr.bf16.mxu0 %v1064
      %2253 = vmatmul.mubr.bf16.gmra.mrb[0].mxu0 %v1063
      %v2254 = vpop.f32.mrb[0].mxu0
      %v2255 = vadd.f32 %v2023, %v2254
      %v2256 = vpop.f32.mrb[0].mxu0
      %v2257 = vpop.f32.mrb[0].mxu0
      %v2258 = vadd.f32 %v2026, %v2257
      %v2259 = vpop.f32.mrb[0].mxu0
      %2260 = vmatprep.mubr.bf16.mxu0 %v1071
      %2261 = vmatmul.mubr.bf16.gmra.mrb[0].mxu0 %v1070
      %v2262 = vpop.f32.mrb[0].mxu0
      %v2263 = vadd.f32 %v2031, %v2262
      %v2264 = vpop.f32.mrb[0].mxu0
      %v2265 = vpop.f32.mrb[0].mxu0
      %v2266 = vadd.f32 %v2034, %v2265
      %v2267 = vpop.f32.mrb[0].mxu0
      %2268 = vmatprep.mubr.bf16.mxu0 %v1078
      %2269 = vmatmul.mubr.bf16.gmra.mrb[0].mxu0 %v1077
      %v2270 = vpop.f32.mrb[0].mxu0
      %v2271 = vadd.f32 %v2039, %v2270
      %v2272 = vpop.f32.mrb[0].mxu0
      %v2273 = vpop.f32.mrb[0].mxu0
      %v2274 = vadd.f32 %v2042, %v2273
      %v2275 = vpop.f32.mrb[0].mxu0
      %2276 = vmatprep.mubr.bf16.mxu0 %v1085
      %2277 = vmatmul.mubr.bf16.gmra.mrb[0].mxu0 %v1084
      %v2278 = vpop.f32.mrb[0].mxu0
      %v2279 = vadd.f32 %v2047, %v2278
      %v2280 = vpop.f32.mrb[0].mxu0
      %v2281 = vpop.f32.mrb[0].mxu0
      %v2282 = vadd.f32 %v2050, %v2281
      %v2283 = vpop.f32.mrb[0].mxu0
      %2284 = vmatprep.mubr.bf16.mxu0 %v1092
      %2285 = vmatmul.mubr.bf16.gmra.mrb[0].mxu0 %v1091
      %v2286 = vpop.f32.mrb[0].mxu0
      %v2287 = vadd.f32 %v2055, %v2286
      %v2288 = vpop.f32.mrb[0].mxu0
      %v2289 = vpop.f32.mrb[0].mxu0
      %v2290 = vadd.f32 %v2058, %v2289
      %v2291 = vpop.f32.mrb[0].mxu0
      %2292 = vmatprep.mubr.bf16.mxu0 %v1099
      %2293 = vmatmul.mubr.bf16.gmra.mrb[0].mxu0 %v1098
      %v2294 = vpop.f32.mrb[0].mxu0
      %v2295 = vadd.f32 %v2063, %v2294
      %v2296 = vpop.f32.mrb[0].mxu0
      %v2297 = vpop.f32.mrb[0].mxu0
      %v2298 = vadd.f32 %v2066, %v2297
      %v2299 = vpop.f32.mrb[0].mxu0
      %2300 = vmatprep.mubr.bf16.mxu0 %v1106
      %2301 = vmatmul.mubr.bf16.gmra.mrb[0].mxu0 %v1105
      %v2302 = vpop.f32.mrb[0].mxu0
      %v2303 = vadd.f32 %v2071, %v2302
      %v2304 = vpop.f32.mrb[0].mxu0
      %v2305 = vpop.f32.mrb[0].mxu0
      %v2306 = vadd.f32 %v2074, %v2305
      %v2307 = vpop.f32.mrb[0].mxu0
      %2308 = vmatprep.mubr.bf16.mxu0 %v1113
      %2309 = vmatmul.mubr.bf16.gmra.mrb[0].mxu0 %v1112
      %v2310 = vpop.f32.mrb[0].mxu0
      %v2311 = vadd.f32 %v2079, %v2310
      %v2312 = vpop.f32.mrb[0].mxu0
      %v2313 = vpop.f32.mrb[0].mxu0
      %v2314 = vadd.f32 %v2082, %v2313
      %v2315 = vpop.f32.mrb[0].mxu0
      %2316 = vmatprep.mubr.bf16.mxu0 %v1120
      %2317 = vmatmul.mubr.bf16.gmra.mrb[0].mxu0 %v1119
      %v2318 = vpop.f32.mrb[0].mxu0
      %v2319 = vadd.f32 %v2087, %v2318
      %v2320 = vpop.f32.mrb[0].mxu0
      %v2321 = vpop.f32.mrb[0].mxu0
      %v2322 = vadd.f32 %v2090, %v2321
      %v2323 = vpop.f32.mrb[0].mxu0
      %2324 = vmatprep.mubr.bf16.mxu0 %v1127
      %2325 = vmatmul.mubr.bf16.gmra.mrb[0].mxu0 %v1126
      %v2326 = vpop.f32.mrb[0].mxu0
      %v2327 = vadd.f32 %v2095, %v2326
      %v2328 = vpop.f32.mrb[0].mxu0
      %v2329 = vpop.f32.mrb[0].mxu0
      %v2330 = vadd.f32 %v2098, %v2329
      %v2331 = vpop.f32.mrb[0].mxu0
      %2332 = vmatprep.mubr.bf16.mxu0 %v1134
      %2333 = vmatmul.mubr.bf16.gmra.mrb[0].mxu0 %v1133
      %v2334 = vpop.f32.mrb[0].mxu0
      %v2335 = vadd.f32 %v2103, %v2334
      %v2336 = vpop.f32.mrb[0].mxu0
      %v2337 = vpop.f32.mrb[0].mxu0
      %v2338 = vadd.f32 %v2106, %v2337
      %v2339 = vpop.f32.mrb[0].mxu0
      %2340 = vmatprep.mubr.bf16.mxu0 %v1141
      %2341 = vmatmul.mubr.bf16.gmra.mrb[0].mxu0 %v1140
      %v2342 = vpop.f32.mrb[0].mxu0
      %v2343 = vadd.f32 %v2111, %v2342
      %v2344 = vpop.f32.mrb[0].mxu0
      %v2345 = vpop.f32.mrb[0].mxu0
      %v2346 = vadd.f32 %v2114, %v2345
      %v2347 = vpop.f32.mrb[0].mxu0
      %2348 = vmatprep.mubr.bf16.mxu0 %v1148
      %2349 = vmatmul.mubr.bf16.gmra.mrb[0].mxu0 %v1147
      %v2350 = vpop.f32.mrb[0].mxu0
      %v2351 = vadd.f32 %v2119, %v2350
      %v2352 = vpop.f32.mrb[0].mxu0
      %v2353 = vpop.f32.mrb[0].mxu0
      %v2354 = vadd.f32 %v2122, %v2353
      %v2355 = vpop.f32.mrb[0].mxu0
      %2356 = vmatprep.mubr.bf16.mxu0 %v1155
      %2357 = vmatmul.mubr.bf16.gmra.mrb[0].mxu0 %v1154
      %v2358 = vpop.f32.mrb[0].mxu0
      %v2359 = vadd.f32 %v2127, %v2358
      %v2360 = vpop.f32.mrb[0].mxu0
      %v2361 = vpop.f32.mrb[0].mxu0
      %v2362 = vadd.f32 %v2130, %v2361
      %v2363 = vpop.f32.mrb[0].mxu0
      %2364 = vmatprep.mubr.bf16.mxu0 %v1162
      %2365 = vmatmul.mubr.bf16.gmra.mrb[0].mxu0 %v1161
      %v2366 = vpop.f32.mrb[0].mxu0
      %v2367 = vadd.f32 %v2135, %v2366
      %v2368 = vpop.f32.mrb[0].mxu0
      %v2369 = vpop.f32.mrb[0].mxu0
      %v2370 = vadd.f32 %v2138, %v2369
      %v2371 = vpop.f32.mrb[0].mxu0
      %2372 = vmatprep.mubr.bf16.mxu0 %v1169
      %2373 = vmatmul.mubr.bf16.gmra.mrb[0].mxu0 %v1168
      %v2374 = vpop.f32.mrb[0].mxu0
      %v2375 = vadd.f32 %v2143, %v2374
      %v2376 = vpop.f32.mrb[0].mxu0
      %v2377 = vpop.f32.mrb[0].mxu0
      %v2378 = vadd.f32 %v2146, %v2377
      %v2379 = vpop.f32.mrb[0].mxu0
      %2380 = vmatprep.mubr.bf16.mxu0 %v1176
      %2381 = vmatmul.mubr.bf16.gmra.mrb[0].mxu0 %v1175
      %v2382 = vpop.f32.mrb[0].mxu0
      %v2383 = vadd.f32 %v2151, %v2382
      %v2384 = vpop.f32.mrb[0].mxu0
      %v2385 = vpop.f32.mrb[0].mxu0
      %v2386 = vadd.f32 %v2154, %v2385
      %v2387 = vpop.f32.mrb[0].mxu0
      %2388 = vmatprep.mubr.bf16.mxu0 %v1183
      %2389 = vmatmul.mubr.bf16.gmra.mrb[0].mxu0 %v1182
      %v2390 = vpop.f32.mrb[0].mxu0
      %v2391 = vadd.f32 %v2159, %v2390
      %v2392 = vpop.f32.mrb[0].mxu0
      %v2393 = vpop.f32.mrb[0].mxu0
      %v2394 = vadd.f32 %v2162, %v2393
      %v2395 = vpop.f32.mrb[0].mxu0
      %2396 = vmatprep.mubr.bf16.mxu0 %v1190
      %2397 = vmatmul.mubr.bf16.gmra.mrb[0].mxu0 %v1189
      %v2398 = vpop.f32.mrb[0].mxu0
      %v2399 = vadd.f32 %v2167, %v2398
      %v2400 = vpop.f32.mrb[0].mxu0
      %v2401 = vpop.f32.mrb[0].mxu0
      %v2402 = vadd.f32 %v2170, %v2401
      %v2403 = vpop.f32.mrb[0].mxu0
      %2404 = vmatprep.mubr.bf16.mxu0 %v1197
      %2405 = vmatmul.mubr.bf16.gmra.mrb[0].mxu0 %v1196
      %v2406 = vpop.f32.mrb[0].mxu0
      %v2407 = vadd.f32 %v2175, %v2406
      %v2408 = vpop.f32.mrb[0].mxu0
      %v2409 = vpop.f32.mrb[0].mxu0
      %v2410 = vadd.f32 %v2178, %v2409
      %v2411 = vpop.f32.mrb[0].mxu0
      %2412 = vmatprep.mubr.bf16.mxu0 %v1204
      %2413 = vmatmul.mubr.bf16.gmra.mrb[0].mxu0 %v1203
      %v2414 = vpop.f32.mrb[0].mxu0
      %v2415 = vadd.f32 %v2183, %v2414
      %v2416 = vpop.f32.mrb[0].mxu0
      %v2417 = vpop.f32.mrb[0].mxu0
      %v2418 = vadd.f32 %v2186, %v2417
      %v2419 = vpop.f32.mrb[0].mxu0
      %2420 = vmatprep.mubr.bf16.mxu0 %v1211
      %2421 = vmatmul.mubr.bf16.gmra.mrb[0].mxu0 %v1210
      %v2422 = vpop.f32.mrb[0].mxu0
      %v2423 = vadd.f32 %v2191, %v2422
      %v2424 = vpop.f32.mrb[0].mxu0
      %v2425 = vpop.f32.mrb[0].mxu0
      %v2426 = vadd.f32 %v2194, %v2425
      %v2427 = vpop.f32.mrb[0].mxu0
      %2428 = vmatprep.mubr.bf16.mxu0 %v1218
      %2429 = vmatmul.mubr.bf16.gmra.mrb[0].mxu0 %v1217
      %v2430 = vpop.f32.mrb[0].mxu0
      %v2431 = vadd.f32 %v2199, %v2430
      %v2432 = vpop.f32.mrb[0].mxu0
      %v2433 = vpop.f32.mrb[0].mxu0
      %v2434 = vpop.f32.mrb[0].mxu0
      %2435 = vdwg.mxu0
      %2436 = vmatprep.subr.bf16.mxu0 0
      %2437 = vmatpush1.bf16.msra.mxu0 %v1614
      %2438 = vmatprep.subr.bf16.mxu0 0
      %2439 = vmatpush1.bf16.msra.mxu0 0
      %2440 = vmatprep.subr.bf16.mxu0 0
      %2441 = vmatpush1.bf16.msra.mxu0 0
      %2442 = vmatprep.subr.bf16.mxu0 0
      %2443 = vmatpush1.bf16.msra.mxu0 0
      %2444 = vmatprep.subr.bf16.mxu0 0
      %2445 = vmatpush1.bf16.msra.mxu0 0
      %2446 = vmatprep.subr.bf16.mxu0 0
      %2447 = vmatpush1.bf16.msra.mxu0 0
      %2448 = vmatprep.subr.bf16.mxu0 0
      %2449 = vmatpush1.bf16.msra.mxu0 0
      %2450 = vmatprep.subr.bf16.mxu0 0
      %2451 = vmatpush1.bf16.msra.mxu0 0
      %2452 = vmatprep.subr.bf16.mxu0 0
      %2453 = vmatpush1.bf16.msra.mxu0 0
      %2454 = vmatprep.subr.bf16.mxu0 0
      %2455 = vmatpush1.bf16.msra.mxu0 0
      %2456 = vmatprep.subr.bf16.mxu0 0
      %2457 = vmatpush1.bf16.msra.mxu0 0
      %2458 = vmatprep.subr.bf16.mxu0 0
      %2459 = vmatpush1.bf16.msra.mxu0 0
      %2460 = vmatprep.subr.bf16.mxu0 0
      %2461 = vmatpush1.bf16.msra.mxu0 0
      %2462 = vmatprep.subr.bf16.mxu0 0
      %2463 = vmatpush1.bf16.msra.mxu0 0
      %2464 = vmatprep.subr.bf16.mxu0 0
      %2465 = vmatpush1.bf16.msra.mxu0 0
      %2466 = vmatprep.subr.bf16.mxu0 0
      %2467 = vmatpush1.bf16.msra.mxu0 0
      %2468 = vmatprep.mubr.bf16.mxu0 0
      %2469 = vmatmul.mubr.bf16.gmra.mrb[0].mxu0 %v1666
      %v2470 = vpop.f32.mrb[0].mxu0
      %v2471 = vadd.f32 %v2239, %v2470
      %v2472 = vpop.f32.mrb[0].mxu0
      %v2473 = vpop.f32.mrb[0].mxu0
      %v2474 = vadd.f32 %v2242, %v2473
      %v2475 = vpop.f32.mrb[0].mxu0
      %2476 = vmatprep.mubr.bf16.mxu0 0
      %2477 = vmatmul.mubr.bf16.gmra.mrb[0].mxu0 %v1669
      %v2478 = vpop.f32.mrb[0].mxu0
      %v2479 = vadd.f32 %v2247, %v2478
      %v2480 = vpop.f32.mrb[0].mxu0
      %v2481 = vpop.f32.mrb[0].mxu0
      %v2482 = vadd.f32 %v2250, %v2481
      %v2483 = vpop.f32.mrb[0].mxu0
      %2484 = vmatprep.mubr.bf16.mxu0 0
      %2485 = vmatmul.mubr.bf16.gmra.mrb[0].mxu0 %v1672
      %v2486 = vpop.f32.mrb[0].mxu0
      %v2487 = vadd.f32 %v2255, %v2486
      %v2488 = vpop.f32.mrb[0].mxu0
      %v2489 = vpop.f32.mrb[0].mxu0
      %v2490 = vadd.f32 %v2258, %v2489
      %v2491 = vpop.f32.mrb[0].mxu0
      %2492 = vmatprep.mubr.bf16.mxu0 0
      %2493 = vmatmul.mubr.bf16.gmra.mrb[0].mxu0 %v1675
      %v2494 = vpop.f32.mrb[0].mxu0
      %v2495 = vadd.f32 %v2263, %v2494
      %v2496 = vpop.f32.mrb[0].mxu0
      %v2497 = vpop.f32.mrb[0].mxu0
      %v2498 = vadd.f32 %v2266, %v2497
      %v2499 = vpop.f32.mrb[0].mxu0
      %2500 = vmatprep.mubr.bf16.mxu0 0
      %2501 = vmatmul.mubr.bf16.gmra.mrb[0].mxu0 %v1678
      %v2502 = vpop.f32.mrb[0].mxu0
      %v2503 = vadd.f32 %v2271, %v2502
      %v2504 = vpop.f32.mrb[0].mxu0
      %v2505 = vpop.f32.mrb[0].mxu0
      %v2506 = vadd.f32 %v2274, %v2505
      %v2507 = vpop.f32.mrb[0].mxu0
      %2508 = vmatprep.mubr.bf16.mxu0 0
      %2509 = vmatmul.mubr.bf16.gmra.mrb[0].mxu0 %v1681
      %v2510 = vpop.f32.mrb[0].mxu0
      %v2511 = vadd.f32 %v2279, %v2510
      %v2512 = vpop.f32.mrb[0].mxu0
      %v2513 = vpop.f32.mrb[0].mxu0
      %v2514 = vadd.f32 %v2282, %v2513
      %v2515 = vpop.f32.mrb[0].mxu0
      %2516 = vmatprep.mubr.bf16.mxu0 0
      %2517 = vmatmul.mubr.bf16.gmra.mrb[0].mxu0 %v1684
      %v2518 = vpop.f32.mrb[0].mxu0
      %v2519 = vadd.f32 %v2287, %v2518
      %v2520 = vpop.f32.mrb[0].mxu0
      %v2521 = vpop.f32.mrb[0].mxu0
      %v2522 = vadd.f32 %v2290, %v2521
      %v2523 = vpop.f32.mrb[0].mxu0
      %2524 = vmatprep.mubr.bf16.mxu0 0
      %2525 = vmatmul.mubr.bf16.gmra.mrb[0].mxu0 %v1687
      %v2526 = vpop.f32.mrb[0].mxu0
      %v2527 = vadd.f32 %v2295, %v2526
      %v2528 = vpop.f32.mrb[0].mxu0
      %v2529 = vpop.f32.mrb[0].mxu0
      %v2530 = vadd.f32 %v2298, %v2529
      %v2531 = vpop.f32.mrb[0].mxu0
      %2532 = vmatprep.mubr.bf16.mxu0 0
      %2533 = vmatmul.mubr.bf16.gmra.mrb[0].mxu0 %v1690
      %v2534 = vpop.f32.mrb[0].mxu0
      %v2535 = vadd.f32 %v2303, %v2534
      %v2536 = vpop.f32.mrb[0].mxu0
      %v2537 = vpop.f32.mrb[0].mxu0
      %v2538 = vadd.f32 %v2306, %v2537
      %v2539 = vpop.f32.mrb[0].mxu0
      %2540 = vmatprep.mubr.bf16.mxu0 0
      %2541 = vmatmul.mubr.bf16.gmra.mrb[0].mxu0 %v1693
      %v2542 = vpop.f32.mrb[0].mxu0
      %v2543 = vadd.f32 %v2311, %v2542
      %v2544 = vpop.f32.mrb[0].mxu0
      %v2545 = vpop.f32.mrb[0].mxu0
      %v2546 = vadd.f32 %v2314, %v2545
      %v2547 = vpop.f32.mrb[0].mxu0
      %2548 = vmatprep.mubr.bf16.mxu0 0
      %2549 = vmatmul.mubr.bf16.gmra.mrb[0].mxu0 %v1696
      %v2550 = vpop.f32.mrb[0].mxu0
      %v2551 = vadd.f32 %v2319, %v2550
      %v2552 = vpop.f32.mrb[0].mxu0
      %v2553 = vpop.f32.mrb[0].mxu0
      %v2554 = vadd.f32 %v2322, %v2553
      %v2555 = vpop.f32.mrb[0].mxu0
      %2556 = vmatprep.mubr.bf16.mxu0 0
      %2557 = vmatmul.mubr.bf16.gmra.mrb[0].mxu0 %v1699
      %v2558 = vpop.f32.mrb[0].mxu0
      %v2559 = vadd.f32 %v2327, %v2558
      %v2560 = vpop.f32.mrb[0].mxu0
      %v2561 = vpop.f32.mrb[0].mxu0
      %v2562 = vadd.f32 %v2330, %v2561
      %v2563 = vpop.f32.mrb[0].mxu0
      %2564 = vmatprep.mubr.bf16.mxu0 0
      %2565 = vmatmul.mubr.bf16.gmra.mrb[0].mxu0 %v1702
      %v2566 = vpop.f32.mrb[0].mxu0
      %v2567 = vadd.f32 %v2335, %v2566
      %v2568 = vpop.f32.mrb[0].mxu0
      %v2569 = vpop.f32.mrb[0].mxu0
      %v2570 = vadd.f32 %v2338, %v2569
      %v2571 = vpop.f32.mrb[0].mxu0
      %2572 = vmatprep.mubr.bf16.mxu0 0
      %2573 = vmatmul.mubr.bf16.gmra.mrb[0].mxu0 %v1705
      %v2574 = vpop.f32.mrb[0].mxu0
      %v2575 = vadd.f32 %v2343, %v2574
      %v2576 = vpop.f32.mrb[0].mxu0
      %v2577 = vpop.f32.mrb[0].mxu0
      %v2578 = vadd.f32 %v2346, %v2577
      %v2579 = vpop.f32.mrb[0].mxu0
      %2580 = vmatprep.mubr.bf16.mxu0 0
      %2581 = vmatmul.mubr.bf16.gmra.mrb[0].mxu0 %v1708
      %v2582 = vpop.f32.mrb[0].mxu0
      %v2583 = vadd.f32 %v2351, %v2582
      %v2584 = vpop.f32.mrb[0].mxu0
      %v2585 = vpop.f32.mrb[0].mxu0
      %v2586 = vadd.f32 %v2354, %v2585
      %v2587 = vpop.f32.mrb[0].mxu0
      %2588 = vmatprep.mubr.bf16.mxu0 0
      %2589 = vmatmul.mubr.bf16.gmra.mrb[0].mxu0 %v1711
      %v2590 = vpop.f32.mrb[0].mxu0
      %v2591 = vadd.f32 %v2359, %v2590
      %v2592 = vpop.f32.mrb[0].mxu0
      %v2593 = vpop.f32.mrb[0].mxu0
      %v2594 = vadd.f32 %v2362, %v2593
      %v2595 = vpop.f32.mrb[0].mxu0
      %2596 = vmatprep.mubr.bf16.mxu0 0
      %2597 = vmatmul.mubr.bf16.gmra.mrb[0].mxu0 %v1714
      %v2598 = vpop.f32.mrb[0].mxu0
      %v2599 = vadd.f32 %v2367, %v2598
      %v2600 = vpop.f32.mrb[0].mxu0
      %v2601 = vpop.f32.mrb[0].mxu0
      %v2602 = vadd.f32 %v2370, %v2601
      %v2603 = vpop.f32.mrb[0].mxu0
      %2604 = vmatprep.mubr.bf16.mxu0 0
      %2605 = vmatmul.mubr.bf16.gmra.mrb[0].mxu0 %v1717
      %v2606 = vpop.f32.mrb[0].mxu0
      %v2607 = vadd.f32 %v2375, %v2606
      %v2608 = vpop.f32.mrb[0].mxu0
      %v2609 = vpop.f32.mrb[0].mxu0
      %v2610 = vadd.f32 %v2378, %v2609
      %v2611 = vpop.f32.mrb[0].mxu0
      %2612 = vmatprep.mubr.bf16.mxu0 0
      %2613 = vmatmul.mubr.bf16.gmra.mrb[0].mxu0 %v1720
      %v2614 = vpop.f32.mrb[0].mxu0
      %v2615 = vadd.f32 %v2383, %v2614
      %v2616 = vpop.f32.mrb[0].mxu0
      %v2617 = vpop.f32.mrb[0].mxu0
      %v2618 = vadd.f32 %v2386, %v2617
      %v2619 = vpop.f32.mrb[0].mxu0
      %2620 = vmatprep.mubr.bf16.mxu0 0
      %2621 = vmatmul.mubr.bf16.gmra.mrb[0].mxu0 %v1723
      %v2622 = vpop.f32.mrb[0].mxu0
      %v2623 = vadd.f32 %v2391, %v2622
      %v2624 = vpop.f32.mrb[0].mxu0
      %v2625 = vpop.f32.mrb[0].mxu0
      %v2626 = vadd.f32 %v2394, %v2625
      %v2627 = vpop.f32.mrb[0].mxu0
      %2628 = vmatprep.mubr.bf16.mxu0 0
      %2629 = vmatmul.mubr.bf16.gmra.mrb[0].mxu0 %v1726
      %v2630 = vpop.f32.mrb[0].mxu0
      %v2631 = vadd.f32 %v2399, %v2630
      %v2632 = vpop.f32.mrb[0].mxu0
      %v2633 = vpop.f32.mrb[0].mxu0
      %v2634 = vadd.f32 %v2402, %v2633
      %v2635 = vpop.f32.mrb[0].mxu0
      %2636 = vmatprep.mubr.bf16.mxu0 0
      %2637 = vmatmul.mubr.bf16.gmra.mrb[0].mxu0 %v1729
      %v2638 = vpop.f32.mrb[0].mxu0
      %v2639 = vadd.f32 %v2407, %v2638
      %v2640 = vpop.f32.mrb[0].mxu0
      %v2641 = vpop.f32.mrb[0].mxu0
      %v2642 = vadd.f32 %v2410, %v2641
      %v2643 = vpop.f32.mrb[0].mxu0
      %2644 = vmatprep.mubr.bf16.mxu0 0
      %2645 = vmatmul.mubr.bf16.gmra.mrb[0].mxu0 %v1732
      %v2646 = vpop.f32.mrb[0].mxu0
      %v2647 = vadd.f32 %v2415, %v2646
      %v2648 = vpop.f32.mrb[0].mxu0
      %v2649 = vpop.f32.mrb[0].mxu0
      %v2650 = vadd.f32 %v2418, %v2649
      %v2651 = vpop.f32.mrb[0].mxu0
      %2652 = vmatprep.mubr.bf16.mxu0 0
      %2653 = vmatmul.mubr.bf16.gmra.mrb[0].mxu0 %v1735
      %v2654 = vpop.f32.mrb[0].mxu0
      %v2655 = vadd.f32 %v2423, %v2654
      %v2656 = vpop.f32.mrb[0].mxu0
      %v2657 = vpop.f32.mrb[0].mxu0
      %v2658 = vadd.f32 %v2426, %v2657
      %v2659 = vpop.f32.mrb[0].mxu0
      %2660 = vmatprep.mubr.bf16.mxu0 0
      %2661 = vmatmul.mubr.bf16.gmra.mrb[0].mxu0 %v1738
      %v2662 = vpop.f32.mrb[0].mxu0
      %v2663 = vadd.f32 %v2431, %v2662
      %v2664 = vpop.f32.mrb[0].mxu0
      %v2665 = vpop.f32.mrb[0].mxu0
      %v2666 = vpop.f32.mrb[0].mxu0
      %2667 = vdwg.mxu0
      %vm2668 = vcmp.ge.f32.partialorder %v2471, 0.0
      %vm2669 = vcmp.ge.f32.partialorder %v2474, 0.0
      %vm2670 = vcmp.ge.f32.partialorder %v2479, 0.0
      %vm2671 = vcmp.ge.f32.partialorder %v2482, 0.0
      %vm2672 = vcmp.ge.f32.partialorder %v2487, 0.0
      %vm2673 = vcmp.ge.f32.partialorder %v2490, 0.0
      %vm2674 = vcmp.ge.f32.partialorder %v2495, 0.0
      %vm2675 = vcmp.ge.f32.partialorder %v2498, 0.0
      %vm2676 = vcmp.ge.f32.partialorder %v2503, 0.0
      %vm2677 = vcmp.ge.f32.partialorder %v2506, 0.0
      %vm2678 = vcmp.ge.f32.partialorder %v2511, 0.0
      %vm2679 = vcmp.ge.f32.partialorder %v2514, 0.0
      %vm2680 = vcmp.ge.f32.partialorder %v2519, 0.0
      %vm2681 = vcmp.ge.f32.partialorder %v2522, 0.0
      %vm2682 = vcmp.ge.f32.partialorder %v2527, 0.0
      %vm2683 = vcmp.ge.f32.partialorder %v2530, 0.0
      %vm2684 = vcmp.ge.f32.partialorder %v2535, 0.0
      %vm2685 = vcmp.ge.f32.partialorder %v2538, 0.0
      %vm2686 = vcmp.ge.f32.partialorder %v2543, 0.0
      %vm2687 = vcmp.ge.f32.partialorder %v2546, 0.0
      %vm2688 = vcmp.ge.f32.partialorder %v2551, 0.0
      %vm2689 = vcmp.ge.f32.partialorder %v2554, 0.0
      %vm2690 = vcmp.ge.f32.partialorder %v2559, 0.0
      %vm2691 = vcmp.ge.f32.partialorder %v2562, 0.0
      %vm2692 = vcmp.ge.f32.partialorder %v2567, 0.0
      %vm2693 = vcmp.ge.f32.partialorder %v2570, 0.0
      %vm2694 = vcmp.ge.f32.partialorder %v2575, 0.0
      %vm2695 = vcmp.ge.f32.partialorder %v2578, 0.0
      %vm2696 = vcmp.ge.f32.partialorder %v2583, 0.0
      %vm2697 = vcmp.ge.f32.partialorder %v2586, 0.0
      %vm2698 = vcmp.ge.f32.partialorder %v2591, 0.0
      %vm2699 = vcmp.ge.f32.partialorder %v2594, 0.0
      %vm2700 = vcmp.ge.f32.partialorder %v2599, 0.0
      %vm2701 = vcmp.ge.f32.partialorder %v2602, 0.0
      %vm2702 = vcmp.ge.f32.partialorder %v2607, 0.0
      %vm2703 = vcmp.ge.f32.partialorder %v2610, 0.0
      %vm2704 = vcmp.ge.f32.partialorder %v2615, 0.0
      %vm2705 = vcmp.ge.f32.partialorder %v2618, 0.0
      %vm2706 = vcmp.ge.f32.partialorder %v2623, 0.0
      %vm2707 = vcmp.ge.f32.partialorder %v2626, 0.0
      %vm2708 = vcmp.ge.f32.partialorder %v2631, 0.0
      %vm2709 = vcmp.ge.f32.partialorder %v2634, 0.0
      %vm2710 = vcmp.ge.f32.partialorder %v2639, 0.0
      %vm2711 = vcmp.ge.f32.partialorder %v2642, 0.0
      %vm2712 = vcmp.ge.f32.partialorder %v2647, 0.0
      %vm2713 = vcmp.ge.f32.partialorder %v2650, 0.0
      %vm2714 = vcmp.ge.f32.partialorder %v2655, 0.0
      %vm2715 = vcmp.ge.f32.partialorder %v2658, 0.0
      %vm2716 = vcmp.ge.f32.partialorder %v2663, 0.0
      %v2717 = vld [vmem:[%s3] sm:$0x1]
      %v2719 = vlaneseq
      %v2720 = vshrl.u32 %v2719, 7
      %v2721 = vsub.s32 0, %v2720
      %v2722 = vrot.slane %v2717, %v2721
      %v2724 = vmul.f32 %v2722, %v2471
      %v2725 = vmul.f32 %v2722, %v2474
      %v2726 = vmul.f32 %v2722, %v2479
      %v2727 = vmul.f32 %v2722, %v2482
      %v2728 = vmul.f32 %v2722, %v2487
      %v2729 = vmul.f32 %v2722, %v2490
      %v2730 = vmul.f32 %v2722, %v2495
      %v2731 = vmul.f32 %v2722, %v2498
      %v2732 = vmul.f32 %v2722, %v2503
      %v2733 = vmul.f32 %v2722, %v2506
      %v2734 = vmul.f32 %v2722, %v2511
      %v2735 = vmul.f32 %v2722, %v2514
      %v2736 = vmul.f32 %v2722, %v2519
      %v2737 = vmul.f32 %v2722, %v2522
      %v2738 = vmul.f32 %v2722, %v2527
      %v2739 = vmul.f32 %v2722, %v2530
      %v2740 = vmul.f32 %v2722, %v2535
      %v2741 = vmul.f32 %v2722, %v2538
      %v2742 = vmul.f32 %v2722, %v2543
      %v2743 = vmul.f32 %v2722, %v2546
      %v2744 = vmul.f32 %v2722, %v2551
      %v2745 = vmul.f32 %v2722, %v2554
      %v2746 = vmul.f32 %v2722, %v2559
      %v2747 = vmul.f32 %v2722, %v2562
      %v2748 = vmul.f32 %v2722, %v2567
      %v2749 = vmul.f32 %v2722, %v2570
      %v2750 = vmul.f32 %v2722, %v2575
      %v2751 = vmul.f32 %v2722, %v2578
      %v2752 = vmul.f32 %v2722, %v2583
      %v2753 = vmul.f32 %v2722, %v2586
      %v2754 = vmul.f32 %v2722, %v2591
      %v2755 = vmul.f32 %v2722, %v2594
      %v2756 = vmul.f32 %v2722, %v2599
      %v2757 = vmul.f32 %v2722, %v2602
      %v2758 = vmul.f32 %v2722, %v2607
      %v2759 = vmul.f32 %v2722, %v2610
      %v2760 = vmul.f32 %v2722, %v2615
      %v2761 = vmul.f32 %v2722, %v2618
      %v2762 = vmul.f32 %v2722, %v2623
      %v2763 = vmul.f32 %v2722, %v2626
      %v2764 = vmul.f32 %v2722, %v2631
      %v2765 = vmul.f32 %v2722, %v2634
      %v2766 = vmul.f32 %v2722, %v2639
      %v2767 = vmul.f32 %v2722, %v2642
      %v2768 = vmul.f32 %v2722, %v2647
      %v2769 = vmul.f32 %v2722, %v2650
      %v2770 = vmul.f32 %v2722, %v2655
      %v2771 = vmul.f32 %v2722, %v2658
      %v2772 = vmul.f32 %v2722, %v2663
      %v2773 = vsel %vm2668, %v2471, %v2724
      %v2774 = vsel %vm2669, %v2474, %v2725
      %v2775 = vsel %vm2670, %v2479, %v2726
      %v2776 = vsel %vm2671, %v2482, %v2727
      %v2777 = vsel %vm2672, %v2487, %v2728
      %v2778 = vsel %vm2673, %v2490, %v2729
      %v2779 = vsel %vm2674, %v2495, %v2730
      %v2780 = vsel %vm2675, %v2498, %v2731
      %v2781 = vsel %vm2676, %v2503, %v2732
      %v2782 = vsel %vm2677, %v2506, %v2733
      %v2783 = vsel %vm2678, %v2511, %v2734
      %v2784 = vsel %vm2679, %v2514, %v2735
      %v2785 = vsel %vm2680, %v2519, %v2736
      %v2786 = vsel %vm2681, %v2522, %v2737
      %v2787 = vsel %vm2682, %v2527, %v2738
      %v2788 = vsel %vm2683, %v2530, %v2739
      %v2789 = vsel %vm2684, %v2535, %v2740
      %v2790 = vsel %vm2685, %v2538, %v2741
      %v2791 = vsel %vm2686, %v2543, %v2742
      %v2792 = vsel %vm2687, %v2546, %v2743
      %v2793 = vsel %vm2688, %v2551, %v2744
      %v2794 = vsel %vm2689, %v2554, %v2745
      %v2795 = vsel %vm2690, %v2559, %v2746
      %v2796 = vsel %vm2691, %v2562, %v2747
      %v2797 = vsel %vm2692, %v2567, %v2748
      %v2798 = vsel %vm2693, %v2570, %v2749
      %v2799 = vsel %vm2694, %v2575, %v2750
      %v2800 = vsel %vm2695, %v2578, %v2751
      %v2801 = vsel %vm2696, %v2583, %v2752
      %v2802 = vsel %vm2697, %v2586, %v2753
      %v2803 = vsel %vm2698, %v2591, %v2754
      %v2804 = vsel %vm2699, %v2594, %v2755
      %v2805 = vsel %vm2700, %v2599, %v2756
      %v2806 = vsel %vm2701, %v2602, %v2757
      %v2807 = vsel %vm2702, %v2607, %v2758
      %v2808 = vsel %vm2703, %v2610, %v2759
      %v2809 = vsel %vm2704, %v2615, %v2760
      %v2810 = vsel %vm2705, %v2618, %v2761
      %v2811 = vsel %vm2706, %v2623, %v2762
      %v2812 = vsel %vm2707, %v2626, %v2763
      %v2813 = vsel %vm2708, %v2631, %v2764
      %v2814 = vsel %vm2709, %v2634, %v2765
      %v2815 = vsel %vm2710, %v2639, %v2766
      %v2816 = vsel %vm2711, %v2642, %v2767
      %v2817 = vsel %vm2712, %v2647, %v2768
      %v2818 = vsel %vm2713, %v2650, %v2769
      %v2819 = vsel %vm2714, %v2655, %v2770
      %v2820 = vsel %vm2715, %v2658, %v2771
      %v2821 = vsel %vm2716, %v2663, %v2772
      %v2822 = vtanh.pop %v2773
      %v2823 = vtanh.pop %v2774
      %v2824 = vtanh.pop %v2775
      %v2825 = vtanh.pop %v2776
      %v2826 = vtanh.pop %v2777
      %v2827 = vtanh.pop %v2778
      %v2828 = vtanh.pop %v2779
      %v2829 = vtanh.pop %v2780
      %v2830 = vtanh.pop %v2781
      %v2831 = vtanh.pop %v2782
      %v2832 = vtanh.pop %v2783
      %v2833 = vtanh.pop %v2784
      %v2834 = vtanh.pop %v2785
      %v2835 = vtanh.pop %v2786
      %v2836 = vtanh.pop %v2787
      %v2837 = vtanh.pop %v2788
      %v2838 = vtanh.pop %v2789
      %v2839 = vtanh.pop %v2790
      %v2840 = vtanh.pop %v2791
      %v2841 = vtanh.pop %v2792
      %v2842 = vtanh.pop %v2793
      %v2843 = vtanh.pop %v2794
      %v2844 = vtanh.pop %v2795
      %v2845 = vtanh.pop %v2796
      %v2846 = vtanh.pop %v2797
      %v2847 = vtanh.pop %v2798
      %v2848 = vtanh.pop %v2799
      %v2849 = vtanh.pop %v2800
      %v2850 = vtanh.pop %v2801
      %v2851 = vtanh.pop %v2802
      %v2852 = vtanh.pop %v2803
      %v2853 = vtanh.pop %v2804
      %v2854 = vtanh.pop %v2805
      %v2855 = vtanh.pop %v2806
      %v2856 = vtanh.pop %v2807
      %v2857 = vtanh.pop %v2808
      %v2858 = vtanh.pop %v2809
      %v2859 = vtanh.pop %v2810
      %v2860 = vtanh.pop %v2811
      %v2861 = vtanh.pop %v2812
      %v2862 = vtanh.pop %v2813
      %v2863 = vtanh.pop %v2814
      %v2864 = vtanh.pop %v2815
      %v2865 = vtanh.pop %v2816
      %v2866 = vtanh.pop %v2817
      %v2867 = vtanh.pop %v2818
      %v2868 = vtanh.pop %v2819
      %v2869 = vtanh.pop %v2820
      %v2870 = vtanh.pop %v2821
      %2871 = vst [vmem:[%s202] sm:$0xff] %v2822
      %2872 = vst [vmem:[%s202 + $0x8] sm:$0xff] %v2823
      %2873 = vst [vmem:[%s202 + $0x10] sm:$0xff] %v2824
      %2874 = vst [vmem:[%s202 + $0x18] sm:$0xff] %v2825
      %2875 = vst [vmem:[%s202 + $0x20] sm:$0xff] %v2826
      %2876 = vst [vmem:[%s202 + $0x28] sm:$0xff] %v2827
      %2877 = vst [vmem:[%s202 + $0x30] sm:$0xff] %v2828
      %2878 = vst [vmem:[%s202 + $0x38] sm:$0xff] %v2829
      %2879 = vst [vmem:[%s202 + $0x40] sm:$0xff] %v2830
      %2880 = vst [vmem:[%s202 + $0x48] sm:$0xff] %v2831
      %2881 = vst [vmem:[%s202 + $0x50] sm:$0xff] %v2832
      %2882 = vst [vmem:[%s202 + $0x58] sm:$0xff] %v2833
      %2883 = vst [vmem:[%s202 + $0x60] sm:$0xff] %v2834
      %2884 = vst [vmem:[%s202 + $0x68] sm:$0xff] %v2835
      %2885 = vst [vmem:[%s202 + $0x70] sm:$0xff] %v2836
      %2886 = vst [vmem:[%s202 + $0x78] sm:$0xff] %v2837
      %2887 = vst [vmem:[%s202 + $0x80] sm:$0xff] %v2838
      %2888 = vst [vmem:[%s202 + $0x88] sm:$0xff] %v2839
      %2889 = vst [vmem:[%s202 + $0x90] sm:$0xff] %v2840
      %2890 = vst [vmem:[%s202 + $0x98] sm:$0xff] %v2841
      %2891 = vst [vmem:[%s202 + $0xa0] sm:$0xff] %v2842
      %2892 = vst [vmem:[%s202 + $0xa8] sm:$0xff] %v2843
      %2893 = vst [vmem:[%s202 + $0xb0] sm:$0xff] %v2844
      %2894 = vst [vmem:[%s202 + $0xb8] sm:$0xff] %v2845
      %2895 = vst [vmem:[%s202 + $0xc0] sm:$0xff] %v2846
      %2896 = vst [vmem:[%s202 + $0xc8] sm:$0xff] %v2847
      %2897 = vst [vmem:[%s202 + $0xd0] sm:$0xff] %v2848
      %2898 = vst [vmem:[%s202 + $0xd8] sm:$0xff] %v2849
      %2899 = vst [vmem:[%s202 + $0xe0] sm:$0xff] %v2850
      %2900 = vst [vmem:[%s202 + $0xe8] sm:$0xff] %v2851
      %2901 = vst [vmem:[%s202 + $0xf0] sm:$0xff] %v2852
      %2902 = vst [vmem:[%s202 + $0xf8] sm:$0xff] %v2853
      %2903 = vst [vmem:[%s202 + $0x100] sm:$0xff] %v2854
      %2904 = vst [vmem:[%s202 + $0x108] sm:$0xff] %v2855
      %2905 = vst [vmem:[%s202 + $0x110] sm:$0xff] %v2856
      %2906 = vst [vmem:[%s202 + $0x118] sm:$0xff] %v2857
      %2907 = vst [vmem:[%s202 + $0x120] sm:$0xff] %v2858
      %2908 = vst [vmem:[%s202 + $0x128] sm:$0xff] %v2859
      %2909 = vst [vmem:[%s202 + $0x130] sm:$0xff] %v2860
      %2910 = vst [vmem:[%s202 + $0x138] sm:$0xff] %v2861
      %2911 = vst [vmem:[%s202 + $0x140] sm:$0xff] %v2862
      %2912 = vst [vmem:[%s202 + $0x148] sm:$0xff] %v2863
      %2913 = vst [vmem:[%s202 + $0x150] sm:$0xff] %v2864
      %2914 = vst [vmem:[%s202 + $0x158] sm:$0xff] %v2865
      %2915 = vst [vmem:[%s202 + $0x160] sm:$0xff] %v2866
      %2916 = vst [vmem:[%s202 + $0x168] sm:$0xff] %v2867
      %2917 = vst [vmem:[%s202 + $0x170] sm:$0xff] %v2868
      %2918 = vst [vmem:[%s202 + $0x178] sm:$0xff] %v2869
      %2919 = vst [vmem:[%s202 + $0x180] sm:$0xff] %v2870
      %s2920 = smul.u32 49, %s15
      %p2921 = scmp.lt.s32.totalorder %s2920, 195
      %s2922 = scalar_select %p2921, %s2920, 195
      %s2923 = smul.addr %s2922, 8
      %s2924 = scalar_lea.vmem %s4, %s2923
      // Predicated region
      $region37: #{generator_forward.7} parent=35 // pred_check
        %p2925 = pneg %p122
      $region38: #{generator_forward.7} parent=35 // pred_check_branch
        %2927 = sbr.rel (%p2925) target = $region40
      $region39: #{generator_forward.7} parent=35 // pred_region
        %s2928 = smul.u32 49, %s15
      $region40: #{generator_forward.7} parent=35 // pred_fallthru
        _
    $region36: #{generator_forward.7} parent=5 // pred_fallthru
      _
    %p2929 = scmp.le.s32.totalorder 2, %s10
    // Predicated region
    $region41: #{generator_forward.7} parent=5 // pred_check
      %p2930 = pneg %p2929
    $region42: #{generator_forward.7} parent=5 // pred_check_branch
      %2932 = sbr.rel (%p2930) target = $region44
    $region43: #{generator_forward.7} parent=5 // pred_region
      %s2933 = ssub.s32 %s10, 2
      // Predicated region
      $region45: #{generator_forward.7} parent=43 // pred_check
        %p2934 = pneg %p128
      $region46: #{generator_forward.7} parent=43 // pred_check_branch
        %2936 = sbr.rel (%p2934) target = $region48
      $region47: #{generator_forward.7} parent=43 // pred_region
        %s2937 = smul.u32 49, %s16
        %p2938 = scmp.lt.s32.totalorder %s2937, 195
        %s2939 = scalar_select %p2938, %s2937, 195
        %s2940 = smul.addr %s2939, 8
        %s2941 = scalar_lea.vmem %s4, %s2940
      $region48: #{generator_forward.7} parent=43 // pred_fallthru
        _
    $region44: #{generator_forward.7} parent=5 // pred_fallthru
      _
  $region6: #{generator_forward.7} parent=0 // loop_footer
    %s14 = sadd.s32 1, %s10
  $region7: #{generator_forward.7} parent=0 // loop_footer_branch
    %9 = sbr.rel target = $region3
  $region8: #{generator_forward.7} parent=0 // loop_exit
    _

</llo_original>
